<compile_context>
chip_gen: v6e
topology: v6e:2x2x1
jax: 0.10.0
libtpu: 0.0.40
codegen_flags: <defaults>
</compile_context>

<pallas_src>
import jax
import jax.numpy as jnp
from jax.experimental import pallas as pl
from jax.experimental.pallas import tpu as pltpu

NUM_LAYERS = 2
NODE_FEATURES = 8
HIDDEN = 32
N_NODES = 16
N_EDGES = 48
LANE = 128

H = HIDDEN
F = NODE_FEATURES
assert 8 * H >= 2 * LANE, "slab must be wide enough for the padded scorer block"
SLAB_COLS = 8 * H  # 256

# ---------------- static row layout of the packed parameter slab ------------ #
R_W1 = 0                       # [F, H]    MLP layer 1 weight
R_W2 = R_W1 + F                # [H, H]    MLP layer 2 weight
R_L0 = R_W2 + H                # [H, 8H]   conv layer 0 (fw | bw), each wk|wq|wv|ws
_off = R_L0 + H
R_L_FW = {}
R_L_BW = {}
for _l in range(1, NUM_LAYERS):
    R_L_FW[_l] = _off; _off += H       # [H, 4H]
    R_L_BW[_l] = _off; _off += H       # [H, 4H]
R_SC = _off; _off += H         # [H, 2*LANE]  scorer: col 0 = w_fw, col LANE = w_bw
R_BIAS = _off
B_B1 = R_BIAS + 0              # [1, H]
B_B2 = R_BIAS + 1              # [1, H]
B_L0 = R_BIAS + 2              # [1, 8H]   bk|bq|bv|bias for fw then bw
B_L_FW = {l: R_BIAS + 3 + 2 * (l - 1) for l in range(1, NUM_LAYERS)}
B_L_BW = {l: R_BIAS + 3 + 2 * (l - 1) + 1 for l in range(1, NUM_LAYERS)}
B_SC = R_BIAS + 3 + 2 * (NUM_LAYERS - 1)    # [1, LANE], col 0 = bsc
TOTAL_ROWS = B_SC + 1


# ------------------------------- Pallas kernel ------------------------------ #

def _gated_agg(adj, k, q, v):
    """agg[i, f] = sum_j adj[i, j] * sigmoid(k[i, f] + q[j, f]) * v[j, f]."""
    g = jax.nn.sigmoid(k[:, None, :] + q[None, :, :]) * adj[:, :, None]   # [N, N, H]
    return jnp.sum(g * v[None, :, :], axis=1)                             # [N, H]


def resgated_kernel(x_ref, a_ref, w_ref, out_ref):
    x = x_ref[...]                   # [N, F]
    a_fw = a_ref[...]                # [N, N]  #edges j->i (flow = source_to_target)
    a_bw = a_fw.T                    # flow = target_to_source adjacency

    def dot(a, b):
        return jnp.dot(a, b, preferred_element_type=jnp.float32)

    # MLP: h = W2(relu(W1 x + b1)) + b2
    h = jnp.maximum(
        dot(x, w_ref[R_W1:R_W1 + F, 0:H]) + w_ref[B_B1:B_B1 + 1, 0:H], 0.0)
    h = dot(h, w_ref[R_W2:R_W2 + H, 0:H]) + w_ref[B_B2:B_B2 + 1, 0:H]

    # conv layer 0: fw and bw share the input h -> single [H, 8H] fused matmul.
    z0 = dot(h, w_ref[R_L0:R_L0 + H, 0:8 * H]) + w_ref[B_L0:B_L0 + 1, 0:8 * H]
    h_fw = (_gated_agg(a_fw, z0[:, 0:H], z0[:, H:2 * H], z0[:, 2 * H:3 * H])
            + z0[:, 3 * H:4 * H])                         # skip + bias group
    h_bw = (_gated_agg(a_bw, z0[:, 4 * H:5 * H], z0[:, 5 * H:6 * H], z0[:, 6 * H:7 * H])
            + z0[:, 7 * H:8 * H])

    # remaining conv layers: one fused [H, 4H] matmul per direction.
    for l in range(1, NUM_LAYERS):
        rf, bf = R_L_FW[l], B_L_FW[l]
        zf = dot(h_fw, w_ref[rf:rf + H, 0:4 * H]) + w_ref[bf:bf + 1, 0:4 * H]
        h_fw = (_gated_agg(a_fw, zf[:, 0:H], zf[:, H:2 * H], zf[:, 2 * H:3 * H])
                + zf[:, 3 * H:4 * H])
        rb, bb = R_L_BW[l], B_L_BW[l]
        zb = dot(h_bw, w_ref[rb:rb + H, 0:4 * H]) + w_ref[bb:bb + 1, 0:4 * H]
        h_bw = (_gated_agg(a_bw, zb[:, 0:H], zb[:, H:2 * H], zb[:, 2 * H:3 * H])
                + zb[:, 3 * H:4 * H])

    # scorer: no lane concat; lane-dense padded output (column 0 holds the score).
    score = (dot(h_fw, w_ref[R_SC:R_SC + H, 0:LANE])
             + dot(h_bw, w_ref[R_SC:R_SC + H, LANE:2 * LANE])
             + w_ref[B_SC:B_SC + 1, 0:LANE])
    out_ref[...] = score


# --------------------------------- wrapper ---------------------------------- #

def pack_params(params):
    slab = jnp.zeros((TOTAL_ROWS, SLAB_COLS), jnp.float32)
    slab = slab.at[R_W1:R_W1 + F, 0:H].set(params["w1"])
    slab = slab.at[R_W2:R_W2 + H, 0:H].set(params["w2"])
    slab = slab.at[B_B1, 0:H].set(params["b1"][0])
    slab = slab.at[B_B2, 0:H].set(params["b2"][0])

    def wslab(p):   # [H, 4H] : wk | wq | wv | ws
        return jnp.concatenate([p["wk"], p["wq"], p["wv"], p["ws"]], axis=1)

    def bslab(p):   # [4H]    : bk | bq | bv | bias  (conv bias rides on skip group)
        return jnp.concatenate([p["bk"], p["bq"], p["bv"], p["bias"]], axis=1)[0]

    fw, bw = params["fw"], params["bw"]
    slab = slab.at[R_L0:R_L0 + H, 0:8 * H].set(
        jnp.concatenate([wslab(fw[0]), wslab(bw[0])], axis=1))
    slab = slab.at[B_L0, 0:8 * H].set(jnp.concatenate([bslab(fw[0]), bslab(bw[0])]))
    for l in range(1, NUM_LAYERS):
        slab = slab.at[R_L_FW[l]:R_L_FW[l] + H, 0:4 * H].set(wslab(fw[l]))
        slab = slab.at[B_L_FW[l], 0:4 * H].set(bslab(fw[l]))
        slab = slab.at[R_L_BW[l]:R_L_BW[l] + H, 0:4 * H].set(wslab(bw[l]))
        slab = slab.at[B_L_BW[l], 0:4 * H].set(bslab(bw[l]))

    wsc = params["wsc"]                          # [2H, 1]
    slab = slab.at[R_SC:R_SC + H, 0].set(wsc[:H, 0])
    slab = slab.at[R_SC:R_SC + H, LANE].set(wsc[H:, 0])
    slab = slab.at[B_SC, 0].set(params["bsc"][0, 0])
    return slab


def resgated_digraph_net(x, edge_index, params):
    n = x.shape[0]
    src, dst = edge_index[0], edge_index[1]
    # flow='source_to_target': aggregate into target i from source j (multi-edge counts).
    a_fw = jnp.zeros((n, n), jnp.float32).at[dst, src].add(1.0)
    slab = pack_params(params)

    vmem = lambda: pl.BlockSpec(memory_space=pltpu.MemorySpace.VMEM)
    out = pl.pallas_call(
        resgated_kernel,
        out_shape=jax.ShapeDtypeStruct((n, LANE), jnp.float32),
        in_specs=[vmem(), vmem(), vmem()],
        out_specs=vmem(),
    )(x.astype(jnp.float32), a_fw, slab)
    return out[:, :1]


# ------------------------------ parameter init ------------------------------ #

def init_params(key):
    keys = iter(jax.random.split(key, 64))

    def draw(shape, scale):
        return jax.random.normal(next(keys), shape, jnp.float32) * scale

    def lin(in_f, out_f):
        s = 1.0 / float(in_f) ** 0.5
        return draw((in_f, out_f), s), draw((1, out_f), s)

    w1, b1 = lin(NODE_FEATURES, HIDDEN)
    w2, b2 = lin(HIDDEN, HIDDEN)

    def conv():
        wk, bk = lin(HIDDEN, HIDDEN)
        wq, bq = lin(HIDDEN, HIDDEN)
        wv, bv = lin(HIDDEN, HIDDEN)
        ws = draw((HIDDEN, HIDDEN), 1.0 / HIDDEN ** 0.5)
        bias = draw((1, HIDDEN), 0.1)
        return dict(wk=wk, bk=bk, wq=wq, bq=bq, wv=wv, bv=bv, ws=ws, bias=bias)

    fw = [conv() for _ in range(NUM_LAYERS)]
    bw = [conv() for _ in range(NUM_LAYERS)]
    wsc, bsc = lin(2 * HIDDEN, 1)
    return dict(w1=w1, b1=b1, w2=w2, b2=b2, fw=fw, bw=bw, wsc=wsc, bsc=bsc)


# -------------------------- pure-JAX reference (check) ----------------------- #

def _ref_conv(h, edge_index, flow, p):
    if flow == "source_to_target":
        j, i = edge_index[0], edge_index[1]
    else:
        i, j = edge_index[0], edge_index[1]
    k = h @ p["wk"] + p["bk"]
    q = h @ p["wq"] + p["bq"]
    v = h @ p["wv"] + p["bv"]
    m = jax.nn.sigmoid(k[i] + q[j]) * v[j]
    agg = jnp.zeros_like(h).at[i].add(m)
    return agg + h @ p["ws"] + p["bias"]


def ref_forward(x, edge_index, params):
    h = jnp.maximum(x @ params["w1"] + params["b1"], 0.0)
    h = h @ params["w2"] + params["b2"]
    h_fw, h_bw = h, h
    for l in range(NUM_LAYERS):
        h_fw = _ref_conv(h_fw, edge_index, "source_to_target", params["fw"][l])
    for l in range(NUM_LAYERS):
        h_bw = _ref_conv(h_bw, edge_index, "target_to_source", params["bw"][l])
    return jnp.concatenate([h_fw, h_bw], axis=1) @ params["wsc"] + params["bsc"]


# ----------------------------------- main ------------------------------------ #

if __name__ == "__main__":
    key = jax.random.PRNGKey(0)
    kx, ke, kp = jax.random.split(key, 3)

    x = jax.random.normal(kx, (N_NODES, NODE_FEATURES), jnp.float32)
    edge_index = jax.random.randint(ke, (2, N_EDGES), 0, N_NODES, dtype=jnp.int32)
    params = init_params(kp)

    out = resgated_digraph_net(x, edge_index, params)
    jax.block_until_ready(out)

    ref = ref_forward(x, edge_index, params)
    assert out.shape == (N_NODES, 1), out.shape
    assert jnp.allclose(out, ref, rtol=1e-3, atol=1e-2), float(jnp.max(jnp.abs(out - ref)))

    print("KERNEL_OK")
</pallas_src>

<mosaic_0001>
module attributes {stable_mosaic.version = 11 : i64} {
  func.func @resgated_kernel(%arg0: memref<16x8xf32, #tpu.memory_space<vmem>>, %arg1: memref<16x16xf32, #tpu.memory_space<vmem>>, %arg2: memref<174x256xf32, #tpu.memory_space<vmem>>, %arg3: memref<16x128xf32, #tpu.memory_space<vmem>>) attributes {dimension_semantics = [], scalar_prefetch = 0 : i64, scratch_operands = 0 : i64, tpu.core_type = #tpu.core_type<tc>} {
    %c0 = arith.constant 0 : index
    %c0_0 = arith.constant 0 : index
    %0 = vector.load %arg0[%c0, %c0_0] : memref<16x8xf32, #tpu.memory_space<vmem>>, vector<16x8xf32>
    %c0_1 = arith.constant 0 : index
    %c0_2 = arith.constant 0 : index
    %1 = vector.load %arg1[%c0_1, %c0_2] : memref<16x16xf32, #tpu.memory_space<vmem>>, vector<16x16xf32>
    %2 = tpu.transpose %1, [1, 0] : vector<16x16xf32> -> vector<16x16xf32>
    %c0_3 = arith.constant 0 : index
    %c0_4 = arith.constant 0 : index
    %3 = vector.load %arg2[%c0_3, %c0_4] : memref<174x256xf32, #tpu.memory_space<vmem>>, vector<8x32xf32>
    %cst = arith.constant dense<0.000000e+00> : vector<16x32xf32>
    %4 = tpu.matmul %0, %3, %cst {dimension_numbers = #tpu.dot_dimension_numbers<[1], [0], [0], [1], [0, 0, 1, 1], [], []>} : vector<16x8xf32>, vector<8x32xf32>, vector<16x32xf32> -> vector<16x32xf32>
    %c168 = arith.constant 168 : index
    %c0_5 = arith.constant 0 : index
    %5 = vector.load %arg2[%c168, %c0_5] : memref<174x256xf32, #tpu.memory_space<vmem>>, vector<1x32xf32>
    %6 = vector.broadcast %5 : vector<1x32xf32> to vector<16x32xf32>
    %7 = arith.addf %4, %6 : vector<16x32xf32>
    %cst_6 = arith.constant 0.000000e+00 : f32
    %8 = vector.broadcast %cst_6 : f32 to vector<16x32xf32>
    %9 = arith.maximumf %7, %8 : vector<16x32xf32>
    %c8 = arith.constant 8 : index
    %c0_7 = arith.constant 0 : index
    %10 = vector.load %arg2[%c8, %c0_7] : memref<174x256xf32, #tpu.memory_space<vmem>>, vector<32x32xf32>
    %cst_8 = arith.constant dense<0.000000e+00> : vector<16x32xf32>
    %11 = tpu.matmul %9, %10, %cst_8 {dimension_numbers = #tpu.dot_dimension_numbers<[1], [0], [0], [1], [0, 0, 1, 1], [], []>} : vector<16x32xf32>, vector<32x32xf32>, vector<16x32xf32> -> vector<16x32xf32>
    %c169 = arith.constant 169 : index
    %c0_9 = arith.constant 0 : index
    %12 = vector.load %arg2[%c169, %c0_9] : memref<174x256xf32, #tpu.memory_space<vmem>>, vector<1x32xf32>
    %13 = vector.broadcast %12 : vector<1x32xf32> to vector<16x32xf32>
    %14 = arith.addf %11, %13 : vector<16x32xf32>
    %c40 = arith.constant 40 : index
    %c0_10 = arith.constant 0 : index
    %15 = vector.load %arg2[%c40, %c0_10] : memref<174x256xf32, #tpu.memory_space<vmem>>, vector<32x256xf32>
    %cst_11 = arith.constant dense<0.000000e+00> : vector<16x256xf32>
    %16 = tpu.matmul %14, %15, %cst_11 {dimension_numbers = #tpu.dot_dimension_numbers<[1], [0], [0], [1], [0, 0, 1, 1], [], []>} : vector<16x32xf32>, vector<32x256xf32>, vector<16x256xf32> -> vector<16x256xf32>
    %c170 = arith.constant 170 : index
    %c0_12 = arith.constant 0 : index
    %17 = vector.load %arg2[%c170, %c0_12] : memref<174x256xf32, #tpu.memory_space<vmem>>, vector<1x256xf32>
    %18 = vector.broadcast %17 : vector<1x256xf32> to vector<16x256xf32>
    %19 = arith.addf %16, %18 : vector<16x256xf32>
    %20 = vector.extract_strided_slice %19 {offsets = [0, 0], sizes = [16, 32], strides = [1, 1]} : vector<16x256xf32> to vector<16x32xf32>
    %21 = vector.extract_strided_slice %19 {offsets = [0, 32], sizes = [16, 32], strides = [1, 1]} : vector<16x256xf32> to vector<16x32xf32>
    %22 = vector.extract_strided_slice %19 {offsets = [0, 64], sizes = [16, 32], strides = [1, 1]} : vector<16x256xf32> to vector<16x32xf32>
    %23 = vector.shape_cast %20 : vector<16x32xf32> to vector<16x1x32xf32>
    %24 = vector.shape_cast %21 : vector<16x32xf32> to vector<1x16x32xf32>
    %25 = vector.broadcast %23 : vector<16x1x32xf32> to vector<16x16x32xf32>
    %26 = vector.broadcast %24 : vector<1x16x32xf32> to vector<16x16x32xf32>
    %27 = arith.addf %25, %26 : vector<16x16x32xf32>
    %28 = arith.negf %27 : vector<16x16x32xf32>
    %29 = math.exp %28 : vector<16x16x32xf32>
    %cst_13 = arith.constant 1.000000e+00 : f32
    %30 = vector.broadcast %cst_13 : f32 to vector<16x16x32xf32>
    %31 = arith.addf %30, %29 : vector<16x16x32xf32>
    %32 = arith.divf %30, %31 : vector<16x16x32xf32>
    %33 = vector.shape_cast %1 : vector<16x16xf32> to vector<16x16x1xf32>
    %34 = vector.broadcast %33 : vector<16x16x1xf32> to vector<16x16x32xf32>
    %35 = arith.mulf %32, %34 : vector<16x16x32xf32>
    %36 = vector.shape_cast %22 : vector<16x32xf32> to vector<1x16x32xf32>
    %37 = vector.broadcast %36 : vector<1x16x32xf32> to vector<16x16x32xf32>
    %38 = arith.mulf %35, %37 : vector<16x16x32xf32>
    %cst_14 = arith.constant dense<0.000000e+00> : vector<16x32xf32>
    %39 = vector.multi_reduction <add>, %38, %cst_14 [1] : vector<16x16x32xf32> to vector<16x32xf32>
    %40 = vector.extract_strided_slice %19 {offsets = [0, 96], sizes = [16, 32], strides = [1, 1]} : vector<16x256xf32> to vector<16x32xf32>
    %41 = arith.addf %39, %40 : vector<16x32xf32>
    %42 = vector.extract_strided_slice %19 {offsets = [0, 128], sizes = [16, 32], strides = [1, 1]} : vector<16x256xf32> to vector<16x32xf32>
    %43 = vector.extract_strided_slice %19 {offsets = [0, 160], sizes = [16, 32], strides = [1, 1]} : vector<16x256xf32> to vector<16x32xf32>
    %44 = vector.extract_strided_slice %19 {offsets = [0, 192], sizes = [16, 32], strides = [1, 1]} : vector<16x256xf32> to vector<16x32xf32>
    %45 = vector.shape_cast %42 : vector<16x32xf32> to vector<16x1x32xf32>
    %46 = vector.shape_cast %43 : vector<16x32xf32> to vector<1x16x32xf32>
    %47 = vector.broadcast %45 : vector<16x1x32xf32> to vector<16x16x32xf32>
    %48 = vector.broadcast %46 : vector<1x16x32xf32> to vector<16x16x32xf32>
    %49 = arith.addf %47, %48 : vector<16x16x32xf32>
    %50 = arith.negf %49 : vector<16x16x32xf32>
    %51 = math.exp %50 : vector<16x16x32xf32>
    %cst_15 = arith.constant 1.000000e+00 : f32
    %52 = vector.broadcast %cst_15 : f32 to vector<16x16x32xf32>
    %53 = arith.addf %52, %51 : vector<16x16x32xf32>
    %54 = arith.divf %52, %53 : vector<16x16x32xf32>
    %55 = vector.shape_cast %2 : vector<16x16xf32> to vector<16x16x1xf32>
    %56 = vector.broadcast %55 : vector<16x16x1xf32> to vector<16x16x32xf32>
    %57 = arith.mulf %54, %56 : vector<16x16x32xf32>
    %58 = vector.shape_cast %44 : vector<16x32xf32> to vector<1x16x32xf32>
    %59 = vector.broadcast %58 : vector<1x16x32xf32> to vector<16x16x32xf32>
    %60 = arith.mulf %57, %59 : vector<16x16x32xf32>
    %cst_16 = arith.constant dense<0.000000e+00> : vector<16x32xf32>
    %61 = vector.multi_reduction <add>, %60, %cst_16 [1] : vector<16x16x32xf32> to vector<16x32xf32>
    %62 = vector.extract_strided_slice %19 {offsets = [0, 224], sizes = [16, 32], strides = [1, 1]} : vector<16x256xf32> to vector<16x32xf32>
    %63 = arith.addf %61, %62 : vector<16x32xf32>
    %c72 = arith.constant 72 : index
    %c0_17 = arith.constant 0 : index
    %64 = vector.load %arg2[%c72, %c0_17] : memref<174x256xf32, #tpu.memory_space<vmem>>, vector<32x128xf32>
    %cst_18 = arith.constant dense<0.000000e+00> : vector<16x128xf32>
    %65 = tpu.matmul %41, %64, %cst_18 {dimension_numbers = #tpu.dot_dimension_numbers<[1], [0], [0], [1], [0, 0, 1, 1], [], []>} : vector<16x32xf32>, vector<32x128xf32>, vector<16x128xf32> -> vector<16x128xf32>
    %c171 = arith.constant 171 : index
    %c0_19 = arith.constant 0 : index
    %66 = vector.load %arg2[%c171, %c0_19] : memref<174x256xf32, #tpu.memory_space<vmem>>, vector<1x128xf32>
    %67 = vector.broadcast %66 : vector<1x128xf32> to vector<16x128xf32>
    %68 = arith.addf %65, %67 : vector<16x128xf32>
    %69 = vector.extract_strided_slice %68 {offsets = [0, 0], sizes = [16, 32], strides = [1, 1]} : vector<16x128xf32> to vector<16x32xf32>
    %70 = vector.extract_strided_slice %68 {offsets = [0, 32], sizes = [16, 32], strides = [1, 1]} : vector<16x128xf32> to vector<16x32xf32>
    %71 = vector.extract_strided_slice %68 {offsets = [0, 64], sizes = [16, 32], strides = [1, 1]} : vector<16x128xf32> to vector<16x32xf32>
    %72 = vector.shape_cast %69 : vector<16x32xf32> to vector<16x1x32xf32>
    %73 = vector.shape_cast %70 : vector<16x32xf32> to vector<1x16x32xf32>
    %74 = vector.broadcast %72 : vector<16x1x32xf32> to vector<16x16x32xf32>
    %75 = vector.broadcast %73 : vector<1x16x32xf32> to vector<16x16x32xf32>
    %76 = arith.addf %74, %75 : vector<16x16x32xf32>
    %77 = arith.negf %76 : vector<16x16x32xf32>
    %78 = math.exp %77 : vector<16x16x32xf32>
    %cst_20 = arith.constant 1.000000e+00 : f32
    %79 = vector.broadcast %cst_20 : f32 to vector<16x16x32xf32>
    %80 = arith.addf %79, %78 : vector<16x16x32xf32>
    %81 = arith.divf %79, %80 : vector<16x16x32xf32>
    %82 = vector.shape_cast %1 : vector<16x16xf32> to vector<16x16x1xf32>
    %83 = vector.broadcast %82 : vector<16x16x1xf32> to vector<16x16x32xf32>
    %84 = arith.mulf %81, %83 : vector<16x16x32xf32>
    %85 = vector.shape_cast %71 : vector<16x32xf32> to vector<1x16x32xf32>
    %86 = vector.broadcast %85 : vector<1x16x32xf32> to vector<16x16x32xf32>
    %87 = arith.mulf %84, %86 : vector<16x16x32xf32>
    %cst_21 = arith.constant dense<0.000000e+00> : vector<16x32xf32>
    %88 = vector.multi_reduction <add>, %87, %cst_21 [1] : vector<16x16x32xf32> to vector<16x32xf32>
    %89 = vector.extract_strided_slice %68 {offsets = [0, 96], sizes = [16, 32], strides = [1, 1]} : vector<16x128xf32> to vector<16x32xf32>
    %90 = arith.addf %88, %89 : vector<16x32xf32>
    %c104 = arith.constant 104 : index
    %c0_22 = arith.constant 0 : index
    %91 = vector.load %arg2[%c104, %c0_22] : memref<174x256xf32, #tpu.memory_space<vmem>>, vector<32x128xf32>
    %cst_23 = arith.constant dense<0.000000e+00> : vector<16x128xf32>
    %92 = tpu.matmul %63, %91, %cst_23 {dimension_numbers = #tpu.dot_dimension_numbers<[1], [0], [0], [1], [0, 0, 1, 1], [], []>} : vector<16x32xf32>, vector<32x128xf32>, vector<16x128xf32> -> vector<16x128xf32>
    %c172 = arith.constant 172 : index
    %c0_24 = arith.constant 0 : index
    %93 = vector.load %arg2[%c172, %c0_24] : memref<174x256xf32, #tpu.memory_space<vmem>>, vector<1x128xf32>
    %94 = vector.broadcast %93 : vector<1x128xf32> to vector<16x128xf32>
    %95 = arith.addf %92, %94 : vector<16x128xf32>
    %96 = vector.extract_strided_slice %95 {offsets = [0, 0], sizes = [16, 32], strides = [1, 1]} : vector<16x128xf32> to vector<16x32xf32>
    %97 = vector.extract_strided_slice %95 {offsets = [0, 32], sizes = [16, 32], strides = [1, 1]} : vector<16x128xf32> to vector<16x32xf32>
    %98 = vector.extract_strided_slice %95 {offsets = [0, 64], sizes = [16, 32], strides = [1, 1]} : vector<16x128xf32> to vector<16x32xf32>
    %99 = vector.shape_cast %96 : vector<16x32xf32> to vector<16x1x32xf32>
    %100 = vector.shape_cast %97 : vector<16x32xf32> to vector<1x16x32xf32>
    %101 = vector.broadcast %99 : vector<16x1x32xf32> to vector<16x16x32xf32>
    %102 = vector.broadcast %100 : vector<1x16x32xf32> to vector<16x16x32xf32>
    %103 = arith.addf %101, %102 : vector<16x16x32xf32>
    %104 = arith.negf %103 : vector<16x16x32xf32>
    %105 = math.exp %104 : vector<16x16x32xf32>
    %cst_25 = arith.constant 1.000000e+00 : f32
    %106 = vector.broadcast %cst_25 : f32 to vector<16x16x32xf32>
    %107 = arith.addf %106, %105 : vector<16x16x32xf32>
    %108 = arith.divf %106, %107 : vector<16x16x32xf32>
    %109 = vector.shape_cast %2 : vector<16x16xf32> to vector<16x16x1xf32>
    %110 = vector.broadcast %109 : vector<16x16x1xf32> to vector<16x16x32xf32>
    %111 = arith.mulf %108, %110 : vector<16x16x32xf32>
    %112 = vector.shape_cast %98 : vector<16x32xf32> to vector<1x16x32xf32>
    %113 = vector.broadcast %112 : vector<1x16x32xf32> to vector<16x16x32xf32>
    %114 = arith.mulf %111, %113 : vector<16x16x32xf32>
    %cst_26 = arith.constant dense<0.000000e+00> : vector<16x32xf32>
    %115 = vector.multi_reduction <add>, %114, %cst_26 [1] : vector<16x16x32xf32> to vector<16x32xf32>
    %116 = vector.extract_strided_slice %95 {offsets = [0, 96], sizes = [16, 32], strides = [1, 1]} : vector<16x128xf32> to vector<16x32xf32>
    %117 = arith.addf %115, %116 : vector<16x32xf32>
    %c136 = arith.constant 136 : index
    %c0_27 = arith.constant 0 : index
    %118 = vector.load %arg2[%c136, %c0_27] : memref<174x256xf32, #tpu.memory_space<vmem>>, vector<32x128xf32>
    %cst_28 = arith.constant dense<0.000000e+00> : vector<16x128xf32>
    %119 = tpu.matmul %90, %118, %cst_28 {dimension_numbers = #tpu.dot_dimension_numbers<[1], [0], [0], [1], [0, 0, 1, 1], [], []>} : vector<16x32xf32>, vector<32x128xf32>, vector<16x128xf32> -> vector<16x128xf32>
    %c136_29 = arith.constant 136 : index
    %c128 = arith.constant 128 : index
    %120 = vector.load %arg2[%c136_29, %c128] : memref<174x256xf32, #tpu.memory_space<vmem>>, vector<32x128xf32>
    %cst_30 = arith.constant dense<0.000000e+00> : vector<16x128xf32>
    %121 = tpu.matmul %117, %120, %cst_30 {dimension_numbers = #tpu.dot_dimension_numbers<[1], [0], [0], [1], [0, 0, 1, 1], [], []>} : vector<16x32xf32>, vector<32x128xf32>, vector<16x128xf32> -> vector<16x128xf32>
    %122 = arith.addf %119, %121 : vector<16x128xf32>
    %c173 = arith.constant 173 : index
    %c0_31 = arith.constant 0 : index
    %123 = vector.load %arg2[%c173, %c0_31] : memref<174x256xf32, #tpu.memory_space<vmem>>, vector<1x128xf32>
    %124 = vector.broadcast %123 : vector<1x128xf32> to vector<16x128xf32>
    %125 = arith.addf %122, %124 : vector<16x128xf32>
    %c0_32 = arith.constant 0 : index
    %c0_33 = arith.constant 0 : index
    %126 = vector.load %arg3[%c0_32, %c0_33] : memref<16x128xf32, #tpu.memory_space<vmem>>, vector<16x128xf32>
    tpu.vector_store %arg3[%c0_32, %c0_33], %125 {strides = array<i32>} : memref<16x128xf32, #tpu.memory_space<vmem>>, vector<16x128xf32>,
    return
  }
}

</mosaic_0001>

<llo_original>
// kernel: tpu_custom_call.1
$region0: #{tpu_custom_call.1}
  #allocation0 [shape = 'u32[]', space=smem, size = 0x4, offset = 0x4, fixed_abs, tag = 'smem constant byte address 0x4 - core index']
  #allocation1 [shape = 'u32[144,128]{1,0:T(1,128)}', space=vmem, size = 0x12000, scoped, tag = 'internal scratch']
  %s0 = inlined_call_operand.vmem [shape: f32[16,8], index: 0, kind: input, shape index: {}]
  %s1 = inlined_call_operand.vmem [shape: f32[16,16], index: 1, kind: input, shape index: {}]
  %s2 = inlined_call_operand.hbm [shape: f32[174,256], index: 2, kind: input, shape index: {}]
  %s3 = inlined_call_operand.hbm [shape: f32[16,128], index: 3, kind: output, shape index: {}]
  %s4 = sld [smem:[#allocation0]]
  $region26: #{tpu_custom_call.1} parent=0
    _
  %s6 = ssub.s32 1, %s4
  %s7 = scalar_select 0, %s6, %s4
  $region1: #{tpu_custom_call.1} parent=0
    #allocation2 [shape = 'u8[180224]{0}', space=vmem, size = 0x2c000, scoped, tag = 'input window, operand 2, single buffered']
    #allocation3 [shape = 's32[1]{0}', space=sflag, size = 0x4, scoped, tag = 'scoped memory for tpu_custom_call.1']
    #allocation4 [shape = 's32[1]{0}', space=sflag, size = 0x4, scoped, tag = 'scoped memory for tpu_custom_call.1']
    #allocation5 [shape = 'u8[8192]{0}', space=vmem, size = 0x2000, scoped, tag = 'output window, operand 0, single buffered']
    %8 = vsyncpa [#allocation3], 0
    %9 = vsyncpa [#allocation4], 0
    // Predicated region
    $region2: #{tpu_custom_call.1} parent=1 // pred_check
      _
    $region3: #{tpu_custom_call.1} parent=1 // pred_check_branch
      %11 = sbr.rel (0) target = $region5
    $region4: #{tpu_custom_call.1} parent=1 // pred_region
      _
    $region5: #{tpu_custom_call.1} parent=1 // pred_fallthru
      _
    // Predicated region
    $region6: #{tpu_custom_call.1} parent=1 // pred_check
      _
    $region7: #{tpu_custom_call.1} parent=1 // pred_check_branch
      %13 = sbr.rel (0) target = $region9
    $region8: #{tpu_custom_call.1} parent=1 // pred_region
      _
    $region9: #{tpu_custom_call.1} parent=1 // pred_fallthru
      _
    // Predicated region
    $region10: #{tpu_custom_call.1} parent=1 // pred_check
      _
    $region11: #{tpu_custom_call.1} parent=1 // pred_check_branch
      %15 = sbr.rel (0) target = $region13
    $region12: #{tpu_custom_call.1} parent=1 // pred_region
      %s17 = ssub.s32 5632, 5632
      %18 = vsyncadd [#allocation3], %s17
      %s19 = sshll.u32 [#allocation2], 4
      %s20 = int_to_ptr.vmem [resolvable:$true] %s19
      %25 = dma.hbm_to_vmem [thread:$0]  %s2, 5632, %s20, [#allocation3], 256, 256, 16
    $region13: #{tpu_custom_call.1} parent=1 // pred_fallthru
      _
    // Predicated region
    $region14: #{tpu_custom_call.1} parent=1 // pred_check
      _
    $region15: #{tpu_custom_call.1} parent=1 // pred_check_branch
      %27 = sbr.rel (0) target = $region17
    $region16: #{tpu_custom_call.1} parent=1 // pred_region
      %28 = dma.done [#allocation3], 5632
    $region17: #{tpu_custom_call.1} parent=1 // pred_fallthru
      _
    %v29 = vld [vmem:[%s0] sm:$0xff]
    %v30 = vld [vmem:[%s0 + $0x8] sm:$0xff]
    %v31 = vld [vmem:[%s1] sm:$0xff]
    %v32 = vld [vmem:[%s1 + $0x8] sm:$0xff]
    %33 = vxpose.xlu0.b32.start [1/16] %v31, 128
    %34 = vxpose.xlu0.b32.cont [2/16] %v32, 128
    %35 = vxpose.xlu0.b32.cont [3/16] 0.0, 128
    %36 = vxpose.xlu0.b32.cont [4/16] 0.0, 128
    %37 = vxpose.xlu0.b32.cont [5/16] 0.0, 128
    %38 = vxpose.xlu0.b32.cont [6/16] 0.0, 128
    %39 = vxpose.xlu0.b32.cont [7/16] 0.0, 128
    %40 = vxpose.xlu0.b32.cont [8/16] 0.0, 128
    %41 = vxpose.xlu0.b32.cont [9/16] 0.0, 128
    %42 = vxpose.xlu0.b32.cont [10/16] 0.0, 128
    %43 = vxpose.xlu0.b32.cont [11/16] 0.0, 128
    %44 = vxpose.xlu0.b32.cont [12/16] 0.0, 128
    %45 = vxpose.xlu0.b32.cont [13/16] 0.0, 128
    %46 = vxpose.xlu0.b32.cont [14/16] 0.0, 128
    %47 = vxpose.xlu0.b32.cont [15/16] 0.0, 128
    %48 = vxpose.xlu0.b32.end [16/16] 0.0, 128
    %v49 = vpop.trf.xlu0
    %v50 = vpop.trf.xlu0
    %v51 = vpop.trf.xlu0
    %v52 = vpop.trf.xlu0
    %v53 = vpop.trf.xlu0
    %v54 = vpop.trf.xlu0
    %v55 = vpop.trf.xlu0
    %v56 = vpop.trf.xlu0
    %v57 = vpop.trf.xlu0
    %v58 = vpop.trf.xlu0
    %v59 = vpop.trf.xlu0
    %v60 = vpop.trf.xlu0
    %v61 = vpop.trf.xlu0
    %v62 = vpop.trf.xlu0
    %v63 = vpop.trf.xlu0
    %v64 = vpop.trf.xlu0
    %v65 = vld [vmem:[#allocation2] sm:$0xff]
    %v66 = vld [vmem:[#allocation2 + $0x150] ss:$0 sm:$0xff]
    %vm67 = vcmask 64512
    %v69 = vsel %vm67, %v29, 0
    %v72 = vsel %vm67, %v30, 0
    %74 = vmatprep.subr.mxu0 0.0
    %75 = vmatpush1.msra.mxu0 0.0
    %76 = vmatprep.subr.mxu0 0.0
    %77 = vmatpush1.msra.mxu0 0.0
    %78 = vmatprep.subr.mxu0 0.0
    %79 = vmatpush1.msra.mxu0 0.0
    %80 = vmatprep.subr.mxu0 0.0
    %81 = vmatpush1.msra.mxu0 0.0
    %82 = vmatprep.subr.mxu0 0.0
    %83 = vmatpush1.msra.mxu0 0.0
    %84 = vmatprep.subr.mxu0 0.0
    %85 = vmatpush1.msra.mxu0 0.0
    %86 = vmatprep.subr.mxu0 0.0
    %87 = vmatpush1.msra.mxu0 0.0
    %88 = vmatprep.subr.mxu0 0.0
    %89 = vmatpush1.msra.mxu0 0.0
    %90 = vmatprep.subr.mxu0 0.0
    %91 = vmatpush1.msra.mxu0 0.0
    %92 = vmatprep.subr.mxu0 0.0
    %93 = vmatpush1.msra.mxu0 0.0
    %94 = vmatprep.subr.mxu0 0.0
    %95 = vmatpush1.msra.mxu0 0.0
    %96 = vmatprep.subr.mxu0 0.0
    %97 = vmatpush1.msra.mxu0 0.0
    %98 = vmatprep.subr.mxu0 0.0
    %99 = vmatpush1.msra.mxu0 0.0
    %100 = vmatprep.subr.mxu0 0.0
    %101 = vmatpush1.msra.mxu0 0.0
    %102 = vmatprep.subr.mxu0 0.0
    %103 = vmatpush1.msra.mxu0 0.0
    %104 = vmatprep.subr.mxu0 0.0
    %105 = vmatpush1.msra.mxu0 %v65
    %106 = vmatprep.subr.mxu0 0.0
    %107 = vmatpush2.msra.mxu0 0.0
    %108 = vmatprep.subr.mxu0 0.0
    %109 = vmatpush2.msra.mxu0 0.0
    %110 = vmatprep.subr.mxu0 0.0
    %111 = vmatpush2.msra.mxu0 0.0
    %112 = vmatprep.subr.mxu0 0.0
    %113 = vmatpush2.msra.mxu0 0.0
    %114 = vmatprep.subr.mxu0 0.0
    %115 = vmatpush2.msra.mxu0 0.0
    %116 = vmatprep.subr.mxu0 0.0
    %117 = vmatpush2.msra.mxu0 0.0
    %118 = vmatprep.subr.mxu0 0.0
    %119 = vmatpush2.msra.mxu0 0.0
    %120 = vmatprep.subr.mxu0 0.0
    %121 = vmatpush2.msra.mxu0 0.0
    %122 = vmatprep.subr.mxu0 0.0
    %123 = vmatpush2.msra.mxu0 0.0
    %124 = vmatprep.subr.mxu0 0.0
    %125 = vmatpush2.msra.mxu0 0.0
    %126 = vmatprep.subr.mxu0 0.0
    %127 = vmatpush2.msra.mxu0 0.0
    %128 = vmatprep.subr.mxu0 0.0
    %129 = vmatpush2.msra.mxu0 0.0
    %130 = vmatprep.subr.mxu0 0.0
    %131 = vmatpush2.msra.mxu0 0.0
    %132 = vmatprep.subr.mxu0 0.0
    %133 = vmatpush2.msra.mxu0 0.0
    %134 = vmatprep.subr.mxu0 0.0
    %135 = vmatpush2.msra.mxu0 0.0
    %136 = vmatprep.subr.mxu0 0.0
    %137 = vmatpush2.msra.mxu0 0.0
    %138 = vmatprep.mubr.f32.mxu0 0.0
    %139 = vmatmul.mubr.f32.gmra.mxu0 %v69
    %v140 = vpop.f32.mrf.mxu0
    %v141 = vadd.f32 %v66, %v140
    %v142 = vpop.f32.mrf.mxu0
    %143 = vmatprep.mubr.f32.mxu0 0.0
    %144 = vmatmul.mubr.f32.gmra.mxu0 %v72
    %v145 = vpop.f32.mrf.mxu0
    %v146 = vadd.f32 %v66, %v145
    %v147 = vpop.f32.mrf.mxu0
    %148 = vdwg.mxu0
    %v149 = vmax.f32 %v141, 0.0
    %v150 = vmax.f32 %v146, 0.0
    %v151 = vld [vmem:[#allocation2 + $0x10] sm:$0xff]
    %v152 = vld [vmem:[#allocation2 + $0x20] sm:$0xff]
    %v153 = vld [vmem:[#allocation2 + $0x30] sm:$0xff]
    %v154 = vld [vmem:[#allocation2 + $0x40] sm:$0xff]
    %v155 = vld [vmem:[#allocation2 + $0x151] ss:$0 sm:$0xff]
    %vm156 = vcmask 261120
    %v158 = vsel %vm156, %v149, 0
    %v161 = vsel %vm156, %v150, 0
    %163 = vmatprep.subr.mxu0 0.0
    %164 = vmatpush1.msra.mxu0 0.0
    %165 = vmatprep.subr.mxu0 0.0
    %166 = vmatpush1.msra.mxu0 0.0
    %167 = vmatprep.subr.mxu0 0.0
    %168 = vmatpush1.msra.mxu0 0.0
    %169 = vmatprep.subr.mxu0 0.0
    %170 = vmatpush1.msra.mxu0 0.0
    %171 = vmatprep.subr.mxu0 0.0
    %172 = vmatpush1.msra.mxu0 0.0
    %173 = vmatprep.subr.mxu0 0.0
    %174 = vmatpush1.msra.mxu0 0.0
    %175 = vmatprep.subr.mxu0 0.0
    %176 = vmatpush1.msra.mxu0 0.0
    %177 = vmatprep.subr.mxu0 0.0
    %178 = vmatpush1.msra.mxu0 0.0
    %179 = vmatprep.subr.mxu0 0.0
    %180 = vmatpush1.msra.mxu0 0.0
    %181 = vmatprep.subr.mxu0 0.0
    %182 = vmatpush1.msra.mxu0 0.0
    %183 = vmatprep.subr.mxu0 0.0
    %184 = vmatpush1.msra.mxu0 0.0
    %185 = vmatprep.subr.mxu0 0.0
    %186 = vmatpush1.msra.mxu0 0.0
    %187 = vmatprep.subr.mxu0 0.0
    %188 = vmatpush1.msra.mxu0 %v154
    %189 = vmatprep.subr.mxu0 0.0
    %190 = vmatpush1.msra.mxu0 %v153
    %191 = vmatprep.subr.mxu0 0.0
    %192 = vmatpush1.msra.mxu0 %v152
    %193 = vmatprep.subr.mxu0 0.0
    %194 = vmatpush1.msra.mxu0 %v151
    %195 = vmatprep.subr.mxu0 0.0
    %196 = vmatpush2.msra.mxu0 0.0
    %197 = vmatprep.subr.mxu0 0.0
    %198 = vmatpush2.msra.mxu0 0.0
    %199 = vmatprep.subr.mxu0 0.0
    %200 = vmatpush2.msra.mxu0 0.0
    %201 = vmatprep.subr.mxu0 0.0
    %202 = vmatpush2.msra.mxu0 0.0
    %203 = vmatprep.subr.mxu0 0.0
    %204 = vmatpush2.msra.mxu0 0.0
    %205 = vmatprep.subr.mxu0 0.0
    %206 = vmatpush2.msra.mxu0 0.0
    %207 = vmatprep.subr.mxu0 0.0
    %208 = vmatpush2.msra.mxu0 0.0
    %209 = vmatprep.subr.mxu0 0.0
    %210 = vmatpush2.msra.mxu0 0.0
    %211 = vmatprep.subr.mxu0 0.0
    %212 = vmatpush2.msra.mxu0 0.0
    %213 = vmatprep.subr.mxu0 0.0
    %214 = vmatpush2.msra.mxu0 0.0
    %215 = vmatprep.subr.mxu0 0.0
    %216 = vmatpush2.msra.mxu0 0.0
    %217 = vmatprep.subr.mxu0 0.0
    %218 = vmatpush2.msra.mxu0 0.0
    %219 = vmatprep.subr.mxu0 0.0
    %220 = vmatpush2.msra.mxu0 0.0
    %221 = vmatprep.subr.mxu0 0.0
    %222 = vmatpush2.msra.mxu0 0.0
    %223 = vmatprep.subr.mxu0 0.0
    %224 = vmatpush2.msra.mxu0 0.0
    %225 = vmatprep.subr.mxu0 0.0
    %226 = vmatpush2.msra.mxu0 0.0
    %227 = vmatprep.mubr.f32.mxu0 0.0
    %228 = vmatmul.mubr.f32.gmra.mxu0 %v158
    %v229 = vpop.f32.mrf.mxu0
    %v230 = vadd.f32 %v155, %v229
    %v231 = vpop.f32.mrf.mxu0
    %232 = vmatprep.mubr.f32.mxu0 0.0
    %233 = vmatmul.mubr.f32.gmra.mxu0 %v161
    %v234 = vpop.f32.mrf.mxu0
    %v235 = vadd.f32 %v155, %v234
    %v236 = vpop.f32.mrf.mxu0
    %237 = vdwg.mxu0
    %v238 = vld [vmem:[#allocation2 + $0x50] sm:$0xff]
    %v239 = vld [vmem:[#allocation2 + $0x58] sm:$0xff]
    %v240 = vld [vmem:[#allocation2 + $0x60] sm:$0xff]
    %v241 = vld [vmem:[#allocation2 + $0x68] sm:$0xff]
    %v242 = vld [vmem:[#allocation2 + $0x70] sm:$0xff]
    %v243 = vld [vmem:[#allocation2 + $0x78] sm:$0xff]
    %v244 = vld [vmem:[#allocation2 + $0x80] sm:$0xff]
    %v245 = vld [vmem:[#allocation2 + $0x88] sm:$0xff]
    %s246 = scalar_lea.vmem [#allocation2], 338
    %v247 = vld [vmem:[%s246] ss:$8 sm:$0x3]
    %v249 = vlaneseq
    %v250 = vshrl.u32 %v249, 7
    %v251 = vsub.s32 0, %v250
    %v252 = vrot.slane %v247, %v251
    %v253 = vlaneseq
    %v254 = vshrl.u32 %v253, 7
    %v255 = vsub.s32 1, %v254
    %v256 = vrot.slane %v247, %v255
    %v260 = vsel %vm156, %v230, 0
    %v263 = vsel %vm156, %v235, 0
    %265 = vmatprep.subr.mxu0 0.0
    %266 = vmatpush1.msra.mxu0 0.0
    %267 = vmatprep.subr.mxu0 0.0
    %268 = vmatpush1.msra.mxu0 0.0
    %269 = vmatprep.subr.mxu0 0.0
    %270 = vmatpush1.msra.mxu0 0.0
    %271 = vmatprep.subr.mxu0 0.0
    %272 = vmatpush1.msra.mxu0 0.0
    %273 = vmatprep.subr.mxu0 0.0
    %274 = vmatpush1.msra.mxu0 0.0
    %275 = vmatprep.subr.mxu0 0.0
    %276 = vmatpush1.msra.mxu0 0.0
    %277 = vmatprep.subr.mxu0 0.0
    %278 = vmatpush1.msra.mxu0 0.0
    %279 = vmatprep.subr.mxu0 0.0
    %280 = vmatpush1.msra.mxu0 0.0
    %281 = vmatprep.subr.mxu0 0.0
    %282 = vmatpush1.msra.mxu0 0.0
    %283 = vmatprep.subr.mxu0 0.0
    %284 = vmatpush1.msra.mxu0 0.0
    %285 = vmatprep.subr.mxu0 0.0
    %286 = vmatpush1.msra.mxu0 0.0
    %287 = vmatprep.subr.mxu0 0.0
    %288 = vmatpush1.msra.mxu0 0.0
    %289 = vmatprep.subr.mxu0 %v245
    %290 = vmatpush1.msra.mxu0 %v244
    %291 = vmatprep.subr.mxu0 %v243
    %292 = vmatpush1.msra.mxu0 %v242
    %293 = vmatprep.subr.mxu0 %v241
    %294 = vmatpush1.msra.mxu0 %v240
    %295 = vmatprep.subr.mxu0 %v239
    %296 = vmatpush1.msra.mxu0 %v238
    %297 = vmatprep.subr.mxu0 0.0
    %298 = vmatpush2.msra.mxu0 0.0
    %299 = vmatprep.subr.mxu0 0.0
    %300 = vmatpush2.msra.mxu0 0.0
    %301 = vmatprep.subr.mxu0 0.0
    %302 = vmatpush2.msra.mxu0 0.0
    %303 = vmatprep.subr.mxu0 0.0
    %304 = vmatpush2.msra.mxu0 0.0
    %305 = vmatprep.subr.mxu0 0.0
    %306 = vmatpush2.msra.mxu0 0.0
    %307 = vmatprep.subr.mxu0 0.0
    %308 = vmatpush2.msra.mxu0 0.0
    %309 = vmatprep.subr.mxu0 0.0
    %310 = vmatpush2.msra.mxu0 0.0
    %311 = vmatprep.subr.mxu0 0.0
    %312 = vmatpush2.msra.mxu0 0.0
    %313 = vmatprep.subr.mxu0 0.0
    %314 = vmatpush2.msra.mxu0 0.0
    %315 = vmatprep.subr.mxu0 0.0
    %316 = vmatpush2.msra.mxu0 0.0
    %317 = vmatprep.subr.mxu0 0.0
    %318 = vmatpush2.msra.mxu0 0.0
    %319 = vmatprep.subr.mxu0 0.0
    %320 = vmatpush2.msra.mxu0 0.0
    %321 = vmatprep.subr.mxu0 0.0
    %322 = vmatpush2.msra.mxu0 0.0
    %323 = vmatprep.subr.mxu0 0.0
    %324 = vmatpush2.msra.mxu0 0.0
    %325 = vmatprep.subr.mxu0 0.0
    %326 = vmatpush2.msra.mxu0 0.0
    %327 = vmatprep.subr.mxu0 0.0
    %328 = vmatpush2.msra.mxu0 0.0
    %329 = vmatprep.mubr.f32.mxu0 0.0
    %330 = vmatmul.mubr.f32.gmra.mxu0 %v260
    %v331 = vpop.f32.mrf.mxu0
    %v332 = vadd.f32 %v252, %v331
    %v333 = vpop.f32.mrf.mxu0
    %v334 = vadd.f32 %v256, %v333
    %335 = vmatprep.mubr.f32.mxu0 0.0
    %336 = vmatmul.mubr.f32.gmra.mxu0 %v263
    %v337 = vpop.f32.mrf.mxu0
    %v338 = vadd.f32 %v252, %v337
    %v339 = vpop.f32.mrf.mxu0
    %v340 = vadd.f32 %v256, %v339
    %341 = vdwg.mxu0
    %v344 = vcombine.high %v332, %v332
    %v346 = vunpack.c.l.s4 1966171168
    %v347 = vunpack.c.0.s8 %v346
    %v348 = vlaneseq
    %v349 = vshrl.u32 %v348, 7
    %v350 = vsub.s32 %v347, %v349
    %v351 = vrot.slane %v332, %v350
    %v353 = vunpack.c.l.s4 1966171168
    %v354 = vunpack.c.0.s8 %v353
    %v355 = vlaneseq
    %v356 = vshrl.u32 %v355, 7
    %v357 = vsub.s32 %v354, %v356
    %v358 = vrot.slane %v344, %v357
    %v359 = vcombine.high %v351, %v351
    %v360 = vcombine.high %v358, %v358
    %v362 = vunpack.c.l.s4 1966171168
    %v363 = vunpack.c.0.s8 %v362
    %v364 = vlaneseq
    %v365 = vshrl.u32 %v364, 7
    %v366 = vsub.s32 %v363, %v365
    %v367 = vrot.slane %v351, %v366
    %v369 = vunpack.c.l.s4 1966171168
    %v370 = vunpack.c.0.s8 %v369
    %v371 = vlaneseq
    %v372 = vshrl.u32 %v371, 7
    %v373 = vsub.s32 %v370, %v372
    %v374 = vrot.slane %v358, %v373
    %v376 = vunpack.c.l.s4 1966171168
    %v377 = vunpack.c.0.s8 %v376
    %v378 = vlaneseq
    %v379 = vshrl.u32 %v378, 7
    %v380 = vsub.s32 %v377, %v379
    %v381 = vrot.slane %v359, %v380
    %v383 = vunpack.c.l.s4 1966171168
    %v384 = vunpack.c.0.s8 %v383
    %v385 = vlaneseq
    %v386 = vshrl.u32 %v385, 7
    %v387 = vsub.s32 %v384, %v386
    %v388 = vrot.slane %v360, %v387
    %v389 = vcombine.high %v367, %v367
    %v390 = vcombine.high %v374, %v374
    %v391 = vcombine.high %v381, %v381
    %v392 = vcombine.high %v388, %v388
    %v393 = vcombine.high %v338, %v338
    %v395 = vunpack.c.l.s4 1966171168
    %v396 = vunpack.c.0.s8 %v395
    %v397 = vlaneseq
    %v398 = vshrl.u32 %v397, 7
    %v399 = vsub.s32 %v396, %v398
    %v400 = vrot.slane %v338, %v399
    %v402 = vunpack.c.l.s4 1966171168
    %v403 = vunpack.c.0.s8 %v402
    %v404 = vlaneseq
    %v405 = vshrl.u32 %v404, 7
    %v406 = vsub.s32 %v403, %v405
    %v407 = vrot.slane %v393, %v406
    %v408 = vcombine.high %v400, %v400
    %v409 = vcombine.high %v407, %v407
    %v411 = vunpack.c.l.s4 1966171168
    %v412 = vunpack.c.0.s8 %v411
    %v413 = vlaneseq
    %v414 = vshrl.u32 %v413, 7
    %v415 = vsub.s32 %v412, %v414
    %v416 = vrot.slane %v400, %v415
    %v418 = vunpack.c.l.s4 1966171168
    %v419 = vunpack.c.0.s8 %v418
    %v420 = vlaneseq
    %v421 = vshrl.u32 %v420, 7
    %v422 = vsub.s32 %v419, %v421
    %v423 = vrot.slane %v407, %v422
    %v425 = vunpack.c.l.s4 1966171168
    %v426 = vunpack.c.0.s8 %v425
    %v427 = vlaneseq
    %v428 = vshrl.u32 %v427, 7
    %v429 = vsub.s32 %v426, %v428
    %v430 = vrot.slane %v408, %v429
    %v432 = vunpack.c.l.s4 1966171168
    %v433 = vunpack.c.0.s8 %v432
    %v434 = vlaneseq
    %v435 = vshrl.u32 %v434, 7
    %v436 = vsub.s32 %v433, %v435
    %v437 = vrot.slane %v409, %v436
    %v438 = vcombine.high %v416, %v416
    %v439 = vcombine.high %v423, %v423
    %v440 = vcombine.high %v430, %v430
    %v441 = vcombine.high %v437, %v437
    %v442 = vlaneseq
    %v443 = vshrl.u32 %v442, 7
    %v444 = vsub.s32 0, %v443
    %v445 = vrot.slane %v367, %v444
    %v446 = vlaneseq
    %v447 = vshrl.u32 %v446, 7
    %v448 = vsub.s32 0, %v447
    %v449 = vrot.slane %v381, %v448
    %v450 = vlaneseq
    %v451 = vshrl.u32 %v450, 7
    %v452 = vsub.s32 0, %v451
    %v453 = vrot.slane %v389, %v452
    %v454 = vlaneseq
    %v455 = vshrl.u32 %v454, 7
    %v456 = vsub.s32 0, %v455
    %v457 = vrot.slane %v391, %v456
    %v458 = vlaneseq
    %v459 = vshrl.u32 %v458, 7
    %v460 = vsub.s32 0, %v459
    %v461 = vrot.slane %v374, %v460
    %v462 = vlaneseq
    %v463 = vshrl.u32 %v462, 7
    %v464 = vsub.s32 0, %v463
    %v465 = vrot.slane %v388, %v464
    %v466 = vlaneseq
    %v467 = vshrl.u32 %v466, 7
    %v468 = vsub.s32 0, %v467
    %v469 = vrot.slane %v390, %v468
    %v470 = vlaneseq
    %v471 = vshrl.u32 %v470, 7
    %v472 = vsub.s32 0, %v471
    %v473 = vrot.slane %v392, %v472
    %v474 = vlaneseq
    %v475 = vshrl.u32 %v474, 7
    %v476 = vsub.s32 0, %v475
    %v477 = vrot.slane %v416, %v476
    %v478 = vlaneseq
    %v479 = vshrl.u32 %v478, 7
    %v480 = vsub.s32 0, %v479
    %v481 = vrot.slane %v430, %v480
    %v482 = vlaneseq
    %v483 = vshrl.u32 %v482, 7
    %v484 = vsub.s32 0, %v483
    %v485 = vrot.slane %v438, %v484
    %v486 = vlaneseq
    %v487 = vshrl.u32 %v486, 7
    %v488 = vsub.s32 0, %v487
    %v489 = vrot.slane %v440, %v488
    %v490 = vlaneseq
    %v491 = vshrl.u32 %v490, 7
    %v492 = vsub.s32 0, %v491
    %v493 = vrot.slane %v423, %v492
    %v494 = vlaneseq
    %v495 = vshrl.u32 %v494, 7
    %v496 = vsub.s32 0, %v495
    %v497 = vrot.slane %v437, %v496
    %v498 = vlaneseq
    %v499 = vshrl.u32 %v498, 7
    %v500 = vsub.s32 0, %v499
    %v501 = vrot.slane %v439, %v500
    %v502 = vlaneseq
    %v503 = vshrl.u32 %v502, 7
    %v504 = vsub.s32 0, %v503
    %v505 = vrot.slane %v441, %v504
    %522 = vrot.lane.b32.xlu0 %v332, 96
    %v523 = vpop.permute.xlu0 %522
    %524 = vrot.lane.b32.xlu0 %v338, 96
    %v525 = vpop.permute.xlu0 %524
    %v528 = vadd.f32 %v445, %v523
    %v529 = vadd.f32 %v445, %v525
    %v530 = vadd.f32 %v449, %v523
    %v531 = vadd.f32 %v449, %v525
    %v532 = vadd.f32 %v453, %v523
    %v533 = vadd.f32 %v453, %v525
    %v534 = vadd.f32 %v457, %v523
    %v535 = vadd.f32 %v457, %v525
    %v536 = vadd.f32 %v461, %v523
    %v537 = vadd.f32 %v461, %v525
    %v538 = vadd.f32 %v465, %v523
    %v539 = vadd.f32 %v465, %v525
    %v540 = vadd.f32 %v469, %v523
    %v541 = vadd.f32 %v469, %v525
    %v542 = vadd.f32 %v473, %v523
    %v543 = vadd.f32 %v473, %v525
    %v544 = vadd.f32 %v477, %v523
    %v545 = vadd.f32 %v477, %v525
    %v546 = vadd.f32 %v481, %v523
    %v547 = vadd.f32 %v481, %v525
    %v548 = vadd.f32 %v485, %v523
    %v549 = vadd.f32 %v485, %v525
    %v550 = vadd.f32 %v489, %v523
    %v551 = vadd.f32 %v489, %v525
    %v552 = vadd.f32 %v493, %v523
    %v553 = vadd.f32 %v493, %v525
    %v554 = vadd.f32 %v497, %v523
    %v555 = vadd.f32 %v497, %v525
    %v556 = vadd.f32 %v501, %v523
    %v557 = vadd.f32 %v501, %v525
    %v558 = vadd.f32 %v505, %v523
    %v559 = vadd.f32 %v505, %v525
    %v560 = vxor.u32 %v528, 2147483648
    %v561 = vxor.u32 %v529, 2147483648
    %v562 = vxor.u32 %v530, 2147483648
    %v563 = vxor.u32 %v531, 2147483648
    %v564 = vxor.u32 %v532, 2147483648
    %v565 = vxor.u32 %v533, 2147483648
    %v566 = vxor.u32 %v534, 2147483648
    %v567 = vxor.u32 %v535, 2147483648
    %v568 = vxor.u32 %v536, 2147483648
    %v569 = vxor.u32 %v537, 2147483648
    %v570 = vxor.u32 %v538, 2147483648
    %v571 = vxor.u32 %v539, 2147483648
    %v572 = vxor.u32 %v540, 2147483648
    %v573 = vxor.u32 %v541, 2147483648
    %v574 = vxor.u32 %v542, 2147483648
    %v575 = vxor.u32 %v543, 2147483648
    %v576 = vxor.u32 %v544, 2147483648
    %v577 = vxor.u32 %v545, 2147483648
    %v578 = vxor.u32 %v546, 2147483648
    %v579 = vxor.u32 %v547, 2147483648
    %v580 = vxor.u32 %v548, 2147483648
    %v581 = vxor.u32 %v549, 2147483648
    %v582 = vxor.u32 %v550, 2147483648
    %v583 = vxor.u32 %v551, 2147483648
    %v584 = vxor.u32 %v552, 2147483648
    %v585 = vxor.u32 %v553, 2147483648
    %v586 = vxor.u32 %v554, 2147483648
    %v587 = vxor.u32 %v555, 2147483648
    %v588 = vxor.u32 %v556, 2147483648
    %v589 = vxor.u32 %v557, 2147483648
    %v590 = vxor.u32 %v558, 2147483648
    %v591 = vxor.u32 %v559, 2147483648
    %v592 = vmul.f32 %v560, 1.442695
    %v593 = vpow.pop %v592
    %v594 = vmul.f32 %v561, 1.442695
    %v595 = vpow.pop %v594
    %v596 = vmul.f32 %v562, 1.442695
    %v597 = vpow.pop %v596
    %v598 = vmul.f32 %v563, 1.442695
    %v599 = vpow.pop %v598
    %v600 = vmul.f32 %v564, 1.442695
    %v601 = vpow.pop %v600
    %v602 = vmul.f32 %v565, 1.442695
    %v603 = vpow.pop %v602
    %v604 = vmul.f32 %v566, 1.442695
    %v605 = vpow.pop %v604
    %v606 = vmul.f32 %v567, 1.442695
    %v607 = vpow.pop %v606
    %v608 = vmul.f32 %v568, 1.442695
    %v609 = vpow.pop %v608
    %v610 = vmul.f32 %v569, 1.442695
    %v611 = vpow.pop %v610
    %v612 = vmul.f32 %v570, 1.442695
    %v613 = vpow.pop %v612
    %v614 = vmul.f32 %v571, 1.442695
    %v615 = vpow.pop %v614
    %v616 = vmul.f32 %v572, 1.442695
    %v617 = vpow.pop %v616
    %v618 = vmul.f32 %v573, 1.442695
    %v619 = vpow.pop %v618
    %v620 = vmul.f32 %v574, 1.442695
    %v621 = vpow.pop %v620
    %v622 = vmul.f32 %v575, 1.442695
    %v623 = vpow.pop %v622
    %v624 = vmul.f32 %v576, 1.442695
    %v625 = vpow.pop %v624
    %v626 = vmul.f32 %v577, 1.442695
    %v627 = vpow.pop %v626
    %v628 = vmul.f32 %v578, 1.442695
    %v629 = vpow.pop %v628
    %v630 = vmul.f32 %v579, 1.442695
    %v631 = vpow.pop %v630
    %v632 = vmul.f32 %v580, 1.442695
    %v633 = vpow.pop %v632
    %v634 = vmul.f32 %v581, 1.442695
    %v635 = vpow.pop %v634
    %v636 = vmul.f32 %v582, 1.442695
    %v637 = vpow.pop %v636
    %v638 = vmul.f32 %v583, 1.442695
    %v639 = vpow.pop %v638
    %v640 = vmul.f32 %v584, 1.442695
    %v641 = vpow.pop %v640
    %v642 = vmul.f32 %v585, 1.442695
    %v643 = vpow.pop %v642
    %v644 = vmul.f32 %v586, 1.442695
    %v645 = vpow.pop %v644
    %v646 = vmul.f32 %v587, 1.442695
    %v647 = vpow.pop %v646
    %v648 = vmul.f32 %v588, 1.442695
    %v649 = vpow.pop %v648
    %v650 = vmul.f32 %v589, 1.442695
    %v651 = vpow.pop %v650
    %v652 = vmul.f32 %v590, 1.442695
    %v653 = vpow.pop %v652
    %v654 = vmul.f32 %v591, 1.442695
    %v655 = vpow.pop %v654
    %v656 = vadd.f32 %v593, 1.0
    %v657 = vadd.f32 %v595, 1.0
    %v658 = vadd.f32 %v597, 1.0
    %v659 = vadd.f32 %v599, 1.0
    %v660 = vadd.f32 %v601, 1.0
    %v661 = vadd.f32 %v603, 1.0
    %v662 = vadd.f32 %v605, 1.0
    %v663 = vadd.f32 %v607, 1.0
    %v664 = vadd.f32 %v609, 1.0
    %v665 = vadd.f32 %v611, 1.0
    %v666 = vadd.f32 %v613, 1.0
    %v667 = vadd.f32 %v615, 1.0
    %v668 = vadd.f32 %v617, 1.0
    %v669 = vadd.f32 %v619, 1.0
    %v670 = vadd.f32 %v621, 1.0
    %v671 = vadd.f32 %v623, 1.0
    %v672 = vadd.f32 %v625, 1.0
    %v673 = vadd.f32 %v627, 1.0
    %v674 = vadd.f32 %v629, 1.0
    %v675 = vadd.f32 %v631, 1.0
    %v676 = vadd.f32 %v633, 1.0
    %v677 = vadd.f32 %v635, 1.0
    %v678 = vadd.f32 %v637, 1.0
    %v679 = vadd.f32 %v639, 1.0
    %v680 = vadd.f32 %v641, 1.0
    %v681 = vadd.f32 %v643, 1.0
    %v682 = vadd.f32 %v645, 1.0
    %v683 = vadd.f32 %v647, 1.0
    %v684 = vadd.f32 %v649, 1.0
    %v685 = vadd.f32 %v651, 1.0
    %v686 = vadd.f32 %v653, 1.0
    %v687 = vadd.f32 %v655, 1.0
    %v688 = vrcp.pop %v656
    %v689 = vmul.f32 1.0, %v688
    %v690 = vrcp.pop %v657
    %v691 = vmul.f32 1.0, %v690
    %v692 = vrcp.pop %v658
    %v693 = vmul.f32 1.0, %v692
    %v694 = vrcp.pop %v659
    %v695 = vmul.f32 1.0, %v694
    %v696 = vrcp.pop %v660
    %v697 = vmul.f32 1.0, %v696
    %v698 = vrcp.pop %v661
    %v699 = vmul.f32 1.0, %v698
    %v700 = vrcp.pop %v662
    %v701 = vmul.f32 1.0, %v700
    %v702 = vrcp.pop %v663
    %v703 = vmul.f32 1.0, %v702
    %v704 = vrcp.pop %v664
    %v705 = vmul.f32 1.0, %v704
    %v706 = vrcp.pop %v665
    %v707 = vmul.f32 1.0, %v706
    %v708 = vrcp.pop %v666
    %v709 = vmul.f32 1.0, %v708
    %v710 = vrcp.pop %v667
    %v711 = vmul.f32 1.0, %v710
    %v712 = vrcp.pop %v668
    %v713 = vmul.f32 1.0, %v712
    %v714 = vrcp.pop %v669
    %v715 = vmul.f32 1.0, %v714
    %v716 = vrcp.pop %v670
    %v717 = vmul.f32 1.0, %v716
    %v718 = vrcp.pop %v671
    %v719 = vmul.f32 1.0, %v718
    %v720 = vrcp.pop %v672
    %v721 = vmul.f32 1.0, %v720
    %v722 = vrcp.pop %v673
    %v723 = vmul.f32 1.0, %v722
    %v724 = vrcp.pop %v674
    %v725 = vmul.f32 1.0, %v724
    %v726 = vrcp.pop %v675
    %v727 = vmul.f32 1.0, %v726
    %v728 = vrcp.pop %v676
    %v729 = vmul.f32 1.0, %v728
    %v730 = vrcp.pop %v677
    %v731 = vmul.f32 1.0, %v730
    %v732 = vrcp.pop %v678
    %v733 = vmul.f32 1.0, %v732
    %v734 = vrcp.pop %v679
    %v735 = vmul.f32 1.0, %v734
    %v736 = vrcp.pop %v680
    %v737 = vmul.f32 1.0, %v736
    %v738 = vrcp.pop %v681
    %v739 = vmul.f32 1.0, %v738
    %v740 = vrcp.pop %v682
    %v741 = vmul.f32 1.0, %v740
    %v742 = vrcp.pop %v683
    %v743 = vmul.f32 1.0, %v742
    %v744 = vrcp.pop %v684
    %v745 = vmul.f32 1.0, %v744
    %v746 = vrcp.pop %v685
    %v747 = vmul.f32 1.0, %v746
    %v748 = vrcp.pop %v686
    %v749 = vmul.f32 1.0, %v748
    %v750 = vrcp.pop %v687
    %v751 = vmul.f32 1.0, %v750
    %v752 = vlaneseq
    %v753 = vshrl.u32 %v752, 7
    %v754 = vsub.s32 0, %v753
    %v755 = vrot.slane %v31, %v754
    %757 = vbcast.lane.b32.xlu0 %v755, 256
    %v758 = vpop.permute.xlu0 %757
    %s760 = sor.u32 256, 8
    %761 = vbcast.lane.b32.xlu0 %v755, %s760
    %v762 = vpop.permute.xlu0 %761
    %v763 = vlaneseq
    %v764 = vshrl.u32 %v763, 7
    %v765 = vsub.s32 1, %v764
    %v766 = vrot.slane %v31, %v765
    %768 = vbcast.lane.b32.xlu0 %v766, 256
    %v769 = vpop.permute.xlu0 %768
    %s771 = sor.u32 256, 8
    %772 = vbcast.lane.b32.xlu0 %v766, %s771
    %v773 = vpop.permute.xlu0 %772
    %v774 = vlaneseq
    %v775 = vshrl.u32 %v774, 7
    %v776 = vsub.s32 2, %v775
    %v777 = vrot.slane %v31, %v776
    %779 = vbcast.lane.b32.xlu0 %v777, 256
    %v780 = vpop.permute.xlu0 %779
    %s782 = sor.u32 256, 8
    %783 = vbcast.lane.b32.xlu0 %v777, %s782
    %v784 = vpop.permute.xlu0 %783
    %v785 = vlaneseq
    %v786 = vshrl.u32 %v785, 7
    %v787 = vsub.s32 3, %v786
    %v788 = vrot.slane %v31, %v787
    %790 = vbcast.lane.b32.xlu0 %v788, 256
    %v791 = vpop.permute.xlu0 %790
    %s793 = sor.u32 256, 8
    %794 = vbcast.lane.b32.xlu0 %v788, %s793
    %v795 = vpop.permute.xlu0 %794
    %v796 = vlaneseq
    %v797 = vshrl.u32 %v796, 7
    %v798 = vsub.s32 4, %v797
    %v799 = vrot.slane %v31, %v798
    %801 = vbcast.lane.b32.xlu0 %v799, 256
    %v802 = vpop.permute.xlu0 %801
    %s804 = sor.u32 256, 8
    %805 = vbcast.lane.b32.xlu0 %v799, %s804
    %v806 = vpop.permute.xlu0 %805
    %v807 = vlaneseq
    %v808 = vshrl.u32 %v807, 7
    %v809 = vsub.s32 5, %v808
    %v810 = vrot.slane %v31, %v809
    %812 = vbcast.lane.b32.xlu0 %v810, 256
    %v813 = vpop.permute.xlu0 %812
    %s815 = sor.u32 256, 8
    %816 = vbcast.lane.b32.xlu0 %v810, %s815
    %v817 = vpop.permute.xlu0 %816
    %v818 = vlaneseq
    %v819 = vshrl.u32 %v818, 7
    %v820 = vsub.s32 6, %v819
    %v821 = vrot.slane %v31, %v820
    %823 = vbcast.lane.b32.xlu0 %v821, 256
    %v824 = vpop.permute.xlu0 %823
    %s826 = sor.u32 256, 8
    %827 = vbcast.lane.b32.xlu0 %v821, %s826
    %v828 = vpop.permute.xlu0 %827
    %v829 = vlaneseq
    %v830 = vshrl.u32 %v829, 7
    %v831 = vsub.s32 7, %v830
    %v832 = vrot.slane %v31, %v831
    %834 = vbcast.lane.b32.xlu0 %v832, 256
    %v835 = vpop.permute.xlu0 %834
    %s837 = sor.u32 256, 8
    %838 = vbcast.lane.b32.xlu0 %v832, %s837
    %v839 = vpop.permute.xlu0 %838
    %v840 = vlaneseq
    %v841 = vshrl.u32 %v840, 7
    %v842 = vsub.s32 0, %v841
    %v843 = vrot.slane %v32, %v842
    %845 = vbcast.lane.b32.xlu0 %v843, 256
    %v846 = vpop.permute.xlu0 %845
    %s848 = sor.u32 256, 8
    %849 = vbcast.lane.b32.xlu0 %v843, %s848
    %v850 = vpop.permute.xlu0 %849
    %v851 = vlaneseq
    %v852 = vshrl.u32 %v851, 7
    %v853 = vsub.s32 1, %v852
    %v854 = vrot.slane %v32, %v853
    %856 = vbcast.lane.b32.xlu0 %v854, 256
    %v857 = vpop.permute.xlu0 %856
    %s859 = sor.u32 256, 8
    %860 = vbcast.lane.b32.xlu0 %v854, %s859
    %v861 = vpop.permute.xlu0 %860
    %v862 = vlaneseq
    %v863 = vshrl.u32 %v862, 7
    %v864 = vsub.s32 2, %v863
    %v865 = vrot.slane %v32, %v864
    %867 = vbcast.lane.b32.xlu0 %v865, 256
    %v868 = vpop.permute.xlu0 %867
    %s870 = sor.u32 256, 8
    %871 = vbcast.lane.b32.xlu0 %v865, %s870
    %v872 = vpop.permute.xlu0 %871
    %v873 = vlaneseq
    %v874 = vshrl.u32 %v873, 7
    %v875 = vsub.s32 3, %v874
    %v876 = vrot.slane %v32, %v875
    %878 = vbcast.lane.b32.xlu0 %v876, 256
    %v879 = vpop.permute.xlu0 %878
    %s881 = sor.u32 256, 8
    %882 = vbcast.lane.b32.xlu0 %v876, %s881
    %v883 = vpop.permute.xlu0 %882
    %v884 = vlaneseq
    %v885 = vshrl.u32 %v884, 7
    %v886 = vsub.s32 4, %v885
    %v887 = vrot.slane %v32, %v886
    %889 = vbcast.lane.b32.xlu0 %v887, 256
    %v890 = vpop.permute.xlu0 %889
    %s892 = sor.u32 256, 8
    %893 = vbcast.lane.b32.xlu0 %v887, %s892
    %v894 = vpop.permute.xlu0 %893
    %v895 = vlaneseq
    %v896 = vshrl.u32 %v895, 7
    %v897 = vsub.s32 5, %v896
    %v898 = vrot.slane %v32, %v897
    %900 = vbcast.lane.b32.xlu0 %v898, 256
    %v901 = vpop.permute.xlu0 %900
    %s903 = sor.u32 256, 8
    %904 = vbcast.lane.b32.xlu0 %v898, %s903
    %v905 = vpop.permute.xlu0 %904
    %v906 = vlaneseq
    %v907 = vshrl.u32 %v906, 7
    %v908 = vsub.s32 6, %v907
    %v909 = vrot.slane %v32, %v908
    %911 = vbcast.lane.b32.xlu0 %v909, 256
    %v912 = vpop.permute.xlu0 %911
    %s914 = sor.u32 256, 8
    %915 = vbcast.lane.b32.xlu0 %v909, %s914
    %v916 = vpop.permute.xlu0 %915
    %v917 = vlaneseq
    %v918 = vshrl.u32 %v917, 7
    %v919 = vsub.s32 7, %v918
    %v920 = vrot.slane %v32, %v919
    %922 = vbcast.lane.b32.xlu0 %v920, 256
    %v923 = vpop.permute.xlu0 %922
    %s925 = sor.u32 256, 8
    %926 = vbcast.lane.b32.xlu0 %v920, %s925
    %v927 = vpop.permute.xlu0 %926
    %v928 = vmul.f32 %v689, %v758
    %v929 = vmul.f32 %v691, %v762
    %v930 = vmul.f32 %v693, %v769
    %v931 = vmul.f32 %v695, %v773
    %v932 = vmul.f32 %v697, %v780
    %v933 = vmul.f32 %v699, %v784
    %v934 = vmul.f32 %v701, %v791
    %v935 = vmul.f32 %v703, %v795
    %v936 = vmul.f32 %v705, %v802
    %v937 = vmul.f32 %v707, %v806
    %v938 = vmul.f32 %v709, %v813
    %v939 = vmul.f32 %v711, %v817
    %v940 = vmul.f32 %v713, %v824
    %v941 = vmul.f32 %v715, %v828
    %v942 = vmul.f32 %v717, %v835
    %v943 = vmul.f32 %v719, %v839
    %v944 = vmul.f32 %v721, %v846
    %v945 = vmul.f32 %v723, %v850
    %v946 = vmul.f32 %v725, %v857
    %v947 = vmul.f32 %v727, %v861
    %v948 = vmul.f32 %v729, %v868
    %v949 = vmul.f32 %v731, %v872
    %v950 = vmul.f32 %v733, %v879
    %v951 = vmul.f32 %v735, %v883
    %v952 = vmul.f32 %v737, %v890
    %v953 = vmul.f32 %v739, %v894
    %v954 = vmul.f32 %v741, %v901
    %v955 = vmul.f32 %v743, %v905
    %v956 = vmul.f32 %v745, %v912
    %v957 = vmul.f32 %v747, %v916
    %v958 = vmul.f32 %v749, %v923
    %v959 = vmul.f32 %v751, %v927
    %960 = vrot.lane.b32.xlu0 %v332, 64
    %v961 = vpop.permute.xlu0 %960
    %962 = vrot.lane.b32.xlu0 %v338, 64
    %v963 = vpop.permute.xlu0 %962
    %v966 = vmul.f32 %v928, %v961
    %v967 = vmul.f32 %v929, %v963
    %v968 = vmul.f32 %v930, %v961
    %v969 = vmul.f32 %v931, %v963
    %v970 = vmul.f32 %v932, %v961
    %v971 = vmul.f32 %v933, %v963
    %v972 = vmul.f32 %v934, %v961
    %v973 = vmul.f32 %v935, %v963
    %v974 = vmul.f32 %v936, %v961
    %v975 = vmul.f32 %v937, %v963
    %v976 = vmul.f32 %v938, %v961
    %v977 = vmul.f32 %v939, %v963
    %v978 = vmul.f32 %v940, %v961
    %v979 = vmul.f32 %v941, %v963
    %v980 = vmul.f32 %v942, %v961
    %v981 = vmul.f32 %v943, %v963
    %v982 = vmul.f32 %v944, %v961
    %v983 = vmul.f32 %v945, %v963
    %v984 = vmul.f32 %v946, %v961
    %v985 = vmul.f32 %v947, %v963
    %v986 = vmul.f32 %v948, %v961
    %v987 = vmul.f32 %v949, %v963
    %v988 = vmul.f32 %v950, %v961
    %v989 = vmul.f32 %v951, %v963
    %v990 = vmul.f32 %v952, %v961
    %v991 = vmul.f32 %v953, %v963
    %v992 = vmul.f32 %v954, %v961
    %v993 = vmul.f32 %v955, %v963
    %v994 = vmul.f32 %v956, %v961
    %v995 = vmul.f32 %v957, %v963
    %v996 = vmul.f32 %v958, %v961
    %v997 = vmul.f32 %v959, %v963
    %v998 = vsel %vm156, %v966, 0.0
    %v999 = vsel %vm156, %v967, 0.0
    %v1000 = vadd.f32 %v998, %v999
    %v1001 = vrot.slane %v1000, 4
    %v1002 = vadd.f32 %v1000, %v1001
    %v1003 = vrot.slane %v1002, 2
    %v1004 = vadd.f32 %v1002, %v1003
    %v1005 = vrot.slane %v1004, 1
    %v1006 = vadd.f32 %v1004, %v1005
    %v1007 = vsel %vm156, %v968, 0.0
    %v1008 = vsel %vm156, %v969, 0.0
    %v1009 = vadd.f32 %v1007, %v1008
    %v1010 = vrot.slane %v1009, 4
    %v1011 = vadd.f32 %v1009, %v1010
    %v1012 = vrot.slane %v1011, 2
    %v1013 = vadd.f32 %v1011, %v1012
    %v1014 = vrot.slane %v1013, 1
    %v1015 = vadd.f32 %v1013, %v1014
    %v1016 = vsel %vm156, %v970, 0.0
    %v1017 = vsel %vm156, %v971, 0.0
    %v1018 = vadd.f32 %v1016, %v1017
    %v1019 = vrot.slane %v1018, 4
    %v1020 = vadd.f32 %v1018, %v1019
    %v1021 = vrot.slane %v1020, 2
    %v1022 = vadd.f32 %v1020, %v1021
    %v1023 = vrot.slane %v1022, 1
    %v1024 = vadd.f32 %v1022, %v1023
    %v1025 = vsel %vm156, %v972, 0.0
    %v1026 = vsel %vm156, %v973, 0.0
    %v1027 = vadd.f32 %v1025, %v1026
    %v1028 = vrot.slane %v1027, 4
    %v1029 = vadd.f32 %v1027, %v1028
    %v1030 = vrot.slane %v1029, 2
    %v1031 = vadd.f32 %v1029, %v1030
    %v1032 = vrot.slane %v1031, 1
    %v1033 = vadd.f32 %v1031, %v1032
    %v1034 = vsel %vm156, %v974, 0.0
    %v1035 = vsel %vm156, %v975, 0.0
    %v1036 = vadd.f32 %v1034, %v1035
    %v1037 = vrot.slane %v1036, 4
    %v1038 = vadd.f32 %v1036, %v1037
    %v1039 = vrot.slane %v1038, 2
    %v1040 = vadd.f32 %v1038, %v1039
    %v1041 = vrot.slane %v1040, 1
    %v1042 = vadd.f32 %v1040, %v1041
    %v1043 = vsel %vm156, %v976, 0.0
    %v1044 = vsel %vm156, %v977, 0.0
    %v1045 = vadd.f32 %v1043, %v1044
    %v1046 = vrot.slane %v1045, 4
    %v1047 = vadd.f32 %v1045, %v1046
    %v1048 = vrot.slane %v1047, 2
    %v1049 = vadd.f32 %v1047, %v1048
    %v1050 = vrot.slane %v1049, 1
    %v1051 = vadd.f32 %v1049, %v1050
    %v1052 = vsel %vm156, %v978, 0.0
    %v1053 = vsel %vm156, %v979, 0.0
    %v1054 = vadd.f32 %v1052, %v1053
    %v1055 = vrot.slane %v1054, 4
    %v1056 = vadd.f32 %v1054, %v1055
    %v1057 = vrot.slane %v1056, 2
    %v1058 = vadd.f32 %v1056, %v1057
    %v1059 = vrot.slane %v1058, 1
    %v1060 = vadd.f32 %v1058, %v1059
    %v1061 = vsel %vm156, %v980, 0.0
    %v1062 = vsel %vm156, %v981, 0.0
    %v1063 = vadd.f32 %v1061, %v1062
    %v1064 = vrot.slane %v1063, 4
    %v1065 = vadd.f32 %v1063, %v1064
    %v1066 = vrot.slane %v1065, 2
    %v1067 = vadd.f32 %v1065, %v1066
    %v1068 = vrot.slane %v1067, 1
    %v1069 = vadd.f32 %v1067, %v1068
    %v1070 = vsel %vm156, %v982, 0.0
    %v1071 = vsel %vm156, %v983, 0.0
    %v1072 = vadd.f32 %v1070, %v1071
    %v1073 = vrot.slane %v1072, 4
    %v1074 = vadd.f32 %v1072, %v1073
    %v1075 = vrot.slane %v1074, 2
    %v1076 = vadd.f32 %v1074, %v1075
    %v1077 = vrot.slane %v1076, 1
    %v1078 = vadd.f32 %v1076, %v1077
    %v1079 = vsel %vm156, %v984, 0.0
    %v1080 = vsel %vm156, %v985, 0.0
    %v1081 = vadd.f32 %v1079, %v1080
    %v1082 = vrot.slane %v1081, 4
    %v1083 = vadd.f32 %v1081, %v1082
    %v1084 = vrot.slane %v1083, 2
    %v1085 = vadd.f32 %v1083, %v1084
    %v1086 = vrot.slane %v1085, 1
    %v1087 = vadd.f32 %v1085, %v1086
    %v1088 = vsel %vm156, %v986, 0.0
    %v1089 = vsel %vm156, %v987, 0.0
    %v1090 = vadd.f32 %v1088, %v1089
    %v1091 = vrot.slane %v1090, 4
    %v1092 = vadd.f32 %v1090, %v1091
    %v1093 = vrot.slane %v1092, 2
    %v1094 = vadd.f32 %v1092, %v1093
    %v1095 = vrot.slane %v1094, 1
    %v1096 = vadd.f32 %v1094, %v1095
    %v1097 = vsel %vm156, %v988, 0.0
    %v1098 = vsel %vm156, %v989, 0.0
    %v1099 = vadd.f32 %v1097, %v1098
    %v1100 = vrot.slane %v1099, 4
    %v1101 = vadd.f32 %v1099, %v1100
    %v1102 = vrot.slane %v1101, 2
    %v1103 = vadd.f32 %v1101, %v1102
    %v1104 = vrot.slane %v1103, 1
    %v1105 = vadd.f32 %v1103, %v1104
    %v1106 = vsel %vm156, %v990, 0.0
    %v1107 = vsel %vm156, %v991, 0.0
    %v1108 = vadd.f32 %v1106, %v1107
    %v1109 = vrot.slane %v1108, 4
    %v1110 = vadd.f32 %v1108, %v1109
    %v1111 = vrot.slane %v1110, 2
    %v1112 = vadd.f32 %v1110, %v1111
    %v1113 = vrot.slane %v1112, 1
    %v1114 = vadd.f32 %v1112, %v1113
    %v1115 = vsel %vm156, %v992, 0.0
    %v1116 = vsel %vm156, %v993, 0.0
    %v1117 = vadd.f32 %v1115, %v1116
    %v1118 = vrot.slane %v1117, 4
    %v1119 = vadd.f32 %v1117, %v1118
    %v1120 = vrot.slane %v1119, 2
    %v1121 = vadd.f32 %v1119, %v1120
    %v1122 = vrot.slane %v1121, 1
    %v1123 = vadd.f32 %v1121, %v1122
    %v1124 = vsel %vm156, %v994, 0.0
    %v1125 = vsel %vm156, %v995, 0.0
    %v1126 = vadd.f32 %v1124, %v1125
    %v1127 = vrot.slane %v1126, 4
    %v1128 = vadd.f32 %v1126, %v1127
    %v1129 = vrot.slane %v1128, 2
    %v1130 = vadd.f32 %v1128, %v1129
    %v1131 = vrot.slane %v1130, 1
    %v1132 = vadd.f32 %v1130, %v1131
    %v1133 = vsel %vm156, %v996, 0.0
    %v1134 = vsel %vm156, %v997, 0.0
    %v1135 = vadd.f32 %v1133, %v1134
    %v1136 = vrot.slane %v1135, 4
    %v1137 = vadd.f32 %v1135, %v1136
    %v1138 = vrot.slane %v1137, 2
    %v1139 = vadd.f32 %v1137, %v1138
    %v1140 = vrot.slane %v1139, 1
    %v1141 = vadd.f32 %v1139, %v1140
    %v1142 = vrot.slane %v332, 1
    %v1143 = vrot.slane %v332, 2
    %v1144 = vrot.slane %v332, 3
    %v1145 = vrot.slane %v332, 4
    %v1146 = vrot.slane %v332, 5
    %v1147 = vrot.slane %v332, 6
    %v1148 = vrot.slane %v332, 7
    %v1149 = vrot.slane %v338, 1
    %v1150 = vrot.slane %v338, 2
    %v1151 = vrot.slane %v338, 3
    %v1152 = vrot.slane %v338, 4
    %v1153 = vrot.slane %v338, 5
    %v1154 = vrot.slane %v338, 6
    %v1155 = vrot.slane %v338, 7
    %1156 = vrot.lane.b32.xlu0 %v332, 32
    %v1157 = vpop.permute.xlu0 %1156
    %1158 = vrot.lane.b32.xlu0 %v1142, 32
    %v1159 = vpop.permute.xlu0 %1158
    %1160 = vrot.lane.b32.xlu0 %v1143, 32
    %v1161 = vpop.permute.xlu0 %1160
    %1162 = vrot.lane.b32.xlu0 %v1144, 32
    %v1163 = vpop.permute.xlu0 %1162
    %1164 = vrot.lane.b32.xlu0 %v1145, 32
    %v1165 = vpop.permute.xlu0 %1164
    %1166 = vrot.lane.b32.xlu0 %v1146, 32
    %v1167 = vpop.permute.xlu0 %1166
    %1168 = vrot.lane.b32.xlu0 %v1147, 32
    %v1169 = vpop.permute.xlu0 %1168
    %1170 = vrot.lane.b32.xlu0 %v1148, 32
    %v1171 = vpop.permute.xlu0 %1170
    %1172 = vrot.lane.b32.xlu0 %v338, 32
    %v1173 = vpop.permute.xlu0 %1172
    %1174 = vrot.lane.b32.xlu0 %v1149, 32
    %v1175 = vpop.permute.xlu0 %1174
    %1176 = vrot.lane.b32.xlu0 %v1150, 32
    %v1177 = vpop.permute.xlu0 %1176
    %1178 = vrot.lane.b32.xlu0 %v1151, 32
    %v1179 = vpop.permute.xlu0 %1178
    %1180 = vrot.lane.b32.xlu0 %v1152, 32
    %v1181 = vpop.permute.xlu0 %1180
    %1182 = vrot.lane.b32.xlu0 %v1153, 32
    %v1183 = vpop.permute.xlu0 %1182
    %1184 = vrot.lane.b32.xlu0 %v1154, 32
    %v1185 = vpop.permute.xlu0 %1184
    %1186 = vrot.lane.b32.xlu0 %v1155, 32
    %v1187 = vpop.permute.xlu0 %1186
    %v1204 = vadd.f32 %v1006, %v1157
    %v1205 = vadd.f32 %v1015, %v1159
    %v1206 = vadd.f32 %v1024, %v1161
    %v1207 = vadd.f32 %v1033, %v1163
    %v1208 = vadd.f32 %v1042, %v1165
    %v1209 = vadd.f32 %v1051, %v1167
    %v1210 = vadd.f32 %v1060, %v1169
    %v1211 = vadd.f32 %v1069, %v1171
    %v1212 = vadd.f32 %v1078, %v1173
    %v1213 = vadd.f32 %v1087, %v1175
    %v1214 = vadd.f32 %v1096, %v1177
    %v1215 = vadd.f32 %v1105, %v1179
    %v1216 = vadd.f32 %v1114, %v1181
    %v1217 = vadd.f32 %v1123, %v1183
    %v1218 = vadd.f32 %v1132, %v1185
    %v1219 = vadd.f32 %v1141, %v1187
    %v1222 = vcombine.high %v334, %v334
    %v1224 = vunpack.c.l.s4 1966171168
    %v1225 = vunpack.c.0.s8 %v1224
    %v1226 = vlaneseq
    %v1227 = vshrl.u32 %v1226, 7
    %v1228 = vsub.s32 %v1225, %v1227
    %v1229 = vrot.slane %v334, %v1228
    %v1231 = vunpack.c.l.s4 1966171168
    %v1232 = vunpack.c.0.s8 %v1231
    %v1233 = vlaneseq
    %v1234 = vshrl.u32 %v1233, 7
    %v1235 = vsub.s32 %v1232, %v1234
    %v1236 = vrot.slane %v1222, %v1235
    %v1237 = vcombine.high %v1229, %v1229
    %v1238 = vcombine.high %v1236, %v1236
    %v1240 = vunpack.c.l.s4 1966171168
    %v1241 = vunpack.c.0.s8 %v1240
    %v1242 = vlaneseq
    %v1243 = vshrl.u32 %v1242, 7
    %v1244 = vsub.s32 %v1241, %v1243
    %v1245 = vrot.slane %v1229, %v1244
    %v1247 = vunpack.c.l.s4 1966171168
    %v1248 = vunpack.c.0.s8 %v1247
    %v1249 = vlaneseq
    %v1250 = vshrl.u32 %v1249, 7
    %v1251 = vsub.s32 %v1248, %v1250
    %v1252 = vrot.slane %v1236, %v1251
    %v1254 = vunpack.c.l.s4 1966171168
    %v1255 = vunpack.c.0.s8 %v1254
    %v1256 = vlaneseq
    %v1257 = vshrl.u32 %v1256, 7
    %v1258 = vsub.s32 %v1255, %v1257
    %v1259 = vrot.slane %v1237, %v1258
    %v1261 = vunpack.c.l.s4 1966171168
    %v1262 = vunpack.c.0.s8 %v1261
    %v1263 = vlaneseq
    %v1264 = vshrl.u32 %v1263, 7
    %v1265 = vsub.s32 %v1262, %v1264
    %v1266 = vrot.slane %v1238, %v1265
    %v1267 = vcombine.high %v1245, %v1245
    %v1268 = vcombine.high %v1252, %v1252
    %v1269 = vcombine.high %v1259, %v1259
    %v1270 = vcombine.high %v1266, %v1266
    %v1271 = vcombine.high %v340, %v340
    %v1273 = vunpack.c.l.s4 1966171168
    %v1274 = vunpack.c.0.s8 %v1273
    %v1275 = vlaneseq
    %v1276 = vshrl.u32 %v1275, 7
    %v1277 = vsub.s32 %v1274, %v1276
    %v1278 = vrot.slane %v340, %v1277
    %v1280 = vunpack.c.l.s4 1966171168
    %v1281 = vunpack.c.0.s8 %v1280
    %v1282 = vlaneseq
    %v1283 = vshrl.u32 %v1282, 7
    %v1284 = vsub.s32 %v1281, %v1283
    %v1285 = vrot.slane %v1271, %v1284
    %v1286 = vcombine.high %v1278, %v1278
    %v1287 = vcombine.high %v1285, %v1285
    %v1289 = vunpack.c.l.s4 1966171168
    %v1290 = vunpack.c.0.s8 %v1289
    %v1291 = vlaneseq
    %v1292 = vshrl.u32 %v1291, 7
    %v1293 = vsub.s32 %v1290, %v1292
    %v1294 = vrot.slane %v1278, %v1293
    %v1296 = vunpack.c.l.s4 1966171168
    %v1297 = vunpack.c.0.s8 %v1296
    %v1298 = vlaneseq
    %v1299 = vshrl.u32 %v1298, 7
    %v1300 = vsub.s32 %v1297, %v1299
    %v1301 = vrot.slane %v1285, %v1300
    %v1303 = vunpack.c.l.s4 1966171168
    %v1304 = vunpack.c.0.s8 %v1303
    %v1305 = vlaneseq
    %v1306 = vshrl.u32 %v1305, 7
    %v1307 = vsub.s32 %v1304, %v1306
    %v1308 = vrot.slane %v1286, %v1307
    %v1310 = vunpack.c.l.s4 1966171168
    %v1311 = vunpack.c.0.s8 %v1310
    %v1312 = vlaneseq
    %v1313 = vshrl.u32 %v1312, 7
    %v1314 = vsub.s32 %v1311, %v1313
    %v1315 = vrot.slane %v1287, %v1314
    %v1316 = vcombine.high %v1294, %v1294
    %v1317 = vcombine.high %v1301, %v1301
    %v1318 = vcombine.high %v1308, %v1308
    %v1319 = vcombine.high %v1315, %v1315
    %v1320 = vlaneseq
    %v1321 = vshrl.u32 %v1320, 7
    %v1322 = vsub.s32 0, %v1321
    %v1323 = vrot.slane %v1245, %v1322
    %v1324 = vlaneseq
    %v1325 = vshrl.u32 %v1324, 7
    %v1326 = vsub.s32 0, %v1325
    %v1327 = vrot.slane %v1259, %v1326
    %v1328 = vlaneseq
    %v1329 = vshrl.u32 %v1328, 7
    %v1330 = vsub.s32 0, %v1329
    %v1331 = vrot.slane %v1267, %v1330
    %v1332 = vlaneseq
    %v1333 = vshrl.u32 %v1332, 7
    %v1334 = vsub.s32 0, %v1333
    %v1335 = vrot.slane %v1269, %v1334
    %v1336 = vlaneseq
    %v1337 = vshrl.u32 %v1336, 7
    %v1338 = vsub.s32 0, %v1337
    %v1339 = vrot.slane %v1252, %v1338
    %v1340 = vlaneseq
    %v1341 = vshrl.u32 %v1340, 7
    %v1342 = vsub.s32 0, %v1341
    %v1343 = vrot.slane %v1266, %v1342
    %v1344 = vlaneseq
    %v1345 = vshrl.u32 %v1344, 7
    %v1346 = vsub.s32 0, %v1345
    %v1347 = vrot.slane %v1268, %v1346
    %v1348 = vlaneseq
    %v1349 = vshrl.u32 %v1348, 7
    %v1350 = vsub.s32 0, %v1349
    %v1351 = vrot.slane %v1270, %v1350
    %v1352 = vlaneseq
    %v1353 = vshrl.u32 %v1352, 7
    %v1354 = vsub.s32 0, %v1353
    %v1355 = vrot.slane %v1294, %v1354
    %v1356 = vlaneseq
    %v1357 = vshrl.u32 %v1356, 7
    %v1358 = vsub.s32 0, %v1357
    %v1359 = vrot.slane %v1308, %v1358
    %v1360 = vlaneseq
    %v1361 = vshrl.u32 %v1360, 7
    %v1362 = vsub.s32 0, %v1361
    %v1363 = vrot.slane %v1316, %v1362
    %v1364 = vlaneseq
    %v1365 = vshrl.u32 %v1364, 7
    %v1366 = vsub.s32 0, %v1365
    %v1367 = vrot.slane %v1318, %v1366
    %v1368 = vlaneseq
    %v1369 = vshrl.u32 %v1368, 7
    %v1370 = vsub.s32 0, %v1369
    %v1371 = vrot.slane %v1301, %v1370
    %v1372 = vlaneseq
    %v1373 = vshrl.u32 %v1372, 7
    %v1374 = vsub.s32 0, %v1373
    %v1375 = vrot.slane %v1315, %v1374
    %v1376 = vlaneseq
    %v1377 = vshrl.u32 %v1376, 7
    %v1378 = vsub.s32 0, %v1377
    %v1379 = vrot.slane %v1317, %v1378
    %v1380 = vlaneseq
    %v1381 = vshrl.u32 %v1380, 7
    %v1382 = vsub.s32 0, %v1381
    %v1383 = vrot.slane %v1319, %v1382
    %1400 = vrot.lane.b32.xlu0 %v334, 96
    %v1401 = vpop.permute.xlu0 %1400
    %1402 = vrot.lane.b32.xlu0 %v340, 96
    %v1403 = vpop.permute.xlu0 %1402
    %v1406 = vadd.f32 %v1323, %v1401
    %v1407 = vadd.f32 %v1323, %v1403
    %v1408 = vadd.f32 %v1327, %v1401
    %v1409 = vadd.f32 %v1327, %v1403
    %v1410 = vadd.f32 %v1331, %v1401
    %v1411 = vadd.f32 %v1331, %v1403
    %v1412 = vadd.f32 %v1335, %v1401
    %v1413 = vadd.f32 %v1335, %v1403
    %v1414 = vadd.f32 %v1339, %v1401
    %v1415 = vadd.f32 %v1339, %v1403
    %v1416 = vadd.f32 %v1343, %v1401
    %v1417 = vadd.f32 %v1343, %v1403
    %v1418 = vadd.f32 %v1347, %v1401
    %v1419 = vadd.f32 %v1347, %v1403
    %v1420 = vadd.f32 %v1351, %v1401
    %v1421 = vadd.f32 %v1351, %v1403
    %v1422 = vadd.f32 %v1355, %v1401
    %v1423 = vadd.f32 %v1355, %v1403
    %v1424 = vadd.f32 %v1359, %v1401
    %v1425 = vadd.f32 %v1359, %v1403
    %v1426 = vadd.f32 %v1363, %v1401
    %v1427 = vadd.f32 %v1363, %v1403
    %v1428 = vadd.f32 %v1367, %v1401
    %v1429 = vadd.f32 %v1367, %v1403
    %v1430 = vadd.f32 %v1371, %v1401
    %v1431 = vadd.f32 %v1371, %v1403
    %v1432 = vadd.f32 %v1375, %v1401
    %v1433 = vadd.f32 %v1375, %v1403
    %v1434 = vadd.f32 %v1379, %v1401
    %v1435 = vadd.f32 %v1379, %v1403
    %v1436 = vadd.f32 %v1383, %v1401
    %v1437 = vadd.f32 %v1383, %v1403
    %v1438 = vxor.u32 %v1406, 2147483648
    %v1439 = vxor.u32 %v1407, 2147483648
    %v1440 = vxor.u32 %v1408, 2147483648
    %v1441 = vxor.u32 %v1409, 2147483648
    %v1442 = vxor.u32 %v1410, 2147483648
    %v1443 = vxor.u32 %v1411, 2147483648
    %v1444 = vxor.u32 %v1412, 2147483648
    %v1445 = vxor.u32 %v1413, 2147483648
    %v1446 = vxor.u32 %v1414, 2147483648
    %v1447 = vxor.u32 %v1415, 2147483648
    %v1448 = vxor.u32 %v1416, 2147483648
    %v1449 = vxor.u32 %v1417, 2147483648
    %v1450 = vxor.u32 %v1418, 2147483648
    %v1451 = vxor.u32 %v1419, 2147483648
    %v1452 = vxor.u32 %v1420, 2147483648
    %v1453 = vxor.u32 %v1421, 2147483648
    %v1454 = vxor.u32 %v1422, 2147483648
    %v1455 = vxor.u32 %v1423, 2147483648
    %v1456 = vxor.u32 %v1424, 2147483648
    %v1457 = vxor.u32 %v1425, 2147483648
    %v1458 = vxor.u32 %v1426, 2147483648
    %v1459 = vxor.u32 %v1427, 2147483648
    %v1460 = vxor.u32 %v1428, 2147483648
    %v1461 = vxor.u32 %v1429, 2147483648
    %v1462 = vxor.u32 %v1430, 2147483648
    %v1463 = vxor.u32 %v1431, 2147483648
    %v1464 = vxor.u32 %v1432, 2147483648
    %v1465 = vxor.u32 %v1433, 2147483648
    %v1466 = vxor.u32 %v1434, 2147483648
    %v1467 = vxor.u32 %v1435, 2147483648
    %v1468 = vxor.u32 %v1436, 2147483648
    %v1469 = vxor.u32 %v1437, 2147483648
    %v1470 = vmul.f32 %v1438, 1.442695
    %v1471 = vpow.pop %v1470
    %v1472 = vmul.f32 %v1439, 1.442695
    %v1473 = vpow.pop %v1472
    %v1474 = vmul.f32 %v1440, 1.442695
    %v1475 = vpow.pop %v1474
    %v1476 = vmul.f32 %v1441, 1.442695
    %v1477 = vpow.pop %v1476
    %v1478 = vmul.f32 %v1442, 1.442695
    %v1479 = vpow.pop %v1478
    %v1480 = vmul.f32 %v1443, 1.442695
    %v1481 = vpow.pop %v1480
    %v1482 = vmul.f32 %v1444, 1.442695
    %v1483 = vpow.pop %v1482
    %v1484 = vmul.f32 %v1445, 1.442695
    %v1485 = vpow.pop %v1484
    %v1486 = vmul.f32 %v1446, 1.442695
    %v1487 = vpow.pop %v1486
    %v1488 = vmul.f32 %v1447, 1.442695
    %v1489 = vpow.pop %v1488
    %v1490 = vmul.f32 %v1448, 1.442695
    %v1491 = vpow.pop %v1490
    %v1492 = vmul.f32 %v1449, 1.442695
    %v1493 = vpow.pop %v1492
    %v1494 = vmul.f32 %v1450, 1.442695
    %v1495 = vpow.pop %v1494
    %v1496 = vmul.f32 %v1451, 1.442695
    %v1497 = vpow.pop %v1496
    %v1498 = vmul.f32 %v1452, 1.442695
    %v1499 = vpow.pop %v1498
    %v1500 = vmul.f32 %v1453, 1.442695
    %v1501 = vpow.pop %v1500
    %v1502 = vmul.f32 %v1454, 1.442695
    %v1503 = vpow.pop %v1502
    %v1504 = vmul.f32 %v1455, 1.442695
    %v1505 = vpow.pop %v1504
    %v1506 = vmul.f32 %v1456, 1.442695
    %v1507 = vpow.pop %v1506
    %v1508 = vmul.f32 %v1457, 1.442695
    %v1509 = vpow.pop %v1508
    %v1510 = vmul.f32 %v1458, 1.442695
    %v1511 = vpow.pop %v1510
    %v1512 = vmul.f32 %v1459, 1.442695
    %v1513 = vpow.pop %v1512
    %v1514 = vmul.f32 %v1460, 1.442695
    %v1515 = vpow.pop %v1514
    %v1516 = vmul.f32 %v1461, 1.442695
    %v1517 = vpow.pop %v1516
    %v1518 = vmul.f32 %v1462, 1.442695
    %v1519 = vpow.pop %v1518
    %v1520 = vmul.f32 %v1463, 1.442695
    %v1521 = vpow.pop %v1520
    %v1522 = vmul.f32 %v1464, 1.442695
    %v1523 = vpow.pop %v1522
    %v1524 = vmul.f32 %v1465, 1.442695
    %v1525 = vpow.pop %v1524
    %v1526 = vmul.f32 %v1466, 1.442695
    %v1527 = vpow.pop %v1526
    %v1528 = vmul.f32 %v1467, 1.442695
    %v1529 = vpow.pop %v1528
    %v1530 = vmul.f32 %v1468, 1.442695
    %v1531 = vpow.pop %v1530
    %v1532 = vmul.f32 %v1469, 1.442695
    %v1533 = vpow.pop %v1532
    %v1534 = vadd.f32 %v1471, 1.0
    %v1535 = vadd.f32 %v1473, 1.0
    %v1536 = vadd.f32 %v1475, 1.0
    %v1537 = vadd.f32 %v1477, 1.0
    %v1538 = vadd.f32 %v1479, 1.0
    %v1539 = vadd.f32 %v1481, 1.0
    %v1540 = vadd.f32 %v1483, 1.0
    %v1541 = vadd.f32 %v1485, 1.0
    %v1542 = vadd.f32 %v1487, 1.0
    %v1543 = vadd.f32 %v1489, 1.0
    %v1544 = vadd.f32 %v1491, 1.0
    %v1545 = vadd.f32 %v1493, 1.0
    %v1546 = vadd.f32 %v1495, 1.0
    %v1547 = vadd.f32 %v1497, 1.0
    %v1548 = vadd.f32 %v1499, 1.0
    %v1549 = vadd.f32 %v1501, 1.0
    %v1550 = vadd.f32 %v1503, 1.0
    %v1551 = vadd.f32 %v1505, 1.0
    %v1552 = vadd.f32 %v1507, 1.0
    %v1553 = vadd.f32 %v1509, 1.0
    %v1554 = vadd.f32 %v1511, 1.0
    %v1555 = vadd.f32 %v1513, 1.0
    %v1556 = vadd.f32 %v1515, 1.0
    %v1557 = vadd.f32 %v1517, 1.0
    %v1558 = vadd.f32 %v1519, 1.0
    %v1559 = vadd.f32 %v1521, 1.0
    %v1560 = vadd.f32 %v1523, 1.0
    %v1561 = vadd.f32 %v1525, 1.0
    %v1562 = vadd.f32 %v1527, 1.0
    %v1563 = vadd.f32 %v1529, 1.0
    %v1564 = vadd.f32 %v1531, 1.0
    %v1565 = vadd.f32 %v1533, 1.0
    %v1566 = vrcp.pop %v1534
    %v1567 = vmul.f32 1.0, %v1566
    %v1568 = vrcp.pop %v1535
    %v1569 = vmul.f32 1.0, %v1568
    %v1570 = vrcp.pop %v1536
    %v1571 = vmul.f32 1.0, %v1570
    %v1572 = vrcp.pop %v1537
    %v1573 = vmul.f32 1.0, %v1572
    %v1574 = vrcp.pop %v1538
    %v1575 = vmul.f32 1.0, %v1574
    %v1576 = vrcp.pop %v1539
    %v1577 = vmul.f32 1.0, %v1576
    %v1578 = vrcp.pop %v1540
    %v1579 = vmul.f32 1.0, %v1578
    %v1580 = vrcp.pop %v1541
    %v1581 = vmul.f32 1.0, %v1580
    %v1582 = vrcp.pop %v1542
    %v1583 = vmul.f32 1.0, %v1582
    %v1584 = vrcp.pop %v1543
    %v1585 = vmul.f32 1.0, %v1584
    %v1586 = vrcp.pop %v1544
    %v1587 = vmul.f32 1.0, %v1586
    %v1588 = vrcp.pop %v1545
    %v1589 = vmul.f32 1.0, %v1588
    %v1590 = vrcp.pop %v1546
    %v1591 = vmul.f32 1.0, %v1590
    %v1592 = vrcp.pop %v1547
    %v1593 = vmul.f32 1.0, %v1592
    %v1594 = vrcp.pop %v1548
    %v1595 = vmul.f32 1.0, %v1594
    %v1596 = vrcp.pop %v1549
    %v1597 = vmul.f32 1.0, %v1596
    %v1598 = vrcp.pop %v1550
    %v1599 = vmul.f32 1.0, %v1598
    %v1600 = vrcp.pop %v1551
    %v1601 = vmul.f32 1.0, %v1600
    %v1602 = vrcp.pop %v1552
    %v1603 = vmul.f32 1.0, %v1602
    %v1604 = vrcp.pop %v1553
    %v1605 = vmul.f32 1.0, %v1604
    %v1606 = vrcp.pop %v1554
    %v1607 = vmul.f32 1.0, %v1606
    %v1608 = vrcp.pop %v1555
    %v1609 = vmul.f32 1.0, %v1608
    %v1610 = vrcp.pop %v1556
    %v1611 = vmul.f32 1.0, %v1610
    %v1612 = vrcp.pop %v1557
    %v1613 = vmul.f32 1.0, %v1612
    %v1614 = vrcp.pop %v1558
    %v1615 = vmul.f32 1.0, %v1614
    %v1616 = vrcp.pop %v1559
    %v1617 = vmul.f32 1.0, %v1616
    %v1618 = vrcp.pop %v1560
    %v1619 = vmul.f32 1.0, %v1618
    %v1620 = vrcp.pop %v1561
    %v1621 = vmul.f32 1.0, %v1620
    %v1622 = vrcp.pop %v1562
    %v1623 = vmul.f32 1.0, %v1622
    %v1624 = vrcp.pop %v1563
    %v1625 = vmul.f32 1.0, %v1624
    %v1626 = vrcp.pop %v1564
    %v1627 = vmul.f32 1.0, %v1626
    %v1628 = vrcp.pop %v1565
    %v1629 = vmul.f32 1.0, %v1628
    %v1630 = vlaneseq
    %v1631 = vshrl.u32 %v1630, 7
    %v1632 = vsub.s32 0, %v1631
    %v1633 = vrot.slane %v49, %v1632
    %1635 = vbcast.lane.b32.xlu0 %v1633, 256
    %v1636 = vpop.permute.xlu0 %1635
    %s1638 = sor.u32 256, 8
    %1639 = vbcast.lane.b32.xlu0 %v1633, %s1638
    %v1640 = vpop.permute.xlu0 %1639
    %v1641 = vlaneseq
    %v1642 = vshrl.u32 %v1641, 7
    %v1643 = vsub.s32 1, %v1642
    %v1644 = vrot.slane %v49, %v1643
    %1646 = vbcast.lane.b32.xlu0 %v1644, 256
    %v1647 = vpop.permute.xlu0 %1646
    %s1649 = sor.u32 256, 8
    %1650 = vbcast.lane.b32.xlu0 %v1644, %s1649
    %v1651 = vpop.permute.xlu0 %1650
    %v1652 = vlaneseq
    %v1653 = vshrl.u32 %v1652, 7
    %v1654 = vsub.s32 2, %v1653
    %v1655 = vrot.slane %v49, %v1654
    %1657 = vbcast.lane.b32.xlu0 %v1655, 256
    %v1658 = vpop.permute.xlu0 %1657
    %s1660 = sor.u32 256, 8
    %1661 = vbcast.lane.b32.xlu0 %v1655, %s1660
    %v1662 = vpop.permute.xlu0 %1661
    %v1663 = vlaneseq
    %v1664 = vshrl.u32 %v1663, 7
    %v1665 = vsub.s32 3, %v1664
    %v1666 = vrot.slane %v49, %v1665
    %1668 = vbcast.lane.b32.xlu0 %v1666, 256
    %v1669 = vpop.permute.xlu0 %1668
    %s1671 = sor.u32 256, 8
    %1672 = vbcast.lane.b32.xlu0 %v1666, %s1671
    %v1673 = vpop.permute.xlu0 %1672
    %v1674 = vlaneseq
    %v1675 = vshrl.u32 %v1674, 7
    %v1676 = vsub.s32 4, %v1675
    %v1677 = vrot.slane %v49, %v1676
    %1679 = vbcast.lane.b32.xlu0 %v1677, 256
    %v1680 = vpop.permute.xlu0 %1679
    %s1682 = sor.u32 256, 8
    %1683 = vbcast.lane.b32.xlu0 %v1677, %s1682
    %v1684 = vpop.permute.xlu0 %1683
    %v1685 = vlaneseq
    %v1686 = vshrl.u32 %v1685, 7
    %v1687 = vsub.s32 5, %v1686
    %v1688 = vrot.slane %v49, %v1687
    %1690 = vbcast.lane.b32.xlu0 %v1688, 256
    %v1691 = vpop.permute.xlu0 %1690
    %s1693 = sor.u32 256, 8
    %1694 = vbcast.lane.b32.xlu0 %v1688, %s1693
    %v1695 = vpop.permute.xlu0 %1694
    %v1696 = vlaneseq
    %v1697 = vshrl.u32 %v1696, 7
    %v1698 = vsub.s32 6, %v1697
    %v1699 = vrot.slane %v49, %v1698
    %1701 = vbcast.lane.b32.xlu0 %v1699, 256
    %v1702 = vpop.permute.xlu0 %1701
    %s1704 = sor.u32 256, 8
    %1705 = vbcast.lane.b32.xlu0 %v1699, %s1704
    %v1706 = vpop.permute.xlu0 %1705
    %v1707 = vlaneseq
    %v1708 = vshrl.u32 %v1707, 7
    %v1709 = vsub.s32 7, %v1708
    %v1710 = vrot.slane %v49, %v1709
    %1712 = vbcast.lane.b32.xlu0 %v1710, 256
    %v1713 = vpop.permute.xlu0 %1712
    %s1715 = sor.u32 256, 8
    %1716 = vbcast.lane.b32.xlu0 %v1710, %s1715
    %v1717 = vpop.permute.xlu0 %1716
    %v1718 = vlaneseq
    %v1719 = vshrl.u32 %v1718, 7
    %v1720 = vsub.s32 0, %v1719
    %v1721 = vrot.slane %v50, %v1720
    %1723 = vbcast.lane.b32.xlu0 %v1721, 256
    %v1724 = vpop.permute.xlu0 %1723
    %s1726 = sor.u32 256, 8
    %1727 = vbcast.lane.b32.xlu0 %v1721, %s1726
    %v1728 = vpop.permute.xlu0 %1727
    %v1729 = vlaneseq
    %v1730 = vshrl.u32 %v1729, 7
    %v1731 = vsub.s32 1, %v1730
    %v1732 = vrot.slane %v50, %v1731
    %1734 = vbcast.lane.b32.xlu0 %v1732, 256
    %v1735 = vpop.permute.xlu0 %1734
    %s1737 = sor.u32 256, 8
    %1738 = vbcast.lane.b32.xlu0 %v1732, %s1737
    %v1739 = vpop.permute.xlu0 %1738
    %v1740 = vlaneseq
    %v1741 = vshrl.u32 %v1740, 7
    %v1742 = vsub.s32 2, %v1741
    %v1743 = vrot.slane %v50, %v1742
    %1745 = vbcast.lane.b32.xlu0 %v1743, 256
    %v1746 = vpop.permute.xlu0 %1745
    %s1748 = sor.u32 256, 8
    %1749 = vbcast.lane.b32.xlu0 %v1743, %s1748
    %v1750 = vpop.permute.xlu0 %1749
    %v1751 = vlaneseq
    %v1752 = vshrl.u32 %v1751, 7
    %v1753 = vsub.s32 3, %v1752
    %v1754 = vrot.slane %v50, %v1753
    %1756 = vbcast.lane.b32.xlu0 %v1754, 256
    %v1757 = vpop.permute.xlu0 %1756
    %s1759 = sor.u32 256, 8
    %1760 = vbcast.lane.b32.xlu0 %v1754, %s1759
    %v1761 = vpop.permute.xlu0 %1760
    %v1762 = vlaneseq
    %v1763 = vshrl.u32 %v1762, 7
    %v1764 = vsub.s32 4, %v1763
    %v1765 = vrot.slane %v50, %v1764
    %1767 = vbcast.lane.b32.xlu0 %v1765, 256
    %v1768 = vpop.permute.xlu0 %1767
    %s1770 = sor.u32 256, 8
    %1771 = vbcast.lane.b32.xlu0 %v1765, %s1770
    %v1772 = vpop.permute.xlu0 %1771
    %v1773 = vlaneseq
    %v1774 = vshrl.u32 %v1773, 7
    %v1775 = vsub.s32 5, %v1774
    %v1776 = vrot.slane %v50, %v1775
    %1778 = vbcast.lane.b32.xlu0 %v1776, 256
    %v1779 = vpop.permute.xlu0 %1778
    %s1781 = sor.u32 256, 8
    %1782 = vbcast.lane.b32.xlu0 %v1776, %s1781
    %v1783 = vpop.permute.xlu0 %1782
    %v1784 = vlaneseq
    %v1785 = vshrl.u32 %v1784, 7
    %v1786 = vsub.s32 6, %v1785
    %v1787 = vrot.slane %v50, %v1786
    %1789 = vbcast.lane.b32.xlu0 %v1787, 256
    %v1790 = vpop.permute.xlu0 %1789
    %s1792 = sor.u32 256, 8
    %1793 = vbcast.lane.b32.xlu0 %v1787, %s1792
    %v1794 = vpop.permute.xlu0 %1793
    %v1795 = vlaneseq
    %v1796 = vshrl.u32 %v1795, 7
    %v1797 = vsub.s32 7, %v1796
    %v1798 = vrot.slane %v50, %v1797
    %1800 = vbcast.lane.b32.xlu0 %v1798, 256
    %v1801 = vpop.permute.xlu0 %1800
    %s1803 = sor.u32 256, 8
    %1804 = vbcast.lane.b32.xlu0 %v1798, %s1803
    %v1805 = vpop.permute.xlu0 %1804
    %v1806 = vmul.f32 %v1567, %v1636
    %v1807 = vmul.f32 %v1569, %v1640
    %v1808 = vmul.f32 %v1571, %v1647
    %v1809 = vmul.f32 %v1573, %v1651
    %v1810 = vmul.f32 %v1575, %v1658
    %v1811 = vmul.f32 %v1577, %v1662
    %v1812 = vmul.f32 %v1579, %v1669
    %v1813 = vmul.f32 %v1581, %v1673
    %v1814 = vmul.f32 %v1583, %v1680
    %v1815 = vmul.f32 %v1585, %v1684
    %v1816 = vmul.f32 %v1587, %v1691
    %v1817 = vmul.f32 %v1589, %v1695
    %v1818 = vmul.f32 %v1591, %v1702
    %v1819 = vmul.f32 %v1593, %v1706
    %v1820 = vmul.f32 %v1595, %v1713
    %v1821 = vmul.f32 %v1597, %v1717
    %v1822 = vmul.f32 %v1599, %v1724
    %v1823 = vmul.f32 %v1601, %v1728
    %v1824 = vmul.f32 %v1603, %v1735
    %v1825 = vmul.f32 %v1605, %v1739
    %v1826 = vmul.f32 %v1607, %v1746
    %v1827 = vmul.f32 %v1609, %v1750
    %v1828 = vmul.f32 %v1611, %v1757
    %v1829 = vmul.f32 %v1613, %v1761
    %v1830 = vmul.f32 %v1615, %v1768
    %v1831 = vmul.f32 %v1617, %v1772
    %v1832 = vmul.f32 %v1619, %v1779
    %v1833 = vmul.f32 %v1621, %v1783
    %v1834 = vmul.f32 %v1623, %v1790
    %v1835 = vmul.f32 %v1625, %v1794
    %v1836 = vmul.f32 %v1627, %v1801
    %v1837 = vmul.f32 %v1629, %v1805
    %1838 = vrot.lane.b32.xlu0 %v334, 64
    %v1839 = vpop.permute.xlu0 %1838
    %1840 = vrot.lane.b32.xlu0 %v340, 64
    %v1841 = vpop.permute.xlu0 %1840
    %v1844 = vmul.f32 %v1806, %v1839
    %v1845 = vmul.f32 %v1807, %v1841
    %v1846 = vmul.f32 %v1808, %v1839
    %v1847 = vmul.f32 %v1809, %v1841
    %v1848 = vmul.f32 %v1810, %v1839
    %v1849 = vmul.f32 %v1811, %v1841
    %v1850 = vmul.f32 %v1812, %v1839
    %v1851 = vmul.f32 %v1813, %v1841
    %v1852 = vmul.f32 %v1814, %v1839
    %v1853 = vmul.f32 %v1815, %v1841
    %v1854 = vmul.f32 %v1816, %v1839
    %v1855 = vmul.f32 %v1817, %v1841
    %v1856 = vmul.f32 %v1818, %v1839
    %v1857 = vmul.f32 %v1819, %v1841
    %v1858 = vmul.f32 %v1820, %v1839
    %v1859 = vmul.f32 %v1821, %v1841
    %v1860 = vmul.f32 %v1822, %v1839
    %v1861 = vmul.f32 %v1823, %v1841
    %v1862 = vmul.f32 %v1824, %v1839
    %v1863 = vmul.f32 %v1825, %v1841
    %v1864 = vmul.f32 %v1826, %v1839
    %v1865 = vmul.f32 %v1827, %v1841
    %v1866 = vmul.f32 %v1828, %v1839
    %v1867 = vmul.f32 %v1829, %v1841
    %v1868 = vmul.f32 %v1830, %v1839
    %v1869 = vmul.f32 %v1831, %v1841
    %v1870 = vmul.f32 %v1832, %v1839
    %v1871 = vmul.f32 %v1833, %v1841
    %v1872 = vmul.f32 %v1834, %v1839
    %v1873 = vmul.f32 %v1835, %v1841
    %v1874 = vmul.f32 %v1836, %v1839
    %v1875 = vmul.f32 %v1837, %v1841
    %v1876 = vsel %vm156, %v1844, 0.0
    %v1877 = vsel %vm156, %v1845, 0.0
    %v1878 = vadd.f32 %v1876, %v1877
    %v1879 = vrot.slane %v1878, 4
    %v1880 = vadd.f32 %v1878, %v1879
    %v1881 = vrot.slane %v1880, 2
    %v1882 = vadd.f32 %v1880, %v1881
    %v1883 = vrot.slane %v1882, 1
    %v1884 = vadd.f32 %v1882, %v1883
    %v1885 = vsel %vm156, %v1846, 0.0
    %v1886 = vsel %vm156, %v1847, 0.0
    %v1887 = vadd.f32 %v1885, %v1886
    %v1888 = vrot.slane %v1887, 4
    %v1889 = vadd.f32 %v1887, %v1888
    %v1890 = vrot.slane %v1889, 2
    %v1891 = vadd.f32 %v1889, %v1890
    %v1892 = vrot.slane %v1891, 1
    %v1893 = vadd.f32 %v1891, %v1892
    %v1894 = vsel %vm156, %v1848, 0.0
    %v1895 = vsel %vm156, %v1849, 0.0
    %v1896 = vadd.f32 %v1894, %v1895
    %v1897 = vrot.slane %v1896, 4
    %v1898 = vadd.f32 %v1896, %v1897
    %v1899 = vrot.slane %v1898, 2
    %v1900 = vadd.f32 %v1898, %v1899
    %v1901 = vrot.slane %v1900, 1
    %v1902 = vadd.f32 %v1900, %v1901
    %v1903 = vsel %vm156, %v1850, 0.0
    %v1904 = vsel %vm156, %v1851, 0.0
    %v1905 = vadd.f32 %v1903, %v1904
    %v1906 = vrot.slane %v1905, 4
    %v1907 = vadd.f32 %v1905, %v1906
    %v1908 = vrot.slane %v1907, 2
    %v1909 = vadd.f32 %v1907, %v1908
    %v1910 = vrot.slane %v1909, 1
    %v1911 = vadd.f32 %v1909, %v1910
    %v1912 = vsel %vm156, %v1852, 0.0
    %v1913 = vsel %vm156, %v1853, 0.0
    %v1914 = vadd.f32 %v1912, %v1913
    %v1915 = vrot.slane %v1914, 4
    %v1916 = vadd.f32 %v1914, %v1915
    %v1917 = vrot.slane %v1916, 2
    %v1918 = vadd.f32 %v1916, %v1917
    %v1919 = vrot.slane %v1918, 1
    %v1920 = vadd.f32 %v1918, %v1919
    %v1921 = vsel %vm156, %v1854, 0.0
    %v1922 = vsel %vm156, %v1855, 0.0
    %v1923 = vadd.f32 %v1921, %v1922
    %v1924 = vrot.slane %v1923, 4
    %v1925 = vadd.f32 %v1923, %v1924
    %v1926 = vrot.slane %v1925, 2
    %v1927 = vadd.f32 %v1925, %v1926
    %v1928 = vrot.slane %v1927, 1
    %v1929 = vadd.f32 %v1927, %v1928
    %v1930 = vsel %vm156, %v1856, 0.0
    %v1931 = vsel %vm156, %v1857, 0.0
    %v1932 = vadd.f32 %v1930, %v1931
    %v1933 = vrot.slane %v1932, 4
    %v1934 = vadd.f32 %v1932, %v1933
    %v1935 = vrot.slane %v1934, 2
    %v1936 = vadd.f32 %v1934, %v1935
    %v1937 = vrot.slane %v1936, 1
    %v1938 = vadd.f32 %v1936, %v1937
    %v1939 = vsel %vm156, %v1858, 0.0
    %v1940 = vsel %vm156, %v1859, 0.0
    %v1941 = vadd.f32 %v1939, %v1940
    %v1942 = vrot.slane %v1941, 4
    %v1943 = vadd.f32 %v1941, %v1942
    %v1944 = vrot.slane %v1943, 2
    %v1945 = vadd.f32 %v1943, %v1944
    %v1946 = vrot.slane %v1945, 1
    %v1947 = vadd.f32 %v1945, %v1946
    %v1948 = vsel %vm156, %v1860, 0.0
    %v1949 = vsel %vm156, %v1861, 0.0
    %v1950 = vadd.f32 %v1948, %v1949
    %v1951 = vrot.slane %v1950, 4
    %v1952 = vadd.f32 %v1950, %v1951
    %v1953 = vrot.slane %v1952, 2
    %v1954 = vadd.f32 %v1952, %v1953
    %v1955 = vrot.slane %v1954, 1
    %v1956 = vadd.f32 %v1954, %v1955
    %v1957 = vsel %vm156, %v1862, 0.0
    %v1958 = vsel %vm156, %v1863, 0.0
    %v1959 = vadd.f32 %v1957, %v1958
    %v1960 = vrot.slane %v1959, 4
    %v1961 = vadd.f32 %v1959, %v1960
    %v1962 = vrot.slane %v1961, 2
    %v1963 = vadd.f32 %v1961, %v1962
    %v1964 = vrot.slane %v1963, 1
    %v1965 = vadd.f32 %v1963, %v1964
    %v1966 = vsel %vm156, %v1864, 0.0
    %v1967 = vsel %vm156, %v1865, 0.0
    %v1968 = vadd.f32 %v1966, %v1967
    %v1969 = vrot.slane %v1968, 4
    %v1970 = vadd.f32 %v1968, %v1969
    %v1971 = vrot.slane %v1970, 2
    %v1972 = vadd.f32 %v1970, %v1971
    %v1973 = vrot.slane %v1972, 1
    %v1974 = vadd.f32 %v1972, %v1973
    %v1975 = vsel %vm156, %v1866, 0.0
    %v1976 = vsel %vm156, %v1867, 0.0
    %v1977 = vadd.f32 %v1975, %v1976
    %v1978 = vrot.slane %v1977, 4
    %v1979 = vadd.f32 %v1977, %v1978
    %v1980 = vrot.slane %v1979, 2
    %v1981 = vadd.f32 %v1979, %v1980
    %v1982 = vrot.slane %v1981, 1
    %v1983 = vadd.f32 %v1981, %v1982
    %v1984 = vsel %vm156, %v1868, 0.0
    %v1985 = vsel %vm156, %v1869, 0.0
    %v1986 = vadd.f32 %v1984, %v1985
    %v1987 = vrot.slane %v1986, 4
    %v1988 = vadd.f32 %v1986, %v1987
    %v1989 = vrot.slane %v1988, 2
    %v1990 = vadd.f32 %v1988, %v1989
    %v1991 = vrot.slane %v1990, 1
    %v1992 = vadd.f32 %v1990, %v1991
    %v1993 = vsel %vm156, %v1870, 0.0
    %v1994 = vsel %vm156, %v1871, 0.0
    %v1995 = vadd.f32 %v1993, %v1994
    %v1996 = vrot.slane %v1995, 4
    %v1997 = vadd.f32 %v1995, %v1996
    %v1998 = vrot.slane %v1997, 2
    %v1999 = vadd.f32 %v1997, %v1998
    %v2000 = vrot.slane %v1999, 1
    %v2001 = vadd.f32 %v1999, %v2000
    %v2002 = vsel %vm156, %v1872, 0.0
    %v2003 = vsel %vm156, %v1873, 0.0
    %v2004 = vadd.f32 %v2002, %v2003
    %v2005 = vrot.slane %v2004, 4
    %v2006 = vadd.f32 %v2004, %v2005
    %v2007 = vrot.slane %v2006, 2
    %v2008 = vadd.f32 %v2006, %v2007
    %v2009 = vrot.slane %v2008, 1
    %v2010 = vadd.f32 %v2008, %v2009
    %v2011 = vsel %vm156, %v1874, 0.0
    %v2012 = vsel %vm156, %v1875, 0.0
    %v2013 = vadd.f32 %v2011, %v2012
    %v2014 = vrot.slane %v2013, 4
    %v2015 = vadd.f32 %v2013, %v2014
    %v2016 = vrot.slane %v2015, 2
    %v2017 = vadd.f32 %v2015, %v2016
    %v2018 = vrot.slane %v2017, 1
    %v2019 = vadd.f32 %v2017, %v2018
    %v2020 = vrot.slane %v334, 1
    %v2021 = vrot.slane %v334, 2
    %v2022 = vrot.slane %v334, 3
    %v2023 = vrot.slane %v334, 4
    %v2024 = vrot.slane %v334, 5
    %v2025 = vrot.slane %v334, 6
    %v2026 = vrot.slane %v334, 7
    %v2027 = vrot.slane %v340, 1
    %v2028 = vrot.slane %v340, 2
    %v2029 = vrot.slane %v340, 3
    %v2030 = vrot.slane %v340, 4
    %v2031 = vrot.slane %v340, 5
    %v2032 = vrot.slane %v340, 6
    %v2033 = vrot.slane %v340, 7
    %2034 = vrot.lane.b32.xlu0 %v334, 32
    %v2035 = vpop.permute.xlu0 %2034
    %2036 = vrot.lane.b32.xlu0 %v2020, 32
    %v2037 = vpop.permute.xlu0 %2036
    %2038 = vrot.lane.b32.xlu0 %v2021, 32
    %v2039 = vpop.permute.xlu0 %2038
    %2040 = vrot.lane.b32.xlu0 %v2022, 32
    %v2041 = vpop.permute.xlu0 %2040
    %2042 = vrot.lane.b32.xlu0 %v2023, 32
    %v2043 = vpop.permute.xlu0 %2042
    %2044 = vrot.lane.b32.xlu0 %v2024, 32
    %v2045 = vpop.permute.xlu0 %2044
    %2046 = vrot.lane.b32.xlu0 %v2025, 32
    %v2047 = vpop.permute.xlu0 %2046
    %2048 = vrot.lane.b32.xlu0 %v2026, 32
    %v2049 = vpop.permute.xlu0 %2048
    %2050 = vrot.lane.b32.xlu0 %v340, 32
    %v2051 = vpop.permute.xlu0 %2050
    %2052 = vrot.lane.b32.xlu0 %v2027, 32
    %v2053 = vpop.permute.xlu0 %2052
    %2054 = vrot.lane.b32.xlu0 %v2028, 32
    %v2055 = vpop.permute.xlu0 %2054
    %2056 = vrot.lane.b32.xlu0 %v2029, 32
    %v2057 = vpop.permute.xlu0 %2056
    %2058 = vrot.lane.b32.xlu0 %v2030, 32
    %v2059 = vpop.permute.xlu0 %2058
    %2060 = vrot.lane.b32.xlu0 %v2031, 32
    %v2061 = vpop.permute.xlu0 %2060
    %2062 = vrot.lane.b32.xlu0 %v2032, 32
    %v2063 = vpop.permute.xlu0 %2062
    %2064 = vrot.lane.b32.xlu0 %v2033, 32
    %v2065 = vpop.permute.xlu0 %2064
    %v2082 = vadd.f32 %v1884, %v2035
    %v2083 = vadd.f32 %v1893, %v2037
    %v2084 = vadd.f32 %v1902, %v2039
    %v2085 = vadd.f32 %v1911, %v2041
    %v2086 = vadd.f32 %v1920, %v2043
    %v2087 = vadd.f32 %v1929, %v2045
    %v2088 = vadd.f32 %v1938, %v2047
    %v2089 = vadd.f32 %v1947, %v2049
    %v2090 = vadd.f32 %v1956, %v2051
    %v2091 = vadd.f32 %v1965, %v2053
    %v2092 = vadd.f32 %v1974, %v2055
    %v2093 = vadd.f32 %v1983, %v2057
    %v2094 = vadd.f32 %v1992, %v2059
    %v2095 = vadd.f32 %v2001, %v2061
    %v2096 = vadd.f32 %v2010, %v2063
    %v2097 = vadd.f32 %v2019, %v2065
    %v2098 = vld [vmem:[#allocation2 + $0x90] sm:$0xff]
    %v2099 = vld [vmem:[#allocation2 + $0xa0] sm:$0xff]
    %v2100 = vld [vmem:[#allocation2 + $0xb0] sm:$0xff]
    %v2101 = vld [vmem:[#allocation2 + $0xc0] sm:$0xff]
    %v2102 = vld [vmem:[#allocation2 + $0x153] ss:$0 sm:$0xff]
    %v2119 = vrot.slane %v1205, 7
    %vm2120 = vcmask 1041409
    %v2121 = vsel %vm2120, %v2119, %v1204
    %v2122 = vrot.slane %v1206, 6
    %vm2123 = vcmask 1042434
    %v2124 = vsel %vm2123, %v2122, %v2121
    %v2125 = vrot.slane %v1207, 5
    %vm2126 = vcmask 1043459
    %v2127 = vsel %vm2126, %v2125, %v2124
    %v2128 = vrot.slane %v1208, 4
    %vm2129 = vcmask 1044484
    %v2130 = vsel %vm2129, %v2128, %v2127
    %v2131 = vrot.slane %v1209, 3
    %vm2132 = vcmask 1045509
    %v2133 = vsel %vm2132, %v2131, %v2130
    %v2134 = vrot.slane %v1210, 2
    %vm2135 = vcmask 1046534
    %v2136 = vsel %vm2135, %v2134, %v2133
    %v2137 = vrot.slane %v1211, 1
    %vm2138 = vcmask 1047559
    %v2139 = vsel %vm2138, %v2137, %v2136
    %v2140 = vrot.slane %v1213, 7
    %v2141 = vsel %vm2120, %v2140, %v1212
    %v2142 = vrot.slane %v1214, 6
    %v2143 = vsel %vm2123, %v2142, %v2141
    %v2144 = vrot.slane %v1215, 5
    %v2145 = vsel %vm2126, %v2144, %v2143
    %v2146 = vrot.slane %v1216, 4
    %v2147 = vsel %vm2129, %v2146, %v2145
    %v2148 = vrot.slane %v1217, 3
    %v2149 = vsel %vm2132, %v2148, %v2147
    %v2150 = vrot.slane %v1218, 2
    %v2151 = vsel %vm2135, %v2150, %v2149
    %v2152 = vrot.slane %v1219, 1
    %v2153 = vsel %vm2138, %v2152, %v2151
    %v2154 = vsel %vm156, %v2139, 0
    %v2156 = vsel %vm156, %v2153, 0
    %2158 = vmatprep.subr.mxu0 0.0
    %2159 = vmatpush1.msra.mxu0 0.0
    %2160 = vmatprep.subr.mxu0 0.0
    %2161 = vmatpush1.msra.mxu0 0.0
    %2162 = vmatprep.subr.mxu0 0.0
    %2163 = vmatpush1.msra.mxu0 0.0
    %2164 = vmatprep.subr.mxu0 0.0
    %2165 = vmatpush1.msra.mxu0 0.0
    %2166 = vmatprep.subr.mxu0 0.0
    %2167 = vmatpush1.msra.mxu0 0.0
    %2168 = vmatprep.subr.mxu0 0.0
    %2169 = vmatpush1.msra.mxu0 0.0
    %2170 = vmatprep.subr.mxu0 0.0
    %2171 = vmatpush1.msra.mxu0 0.0
    %2172 = vmatprep.subr.mxu0 0.0
    %2173 = vmatpush1.msra.mxu0 0.0
    %2174 = vmatprep.subr.mxu0 0.0
    %2175 = vmatpush1.msra.mxu0 0.0
    %2176 = vmatprep.subr.mxu0 0.0
    %2177 = vmatpush1.msra.mxu0 0.0
    %2178 = vmatprep.subr.mxu0 0.0
    %2179 = vmatpush1.msra.mxu0 0.0
    %2180 = vmatprep.subr.mxu0 0.0
    %2181 = vmatpush1.msra.mxu0 0.0
    %2182 = vmatprep.subr.mxu0 0.0
    %2183 = vmatpush1.msra.mxu0 %v2101
    %2184 = vmatprep.subr.mxu0 0.0
    %2185 = vmatpush1.msra.mxu0 %v2100
    %2186 = vmatprep.subr.mxu0 0.0
    %2187 = vmatpush1.msra.mxu0 %v2099
    %2188 = vmatprep.subr.mxu0 0.0
    %2189 = vmatpush1.msra.mxu0 %v2098
    %2190 = vmatprep.subr.mxu0 0.0
    %2191 = vmatpush2.msra.mxu0 0.0
    %2192 = vmatprep.subr.mxu0 0.0
    %2193 = vmatpush2.msra.mxu0 0.0
    %2194 = vmatprep.subr.mxu0 0.0
    %2195 = vmatpush2.msra.mxu0 0.0
    %2196 = vmatprep.subr.mxu0 0.0
    %2197 = vmatpush2.msra.mxu0 0.0
    %2198 = vmatprep.subr.mxu0 0.0
    %2199 = vmatpush2.msra.mxu0 0.0
    %2200 = vmatprep.subr.mxu0 0.0
    %2201 = vmatpush2.msra.mxu0 0.0
    %2202 = vmatprep.subr.mxu0 0.0
    %2203 = vmatpush2.msra.mxu0 0.0
    %2204 = vmatprep.subr.mxu0 0.0
    %2205 = vmatpush2.msra.mxu0 0.0
    %2206 = vmatprep.subr.mxu0 0.0
    %2207 = vmatpush2.msra.mxu0 0.0
    %2208 = vmatprep.subr.mxu0 0.0
    %2209 = vmatpush2.msra.mxu0 0.0
    %2210 = vmatprep.subr.mxu0 0.0
    %2211 = vmatpush2.msra.mxu0 0.0
    %2212 = vmatprep.subr.mxu0 0.0
    %2213 = vmatpush2.msra.mxu0 0.0
    %2214 = vmatprep.subr.mxu0 0.0
    %2215 = vmatpush2.msra.mxu0 0.0
    %2216 = vmatprep.subr.mxu0 0.0
    %2217 = vmatpush2.msra.mxu0 0.0
    %2218 = vmatprep.subr.mxu0 0.0
    %2219 = vmatpush2.msra.mxu0 0.0
    %2220 = vmatprep.subr.mxu0 0.0
    %2221 = vmatpush2.msra.mxu0 0.0
    %2222 = vmatprep.mubr.f32.mxu0 0.0
    %2223 = vmatmul.mubr.f32.gmra.mxu0 %v2154
    %v2224 = vpop.f32.mrf.mxu0
    %v2225 = vadd.f32 %v2102, %v2224
    %v2226 = vpop.f32.mrf.mxu0
    %2227 = vmatprep.mubr.f32.mxu0 0.0
    %2228 = vmatmul.mubr.f32.gmra.mxu0 %v2156
    %v2229 = vpop.f32.mrf.mxu0
    %v2230 = vadd.f32 %v2102, %v2229
    %v2231 = vpop.f32.mrf.mxu0
    %2232 = vdwg.mxu0
    %v2235 = vcombine.high %v2225, %v2225
    %v2237 = vunpack.c.l.s4 1966171168
    %v2238 = vunpack.c.0.s8 %v2237
    %v2239 = vlaneseq
    %v2240 = vshrl.u32 %v2239, 7
    %v2241 = vsub.s32 %v2238, %v2240
    %v2242 = vrot.slane %v2225, %v2241
    %v2244 = vunpack.c.l.s4 1966171168
    %v2245 = vunpack.c.0.s8 %v2244
    %v2246 = vlaneseq
    %v2247 = vshrl.u32 %v2246, 7
    %v2248 = vsub.s32 %v2245, %v2247
    %v2249 = vrot.slane %v2235, %v2248
    %v2250 = vcombine.high %v2242, %v2242
    %v2251 = vcombine.high %v2249, %v2249
    %v2253 = vunpack.c.l.s4 1966171168
    %v2254 = vunpack.c.0.s8 %v2253
    %v2255 = vlaneseq
    %v2256 = vshrl.u32 %v2255, 7
    %v2257 = vsub.s32 %v2254, %v2256
    %v2258 = vrot.slane %v2242, %v2257
    %v2260 = vunpack.c.l.s4 1966171168
    %v2261 = vunpack.c.0.s8 %v2260
    %v2262 = vlaneseq
    %v2263 = vshrl.u32 %v2262, 7
    %v2264 = vsub.s32 %v2261, %v2263
    %v2265 = vrot.slane %v2249, %v2264
    %v2267 = vunpack.c.l.s4 1966171168
    %v2268 = vunpack.c.0.s8 %v2267
    %v2269 = vlaneseq
    %v2270 = vshrl.u32 %v2269, 7
    %v2271 = vsub.s32 %v2268, %v2270
    %v2272 = vrot.slane %v2250, %v2271
    %v2274 = vunpack.c.l.s4 1966171168
    %v2275 = vunpack.c.0.s8 %v2274
    %v2276 = vlaneseq
    %v2277 = vshrl.u32 %v2276, 7
    %v2278 = vsub.s32 %v2275, %v2277
    %v2279 = vrot.slane %v2251, %v2278
    %v2280 = vcombine.high %v2258, %v2258
    %v2281 = vcombine.high %v2265, %v2265
    %v2282 = vcombine.high %v2272, %v2272
    %v2283 = vcombine.high %v2279, %v2279
    %v2284 = vcombine.high %v2230, %v2230
    %v2286 = vunpack.c.l.s4 1966171168
    %v2287 = vunpack.c.0.s8 %v2286
    %v2288 = vlaneseq
    %v2289 = vshrl.u32 %v2288, 7
    %v2290 = vsub.s32 %v2287, %v2289
    %v2291 = vrot.slane %v2230, %v2290
    %v2293 = vunpack.c.l.s4 1966171168
    %v2294 = vunpack.c.0.s8 %v2293
    %v2295 = vlaneseq
    %v2296 = vshrl.u32 %v2295, 7
    %v2297 = vsub.s32 %v2294, %v2296
    %v2298 = vrot.slane %v2284, %v2297
    %v2299 = vcombine.high %v2291, %v2291
    %v2300 = vcombine.high %v2298, %v2298
    %v2302 = vunpack.c.l.s4 1966171168
    %v2303 = vunpack.c.0.s8 %v2302
    %v2304 = vlaneseq
    %v2305 = vshrl.u32 %v2304, 7
    %v2306 = vsub.s32 %v2303, %v2305
    %v2307 = vrot.slane %v2291, %v2306
    %v2309 = vunpack.c.l.s4 1966171168
    %v2310 = vunpack.c.0.s8 %v2309
    %v2311 = vlaneseq
    %v2312 = vshrl.u32 %v2311, 7
    %v2313 = vsub.s32 %v2310, %v2312
    %v2314 = vrot.slane %v2298, %v2313
    %v2316 = vunpack.c.l.s4 1966171168
    %v2317 = vunpack.c.0.s8 %v2316
    %v2318 = vlaneseq
    %v2319 = vshrl.u32 %v2318, 7
    %v2320 = vsub.s32 %v2317, %v2319
    %v2321 = vrot.slane %v2299, %v2320
    %v2323 = vunpack.c.l.s4 1966171168
    %v2324 = vunpack.c.0.s8 %v2323
    %v2325 = vlaneseq
    %v2326 = vshrl.u32 %v2325, 7
    %v2327 = vsub.s32 %v2324, %v2326
    %v2328 = vrot.slane %v2300, %v2327
    %v2329 = vcombine.high %v2307, %v2307
    %v2330 = vcombine.high %v2314, %v2314
    %v2331 = vcombine.high %v2321, %v2321
    %v2332 = vcombine.high %v2328, %v2328
    %v2333 = vlaneseq
    %v2334 = vshrl.u32 %v2333, 7
    %v2335 = vsub.s32 0, %v2334
    %v2336 = vrot.slane %v2258, %v2335
    %v2337 = vlaneseq
    %v2338 = vshrl.u32 %v2337, 7
    %v2339 = vsub.s32 0, %v2338
    %v2340 = vrot.slane %v2272, %v2339
    %v2341 = vlaneseq
    %v2342 = vshrl.u32 %v2341, 7
    %v2343 = vsub.s32 0, %v2342
    %v2344 = vrot.slane %v2280, %v2343
    %v2345 = vlaneseq
    %v2346 = vshrl.u32 %v2345, 7
    %v2347 = vsub.s32 0, %v2346
    %v2348 = vrot.slane %v2282, %v2347
    %v2349 = vlaneseq
    %v2350 = vshrl.u32 %v2349, 7
    %v2351 = vsub.s32 0, %v2350
    %v2352 = vrot.slane %v2265, %v2351
    %v2353 = vlaneseq
    %v2354 = vshrl.u32 %v2353, 7
    %v2355 = vsub.s32 0, %v2354
    %v2356 = vrot.slane %v2279, %v2355
    %v2357 = vlaneseq
    %v2358 = vshrl.u32 %v2357, 7
    %v2359 = vsub.s32 0, %v2358
    %v2360 = vrot.slane %v2281, %v2359
    %v2361 = vlaneseq
    %v2362 = vshrl.u32 %v2361, 7
    %v2363 = vsub.s32 0, %v2362
    %v2364 = vrot.slane %v2283, %v2363
    %v2365 = vlaneseq
    %v2366 = vshrl.u32 %v2365, 7
    %v2367 = vsub.s32 0, %v2366
    %v2368 = vrot.slane %v2307, %v2367
    %v2369 = vlaneseq
    %v2370 = vshrl.u32 %v2369, 7
    %v2371 = vsub.s32 0, %v2370
    %v2372 = vrot.slane %v2321, %v2371
    %v2373 = vlaneseq
    %v2374 = vshrl.u32 %v2373, 7
    %v2375 = vsub.s32 0, %v2374
    %v2376 = vrot.slane %v2329, %v2375
    %v2377 = vlaneseq
    %v2378 = vshrl.u32 %v2377, 7
    %v2379 = vsub.s32 0, %v2378
    %v2380 = vrot.slane %v2331, %v2379
    %v2381 = vlaneseq
    %v2382 = vshrl.u32 %v2381, 7
    %v2383 = vsub.s32 0, %v2382
    %v2384 = vrot.slane %v2314, %v2383
    %v2385 = vlaneseq
    %v2386 = vshrl.u32 %v2385, 7
    %v2387 = vsub.s32 0, %v2386
    %v2388 = vrot.slane %v2328, %v2387
    %v2389 = vlaneseq
    %v2390 = vshrl.u32 %v2389, 7
    %v2391 = vsub.s32 0, %v2390
    %v2392 = vrot.slane %v2330, %v2391
    %v2393 = vlaneseq
    %v2394 = vshrl.u32 %v2393, 7
    %v2395 = vsub.s32 0, %v2394
    %v2396 = vrot.slane %v2332, %v2395
    %2413 = vrot.lane.b32.xlu0 %v2225, 96
    %v2414 = vpop.permute.xlu0 %2413
    %2415 = vrot.lane.b32.xlu0 %v2230, 96
    %v2416 = vpop.permute.xlu0 %2415
    %v2419 = vadd.f32 %v2336, %v2414
    %v2420 = vadd.f32 %v2336, %v2416
    %v2421 = vadd.f32 %v2340, %v2414
    %v2422 = vadd.f32 %v2340, %v2416
    %v2423 = vadd.f32 %v2344, %v2414
    %v2424 = vadd.f32 %v2344, %v2416
    %v2425 = vadd.f32 %v2348, %v2414
    %v2426 = vadd.f32 %v2348, %v2416
    %v2427 = vadd.f32 %v2352, %v2414
    %v2428 = vadd.f32 %v2352, %v2416
    %v2429 = vadd.f32 %v2356, %v2414
    %v2430 = vadd.f32 %v2356, %v2416
    %v2431 = vadd.f32 %v2360, %v2414
    %v2432 = vadd.f32 %v2360, %v2416
    %v2433 = vadd.f32 %v2364, %v2414
    %v2434 = vadd.f32 %v2364, %v2416
    %v2435 = vadd.f32 %v2368, %v2414
    %v2436 = vadd.f32 %v2368, %v2416
    %v2437 = vadd.f32 %v2372, %v2414
    %v2438 = vadd.f32 %v2372, %v2416
    %v2439 = vadd.f32 %v2376, %v2414
    %v2440 = vadd.f32 %v2376, %v2416
    %v2441 = vadd.f32 %v2380, %v2414
    %v2442 = vadd.f32 %v2380, %v2416
    %v2443 = vadd.f32 %v2384, %v2414
    %v2444 = vadd.f32 %v2384, %v2416
    %v2445 = vadd.f32 %v2388, %v2414
    %v2446 = vadd.f32 %v2388, %v2416
    %v2447 = vadd.f32 %v2392, %v2414
    %v2448 = vadd.f32 %v2392, %v2416
    %v2449 = vadd.f32 %v2396, %v2414
    %v2450 = vadd.f32 %v2396, %v2416
    %v2451 = vxor.u32 %v2419, 2147483648
    %v2452 = vxor.u32 %v2420, 2147483648
    %v2453 = vxor.u32 %v2421, 2147483648
    %v2454 = vxor.u32 %v2422, 2147483648
    %v2455 = vxor.u32 %v2423, 2147483648
    %v2456 = vxor.u32 %v2424, 2147483648
    %v2457 = vxor.u32 %v2425, 2147483648
    %v2458 = vxor.u32 %v2426, 2147483648
    %v2459 = vxor.u32 %v2427, 2147483648
    %v2460 = vxor.u32 %v2428, 2147483648
    %v2461 = vxor.u32 %v2429, 2147483648
    %v2462 = vxor.u32 %v2430, 2147483648
    %v2463 = vxor.u32 %v2431, 2147483648
    %v2464 = vxor.u32 %v2432, 2147483648
    %v2465 = vxor.u32 %v2433, 2147483648
    %v2466 = vxor.u32 %v2434, 2147483648
    %v2467 = vxor.u32 %v2435, 2147483648
    %v2468 = vxor.u32 %v2436, 2147483648
    %v2469 = vxor.u32 %v2437, 2147483648
    %v2470 = vxor.u32 %v2438, 2147483648
    %v2471 = vxor.u32 %v2439, 2147483648
    %v2472 = vxor.u32 %v2440, 2147483648
    %v2473 = vxor.u32 %v2441, 2147483648
    %v2474 = vxor.u32 %v2442, 2147483648
    %v2475 = vxor.u32 %v2443, 2147483648
    %v2476 = vxor.u32 %v2444, 2147483648
    %v2477 = vxor.u32 %v2445, 2147483648
    %v2478 = vxor.u32 %v2446, 2147483648
    %v2479 = vxor.u32 %v2447, 2147483648
    %v2480 = vxor.u32 %v2448, 2147483648
    %v2481 = vxor.u32 %v2449, 2147483648
    %v2482 = vxor.u32 %v2450, 2147483648
    %v2483 = vmul.f32 %v2451, 1.442695
    %v2484 = vpow.pop %v2483
    %v2485 = vmul.f32 %v2452, 1.442695
    %v2486 = vpow.pop %v2485
    %v2487 = vmul.f32 %v2453, 1.442695
    %v2488 = vpow.pop %v2487
    %v2489 = vmul.f32 %v2454, 1.442695
    %v2490 = vpow.pop %v2489
    %v2491 = vmul.f32 %v2455, 1.442695
    %v2492 = vpow.pop %v2491
    %v2493 = vmul.f32 %v2456, 1.442695
    %v2494 = vpow.pop %v2493
    %v2495 = vmul.f32 %v2457, 1.442695
    %v2496 = vpow.pop %v2495
    %v2497 = vmul.f32 %v2458, 1.442695
    %v2498 = vpow.pop %v2497
    %v2499 = vmul.f32 %v2459, 1.442695
    %v2500 = vpow.pop %v2499
    %v2501 = vmul.f32 %v2460, 1.442695
    %v2502 = vpow.pop %v2501
    %v2503 = vmul.f32 %v2461, 1.442695
    %v2504 = vpow.pop %v2503
    %v2505 = vmul.f32 %v2462, 1.442695
    %v2506 = vpow.pop %v2505
    %v2507 = vmul.f32 %v2463, 1.442695
    %v2508 = vpow.pop %v2507
    %v2509 = vmul.f32 %v2464, 1.442695
    %v2510 = vpow.pop %v2509
    %v2511 = vmul.f32 %v2465, 1.442695
    %v2512 = vpow.pop %v2511
    %v2513 = vmul.f32 %v2466, 1.442695
    %v2514 = vpow.pop %v2513
    %v2515 = vmul.f32 %v2467, 1.442695
    %v2516 = vpow.pop %v2515
    %v2517 = vmul.f32 %v2468, 1.442695
    %v2518 = vpow.pop %v2517
    %v2519 = vmul.f32 %v2469, 1.442695
    %v2520 = vpow.pop %v2519
    %v2521 = vmul.f32 %v2470, 1.442695
    %v2522 = vpow.pop %v2521
    %v2523 = vmul.f32 %v2471, 1.442695
    %v2524 = vpow.pop %v2523
    %v2525 = vmul.f32 %v2472, 1.442695
    %v2526 = vpow.pop %v2525
    %v2527 = vmul.f32 %v2473, 1.442695
    %v2528 = vpow.pop %v2527
    %v2529 = vmul.f32 %v2474, 1.442695
    %v2530 = vpow.pop %v2529
    %v2531 = vmul.f32 %v2475, 1.442695
    %v2532 = vpow.pop %v2531
    %v2533 = vmul.f32 %v2476, 1.442695
    %v2534 = vpow.pop %v2533
    %v2535 = vmul.f32 %v2477, 1.442695
    %v2536 = vpow.pop %v2535
    %v2537 = vmul.f32 %v2478, 1.442695
    %v2538 = vpow.pop %v2537
    %v2539 = vmul.f32 %v2479, 1.442695
    %v2540 = vpow.pop %v2539
    %v2541 = vmul.f32 %v2480, 1.442695
    %v2542 = vpow.pop %v2541
    %v2543 = vmul.f32 %v2481, 1.442695
    %v2544 = vpow.pop %v2543
    %v2545 = vmul.f32 %v2482, 1.442695
    %v2546 = vpow.pop %v2545
    %v2547 = vadd.f32 %v2484, 1.0
    %v2548 = vadd.f32 %v2486, 1.0
    %v2549 = vadd.f32 %v2488, 1.0
    %v2550 = vadd.f32 %v2490, 1.0
    %v2551 = vadd.f32 %v2492, 1.0
    %v2552 = vadd.f32 %v2494, 1.0
    %v2553 = vadd.f32 %v2496, 1.0
    %v2554 = vadd.f32 %v2498, 1.0
    %v2555 = vadd.f32 %v2500, 1.0
    %v2556 = vadd.f32 %v2502, 1.0
    %v2557 = vadd.f32 %v2504, 1.0
    %v2558 = vadd.f32 %v2506, 1.0
    %v2559 = vadd.f32 %v2508, 1.0
    %v2560 = vadd.f32 %v2510, 1.0
    %v2561 = vadd.f32 %v2512, 1.0
    %v2562 = vadd.f32 %v2514, 1.0
    %v2563 = vadd.f32 %v2516, 1.0
    %v2564 = vadd.f32 %v2518, 1.0
    %v2565 = vadd.f32 %v2520, 1.0
    %v2566 = vadd.f32 %v2522, 1.0
    %v2567 = vadd.f32 %v2524, 1.0
    %v2568 = vadd.f32 %v2526, 1.0
    %v2569 = vadd.f32 %v2528, 1.0
    %v2570 = vadd.f32 %v2530, 1.0
    %v2571 = vadd.f32 %v2532, 1.0
    %v2572 = vadd.f32 %v2534, 1.0
    %v2573 = vadd.f32 %v2536, 1.0
    %v2574 = vadd.f32 %v2538, 1.0
    %v2575 = vadd.f32 %v2540, 1.0
    %v2576 = vadd.f32 %v2542, 1.0
    %v2577 = vadd.f32 %v2544, 1.0
    %v2578 = vadd.f32 %v2546, 1.0
    %v2579 = vrcp.pop %v2547
    %v2580 = vmul.f32 1.0, %v2579
    %v2581 = vrcp.pop %v2548
    %v2582 = vmul.f32 1.0, %v2581
    %v2583 = vrcp.pop %v2549
    %v2584 = vmul.f32 1.0, %v2583
    %v2585 = vrcp.pop %v2550
    %v2586 = vmul.f32 1.0, %v2585
    %v2587 = vrcp.pop %v2551
    %v2588 = vmul.f32 1.0, %v2587
    %v2589 = vrcp.pop %v2552
    %v2590 = vmul.f32 1.0, %v2589
    %v2591 = vrcp.pop %v2553
    %v2592 = vmul.f32 1.0, %v2591
    %v2593 = vrcp.pop %v2554
    %v2594 = vmul.f32 1.0, %v2593
    %v2595 = vrcp.pop %v2555
    %v2596 = vmul.f32 1.0, %v2595
    %v2597 = vrcp.pop %v2556
    %v2598 = vmul.f32 1.0, %v2597
    %v2599 = vrcp.pop %v2557
    %v2600 = vmul.f32 1.0, %v2599
    %v2601 = vrcp.pop %v2558
    %v2602 = vmul.f32 1.0, %v2601
    %v2603 = vrcp.pop %v2559
    %v2604 = vmul.f32 1.0, %v2603
    %v2605 = vrcp.pop %v2560
    %v2606 = vmul.f32 1.0, %v2605
    %v2607 = vrcp.pop %v2561
    %v2608 = vmul.f32 1.0, %v2607
    %v2609 = vrcp.pop %v2562
    %v2610 = vmul.f32 1.0, %v2609
    %v2611 = vrcp.pop %v2563
    %v2612 = vmul.f32 1.0, %v2611
    %v2613 = vrcp.pop %v2564
    %v2614 = vmul.f32 1.0, %v2613
    %v2615 = vrcp.pop %v2565
    %v2616 = vmul.f32 1.0, %v2615
    %v2617 = vrcp.pop %v2566
    %v2618 = vmul.f32 1.0, %v2617
    %v2619 = vrcp.pop %v2567
    %v2620 = vmul.f32 1.0, %v2619
    %v2621 = vrcp.pop %v2568
    %v2622 = vmul.f32 1.0, %v2621
    %v2623 = vrcp.pop %v2569
    %v2624 = vmul.f32 1.0, %v2623
    %v2625 = vrcp.pop %v2570
    %v2626 = vmul.f32 1.0, %v2625
    %v2627 = vrcp.pop %v2571
    %v2628 = vmul.f32 1.0, %v2627
    %v2629 = vrcp.pop %v2572
    %v2630 = vmul.f32 1.0, %v2629
    %v2631 = vrcp.pop %v2573
    %v2632 = vmul.f32 1.0, %v2631
    %v2633 = vrcp.pop %v2574
    %v2634 = vmul.f32 1.0, %v2633
    %v2635 = vrcp.pop %v2575
    %v2636 = vmul.f32 1.0, %v2635
    %v2637 = vrcp.pop %v2576
    %v2638 = vmul.f32 1.0, %v2637
    %v2639 = vrcp.pop %v2577
    %v2640 = vmul.f32 1.0, %v2639
    %v2641 = vrcp.pop %v2578
    %v2642 = vmul.f32 1.0, %v2641
    %v2643 = vmul.f32 %v2580, %v758
    %v2644 = vmul.f32 %v2582, %v762
    %v2645 = vmul.f32 %v2584, %v769
    %v2646 = vmul.f32 %v2586, %v773
    %v2647 = vmul.f32 %v2588, %v780
    %v2648 = vmul.f32 %v2590, %v784
    %v2649 = vmul.f32 %v2592, %v791
    %v2650 = vmul.f32 %v2594, %v795
    %v2651 = vmul.f32 %v2596, %v802
    %v2652 = vmul.f32 %v2598, %v806
    %v2653 = vmul.f32 %v2600, %v813
    %v2654 = vmul.f32 %v2602, %v817
    %v2655 = vmul.f32 %v2604, %v824
    %v2656 = vmul.f32 %v2606, %v828
    %v2657 = vmul.f32 %v2608, %v835
    %v2658 = vmul.f32 %v2610, %v839
    %v2659 = vmul.f32 %v2612, %v846
    %v2660 = vmul.f32 %v2614, %v850
    %v2661 = vmul.f32 %v2616, %v857
    %v2662 = vmul.f32 %v2618, %v861
    %v2663 = vmul.f32 %v2620, %v868
    %v2664 = vmul.f32 %v2622, %v872
    %v2665 = vmul.f32 %v2624, %v879
    %v2666 = vmul.f32 %v2626, %v883
    %v2667 = vmul.f32 %v2628, %v890
    %v2668 = vmul.f32 %v2630, %v894
    %v2669 = vmul.f32 %v2632, %v901
    %v2670 = vmul.f32 %v2634, %v905
    %v2671 = vmul.f32 %v2636, %v912
    %v2672 = vmul.f32 %v2638, %v916
    %v2673 = vmul.f32 %v2640, %v923
    %v2674 = vmul.f32 %v2642, %v927
    %2675 = vrot.lane.b32.xlu0 %v2225, 64
    %v2676 = vpop.permute.xlu0 %2675
    %2677 = vrot.lane.b32.xlu0 %v2230, 64
    %v2678 = vpop.permute.xlu0 %2677
    %v2681 = vmul.f32 %v2643, %v2676
    %v2682 = vmul.f32 %v2644, %v2678
    %v2683 = vmul.f32 %v2645, %v2676
    %v2684 = vmul.f32 %v2646, %v2678
    %v2685 = vmul.f32 %v2647, %v2676
    %v2686 = vmul.f32 %v2648, %v2678
    %v2687 = vmul.f32 %v2649, %v2676
    %v2688 = vmul.f32 %v2650, %v2678
    %v2689 = vmul.f32 %v2651, %v2676
    %v2690 = vmul.f32 %v2652, %v2678
    %v2691 = vmul.f32 %v2653, %v2676
    %v2692 = vmul.f32 %v2654, %v2678
    %v2693 = vmul.f32 %v2655, %v2676
    %v2694 = vmul.f32 %v2656, %v2678
    %v2695 = vmul.f32 %v2657, %v2676
    %v2696 = vmul.f32 %v2658, %v2678
    %v2697 = vmul.f32 %v2659, %v2676
    %v2698 = vmul.f32 %v2660, %v2678
    %v2699 = vmul.f32 %v2661, %v2676
    %v2700 = vmul.f32 %v2662, %v2678
    %v2701 = vmul.f32 %v2663, %v2676
    %v2702 = vmul.f32 %v2664, %v2678
    %v2703 = vmul.f32 %v2665, %v2676
    %v2704 = vmul.f32 %v2666, %v2678
    %v2705 = vmul.f32 %v2667, %v2676
    %v2706 = vmul.f32 %v2668, %v2678
    %v2707 = vmul.f32 %v2669, %v2676
    %v2708 = vmul.f32 %v2670, %v2678
    %v2709 = vmul.f32 %v2671, %v2676
    %v2710 = vmul.f32 %v2672, %v2678
    %v2711 = vmul.f32 %v2673, %v2676
    %v2712 = vmul.f32 %v2674, %v2678
    %v2713 = vsel %vm156, %v2681, 0.0
    %v2714 = vsel %vm156, %v2682, 0.0
    %v2715 = vadd.f32 %v2713, %v2714
    %v2716 = vrot.slane %v2715, 4
    %v2717 = vadd.f32 %v2715, %v2716
    %v2718 = vrot.slane %v2717, 2
    %v2719 = vadd.f32 %v2717, %v2718
    %v2720 = vrot.slane %v2719, 1
    %v2721 = vadd.f32 %v2719, %v2720
    %v2722 = vsel %vm156, %v2683, 0.0
    %v2723 = vsel %vm156, %v2684, 0.0
    %v2724 = vadd.f32 %v2722, %v2723
    %v2725 = vrot.slane %v2724, 4
    %v2726 = vadd.f32 %v2724, %v2725
    %v2727 = vrot.slane %v2726, 2
    %v2728 = vadd.f32 %v2726, %v2727
    %v2729 = vrot.slane %v2728, 1
    %v2730 = vadd.f32 %v2728, %v2729
    %v2731 = vsel %vm156, %v2685, 0.0
    %v2732 = vsel %vm156, %v2686, 0.0
    %v2733 = vadd.f32 %v2731, %v2732
    %v2734 = vrot.slane %v2733, 4
    %v2735 = vadd.f32 %v2733, %v2734
    %v2736 = vrot.slane %v2735, 2
    %v2737 = vadd.f32 %v2735, %v2736
    %v2738 = vrot.slane %v2737, 1
    %v2739 = vadd.f32 %v2737, %v2738
    %v2740 = vsel %vm156, %v2687, 0.0
    %v2741 = vsel %vm156, %v2688, 0.0
    %v2742 = vadd.f32 %v2740, %v2741
    %v2743 = vrot.slane %v2742, 4
    %v2744 = vadd.f32 %v2742, %v2743
    %v2745 = vrot.slane %v2744, 2
    %v2746 = vadd.f32 %v2744, %v2745
    %v2747 = vrot.slane %v2746, 1
    %v2748 = vadd.f32 %v2746, %v2747
    %v2749 = vsel %vm156, %v2689, 0.0
    %v2750 = vsel %vm156, %v2690, 0.0
    %v2751 = vadd.f32 %v2749, %v2750
    %v2752 = vrot.slane %v2751, 4
    %v2753 = vadd.f32 %v2751, %v2752
    %v2754 = vrot.slane %v2753, 2
    %v2755 = vadd.f32 %v2753, %v2754
    %v2756 = vrot.slane %v2755, 1
    %v2757 = vadd.f32 %v2755, %v2756
    %v2758 = vsel %vm156, %v2691, 0.0
    %v2759 = vsel %vm156, %v2692, 0.0
    %v2760 = vadd.f32 %v2758, %v2759
    %v2761 = vrot.slane %v2760, 4
    %v2762 = vadd.f32 %v2760, %v2761
    %v2763 = vrot.slane %v2762, 2
    %v2764 = vadd.f32 %v2762, %v2763
    %v2765 = vrot.slane %v2764, 1
    %v2766 = vadd.f32 %v2764, %v2765
    %v2767 = vsel %vm156, %v2693, 0.0
    %v2768 = vsel %vm156, %v2694, 0.0
    %v2769 = vadd.f32 %v2767, %v2768
    %v2770 = vrot.slane %v2769, 4
    %v2771 = vadd.f32 %v2769, %v2770
    %v2772 = vrot.slane %v2771, 2
    %v2773 = vadd.f32 %v2771, %v2772
    %v2774 = vrot.slane %v2773, 1
    %v2775 = vadd.f32 %v2773, %v2774
    %v2776 = vsel %vm156, %v2695, 0.0
    %v2777 = vsel %vm156, %v2696, 0.0
    %v2778 = vadd.f32 %v2776, %v2777
    %v2779 = vrot.slane %v2778, 4
    %v2780 = vadd.f32 %v2778, %v2779
    %v2781 = vrot.slane %v2780, 2
    %v2782 = vadd.f32 %v2780, %v2781
    %v2783 = vrot.slane %v2782, 1
    %v2784 = vadd.f32 %v2782, %v2783
    %v2785 = vsel %vm156, %v2697, 0.0
    %v2786 = vsel %vm156, %v2698, 0.0
    %v2787 = vadd.f32 %v2785, %v2786
    %v2788 = vrot.slane %v2787, 4
    %v2789 = vadd.f32 %v2787, %v2788
    %v2790 = vrot.slane %v2789, 2
    %v2791 = vadd.f32 %v2789, %v2790
    %v2792 = vrot.slane %v2791, 1
    %v2793 = vadd.f32 %v2791, %v2792
    %v2794 = vsel %vm156, %v2699, 0.0
    %v2795 = vsel %vm156, %v2700, 0.0
    %v2796 = vadd.f32 %v2794, %v2795
    %v2797 = vrot.slane %v2796, 4
    %v2798 = vadd.f32 %v2796, %v2797
    %v2799 = vrot.slane %v2798, 2
    %v2800 = vadd.f32 %v2798, %v2799
    %v2801 = vrot.slane %v2800, 1
    %v2802 = vadd.f32 %v2800, %v2801
    %v2803 = vsel %vm156, %v2701, 0.0
    %v2804 = vsel %vm156, %v2702, 0.0
    %v2805 = vadd.f32 %v2803, %v2804
    %v2806 = vrot.slane %v2805, 4
    %v2807 = vadd.f32 %v2805, %v2806
    %v2808 = vrot.slane %v2807, 2
    %v2809 = vadd.f32 %v2807, %v2808
    %v2810 = vrot.slane %v2809, 1
    %v2811 = vadd.f32 %v2809, %v2810
    %v2812 = vsel %vm156, %v2703, 0.0
    %v2813 = vsel %vm156, %v2704, 0.0
    %v2814 = vadd.f32 %v2812, %v2813
    %v2815 = vrot.slane %v2814, 4
    %v2816 = vadd.f32 %v2814, %v2815
    %v2817 = vrot.slane %v2816, 2
    %v2818 = vadd.f32 %v2816, %v2817
    %v2819 = vrot.slane %v2818, 1
    %v2820 = vadd.f32 %v2818, %v2819
    %v2821 = vsel %vm156, %v2705, 0.0
    %v2822 = vsel %vm156, %v2706, 0.0
    %v2823 = vadd.f32 %v2821, %v2822
    %v2824 = vrot.slane %v2823, 4
    %v2825 = vadd.f32 %v2823, %v2824
    %v2826 = vrot.slane %v2825, 2
    %v2827 = vadd.f32 %v2825, %v2826
    %v2828 = vrot.slane %v2827, 1
    %v2829 = vadd.f32 %v2827, %v2828
    %v2830 = vsel %vm156, %v2707, 0.0
    %v2831 = vsel %vm156, %v2708, 0.0
    %v2832 = vadd.f32 %v2830, %v2831
    %v2833 = vrot.slane %v2832, 4
    %v2834 = vadd.f32 %v2832, %v2833
    %v2835 = vrot.slane %v2834, 2
    %v2836 = vadd.f32 %v2834, %v2835
    %v2837 = vrot.slane %v2836, 1
    %v2838 = vadd.f32 %v2836, %v2837
    %v2839 = vsel %vm156, %v2709, 0.0
    %v2840 = vsel %vm156, %v2710, 0.0
    %v2841 = vadd.f32 %v2839, %v2840
    %v2842 = vrot.slane %v2841, 4
    %v2843 = vadd.f32 %v2841, %v2842
    %v2844 = vrot.slane %v2843, 2
    %v2845 = vadd.f32 %v2843, %v2844
    %v2846 = vrot.slane %v2845, 1
    %v2847 = vadd.f32 %v2845, %v2846
    %v2848 = vsel %vm156, %v2711, 0.0
    %v2849 = vsel %vm156, %v2712, 0.0
    %v2850 = vadd.f32 %v2848, %v2849
    %v2851 = vrot.slane %v2850, 4
    %v2852 = vadd.f32 %v2850, %v2851
    %v2853 = vrot.slane %v2852, 2
    %v2854 = vadd.f32 %v2852, %v2853
    %v2855 = vrot.slane %v2854, 1
    %v2856 = vadd.f32 %v2854, %v2855
    %v2857 = vrot.slane %v2225, 1
    %v2858 = vrot.slane %v2225, 2
    %v2859 = vrot.slane %v2225, 3
    %v2860 = vrot.slane %v2225, 4
    %v2861 = vrot.slane %v2225, 5
    %v2862 = vrot.slane %v2225, 6
    %v2863 = vrot.slane %v2225, 7
    %v2864 = vrot.slane %v2230, 1
    %v2865 = vrot.slane %v2230, 2
    %v2866 = vrot.slane %v2230, 3
    %v2867 = vrot.slane %v2230, 4
    %v2868 = vrot.slane %v2230, 5
    %v2869 = vrot.slane %v2230, 6
    %v2870 = vrot.slane %v2230, 7
    %2871 = vrot.lane.b32.xlu0 %v2225, 32
    %v2872 = vpop.permute.xlu0 %2871
    %2873 = vrot.lane.b32.xlu0 %v2857, 32
    %v2874 = vpop.permute.xlu0 %2873
    %2875 = vrot.lane.b32.xlu0 %v2858, 32
    %v2876 = vpop.permute.xlu0 %2875
    %2877 = vrot.lane.b32.xlu0 %v2859, 32
    %v2878 = vpop.permute.xlu0 %2877
    %2879 = vrot.lane.b32.xlu0 %v2860, 32
    %v2880 = vpop.permute.xlu0 %2879
    %2881 = vrot.lane.b32.xlu0 %v2861, 32
    %v2882 = vpop.permute.xlu0 %2881
    %2883 = vrot.lane.b32.xlu0 %v2862, 32
    %v2884 = vpop.permute.xlu0 %2883
    %2885 = vrot.lane.b32.xlu0 %v2863, 32
    %v2886 = vpop.permute.xlu0 %2885
    %2887 = vrot.lane.b32.xlu0 %v2230, 32
    %v2888 = vpop.permute.xlu0 %2887
    %2889 = vrot.lane.b32.xlu0 %v2864, 32
    %v2890 = vpop.permute.xlu0 %2889
    %2891 = vrot.lane.b32.xlu0 %v2865, 32
    %v2892 = vpop.permute.xlu0 %2891
    %2893 = vrot.lane.b32.xlu0 %v2866, 32
    %v2894 = vpop.permute.xlu0 %2893
    %2895 = vrot.lane.b32.xlu0 %v2867, 32
    %v2896 = vpop.permute.xlu0 %2895
    %2897 = vrot.lane.b32.xlu0 %v2868, 32
    %v2898 = vpop.permute.xlu0 %2897
    %2899 = vrot.lane.b32.xlu0 %v2869, 32
    %v2900 = vpop.permute.xlu0 %2899
    %2901 = vrot.lane.b32.xlu0 %v2870, 32
    %v2902 = vpop.permute.xlu0 %2901
    %v2919 = vadd.f32 %v2721, %v2872
    %v2920 = vadd.f32 %v2730, %v2874
    %v2921 = vadd.f32 %v2739, %v2876
    %v2922 = vadd.f32 %v2748, %v2878
    %v2923 = vadd.f32 %v2757, %v2880
    %v2924 = vadd.f32 %v2766, %v2882
    %v2925 = vadd.f32 %v2775, %v2884
    %v2926 = vadd.f32 %v2784, %v2886
    %v2927 = vadd.f32 %v2793, %v2888
    %v2928 = vadd.f32 %v2802, %v2890
    %v2929 = vadd.f32 %v2811, %v2892
    %v2930 = vadd.f32 %v2820, %v2894
    %v2931 = vadd.f32 %v2829, %v2896
    %v2932 = vadd.f32 %v2838, %v2898
    %v2933 = vadd.f32 %v2847, %v2900
    %v2934 = vadd.f32 %v2856, %v2902
    %v2935 = vld [vmem:[#allocation2 + $0xd0] sm:$0xff]
    %v2936 = vld [vmem:[#allocation2 + $0xe0] sm:$0xff]
    %v2937 = vld [vmem:[#allocation2 + $0xf0] sm:$0xff]
    %v2938 = vld [vmem:[#allocation2 + $0x100] sm:$0xff]
    %v2939 = vld [vmem:[#allocation2 + $0x154] ss:$0 sm:$0xff]
    %v2956 = vrot.slane %v2083, 7
    %v2957 = vsel %vm2120, %v2956, %v2082
    %v2958 = vrot.slane %v2084, 6
    %v2959 = vsel %vm2123, %v2958, %v2957
    %v2960 = vrot.slane %v2085, 5
    %v2961 = vsel %vm2126, %v2960, %v2959
    %v2962 = vrot.slane %v2086, 4
    %v2963 = vsel %vm2129, %v2962, %v2961
    %v2964 = vrot.slane %v2087, 3
    %v2965 = vsel %vm2132, %v2964, %v2963
    %v2966 = vrot.slane %v2088, 2
    %v2967 = vsel %vm2135, %v2966, %v2965
    %v2968 = vrot.slane %v2089, 1
    %v2969 = vsel %vm2138, %v2968, %v2967
    %v2970 = vrot.slane %v2091, 7
    %v2971 = vsel %vm2120, %v2970, %v2090
    %v2972 = vrot.slane %v2092, 6
    %v2973 = vsel %vm2123, %v2972, %v2971
    %v2974 = vrot.slane %v2093, 5
    %v2975 = vsel %vm2126, %v2974, %v2973
    %v2976 = vrot.slane %v2094, 4
    %v2977 = vsel %vm2129, %v2976, %v2975
    %v2978 = vrot.slane %v2095, 3
    %v2979 = vsel %vm2132, %v2978, %v2977
    %v2980 = vrot.slane %v2096, 2
    %v2981 = vsel %vm2135, %v2980, %v2979
    %v2982 = vrot.slane %v2097, 1
    %v2983 = vsel %vm2138, %v2982, %v2981
    %v2984 = vsel %vm156, %v2969, 0
    %v2986 = vsel %vm156, %v2983, 0
    %2988 = vmatprep.subr.mxu0 0.0
    %2989 = vmatpush1.msra.mxu0 0.0
    %2990 = vmatprep.subr.mxu0 0.0
    %2991 = vmatpush1.msra.mxu0 0.0
    %2992 = vmatprep.subr.mxu0 0.0
    %2993 = vmatpush1.msra.mxu0 0.0
    %2994 = vmatprep.subr.mxu0 0.0
    %2995 = vmatpush1.msra.mxu0 0.0
    %2996 = vmatprep.subr.mxu0 0.0
    %2997 = vmatpush1.msra.mxu0 0.0
    %2998 = vmatprep.subr.mxu0 0.0
    %2999 = vmatpush1.msra.mxu0 0.0
    %3000 = vmatprep.subr.mxu0 0.0
    %3001 = vmatpush1.msra.mxu0 0.0
    %3002 = vmatprep.subr.mxu0 0.0
    %3003 = vmatpush1.msra.mxu0 0.0
    %3004 = vmatprep.subr.mxu0 0.0
    %3005 = vmatpush1.msra.mxu0 0.0
    %3006 = vmatprep.subr.mxu0 0.0
    %3007 = vmatpush1.msra.mxu0 0.0
    %3008 = vmatprep.subr.mxu0 0.0
    %3009 = vmatpush1.msra.mxu0 0.0
    %3010 = vmatprep.subr.mxu0 0.0
    %3011 = vmatpush1.msra.mxu0 0.0
    %3012 = vmatprep.subr.mxu0 0.0
    %3013 = vmatpush1.msra.mxu0 %v2938
    %3014 = vmatprep.subr.mxu0 0.0
    %3015 = vmatpush1.msra.mxu0 %v2937
    %3016 = vmatprep.subr.mxu0 0.0
    %3017 = vmatpush1.msra.mxu0 %v2936
    %3018 = vmatprep.subr.mxu0 0.0
    %3019 = vmatpush1.msra.mxu0 %v2935
    %3020 = vmatprep.subr.mxu0 0.0
    %3021 = vmatpush2.msra.mxu0 0.0
    %3022 = vmatprep.subr.mxu0 0.0
    %3023 = vmatpush2.msra.mxu0 0.0
    %3024 = vmatprep.subr.mxu0 0.0
    %3025 = vmatpush2.msra.mxu0 0.0
    %3026 = vmatprep.subr.mxu0 0.0
    %3027 = vmatpush2.msra.mxu0 0.0
    %3028 = vmatprep.subr.mxu0 0.0
    %3029 = vmatpush2.msra.mxu0 0.0
    %3030 = vmatprep.subr.mxu0 0.0
    %3031 = vmatpush2.msra.mxu0 0.0
    %3032 = vmatprep.subr.mxu0 0.0
    %3033 = vmatpush2.msra.mxu0 0.0
    %3034 = vmatprep.subr.mxu0 0.0
    %3035 = vmatpush2.msra.mxu0 0.0
    %3036 = vmatprep.subr.mxu0 0.0
    %3037 = vmatpush2.msra.mxu0 0.0
    %3038 = vmatprep.subr.mxu0 0.0
    %3039 = vmatpush2.msra.mxu0 0.0
    %3040 = vmatprep.subr.mxu0 0.0
    %3041 = vmatpush2.msra.mxu0 0.0
    %3042 = vmatprep.subr.mxu0 0.0
    %3043 = vmatpush2.msra.mxu0 0.0
    %3044 = vmatprep.subr.mxu0 0.0
    %3045 = vmatpush2.msra.mxu0 0.0
    %3046 = vmatprep.subr.mxu0 0.0
    %3047 = vmatpush2.msra.mxu0 0.0
    %3048 = vmatprep.subr.mxu0 0.0
    %3049 = vmatpush2.msra.mxu0 0.0
    %3050 = vmatprep.subr.mxu0 0.0
    %3051 = vmatpush2.msra.mxu0 0.0
    %3052 = vmatprep.mubr.f32.mxu0 0.0
    %3053 = vmatmul.mubr.f32.gmra.mxu0 %v2984
    %v3054 = vpop.f32.mrf.mxu0
    %v3055 = vadd.f32 %v2939, %v3054
    %v3056 = vpop.f32.mrf.mxu0
    %3057 = vmatprep.mubr.f32.mxu0 0.0
    %3058 = vmatmul.mubr.f32.gmra.mxu0 %v2986
    %v3059 = vpop.f32.mrf.mxu0
    %v3060 = vadd.f32 %v2939, %v3059
    %v3061 = vpop.f32.mrf.mxu0
    %3062 = vdwg.mxu0
    %v3065 = vcombine.high %v3055, %v3055
    %v3067 = vunpack.c.l.s4 1966171168
    %v3068 = vunpack.c.0.s8 %v3067
    %v3069 = vlaneseq
    %v3070 = vshrl.u32 %v3069, 7
    %v3071 = vsub.s32 %v3068, %v3070
    %v3072 = vrot.slane %v3055, %v3071
    %v3074 = vunpack.c.l.s4 1966171168
    %v3075 = vunpack.c.0.s8 %v3074
    %v3076 = vlaneseq
    %v3077 = vshrl.u32 %v3076, 7
    %v3078 = vsub.s32 %v3075, %v3077
    %v3079 = vrot.slane %v3065, %v3078
    %v3080 = vcombine.high %v3072, %v3072
    %v3081 = vcombine.high %v3079, %v3079
    %v3083 = vunpack.c.l.s4 1966171168
    %v3084 = vunpack.c.0.s8 %v3083
    %v3085 = vlaneseq
    %v3086 = vshrl.u32 %v3085, 7
    %v3087 = vsub.s32 %v3084, %v3086
    %v3088 = vrot.slane %v3072, %v3087
    %v3090 = vunpack.c.l.s4 1966171168
    %v3091 = vunpack.c.0.s8 %v3090
    %v3092 = vlaneseq
    %v3093 = vshrl.u32 %v3092, 7
    %v3094 = vsub.s32 %v3091, %v3093
    %v3095 = vrot.slane %v3079, %v3094
    %v3097 = vunpack.c.l.s4 1966171168
    %v3098 = vunpack.c.0.s8 %v3097
    %v3099 = vlaneseq
    %v3100 = vshrl.u32 %v3099, 7
    %v3101 = vsub.s32 %v3098, %v3100
    %v3102 = vrot.slane %v3080, %v3101
    %v3104 = vunpack.c.l.s4 1966171168
    %v3105 = vunpack.c.0.s8 %v3104
    %v3106 = vlaneseq
    %v3107 = vshrl.u32 %v3106, 7
    %v3108 = vsub.s32 %v3105, %v3107
    %v3109 = vrot.slane %v3081, %v3108
    %v3110 = vcombine.high %v3088, %v3088
    %v3111 = vcombine.high %v3095, %v3095
    %v3112 = vcombine.high %v3102, %v3102
    %v3113 = vcombine.high %v3109, %v3109
    %v3114 = vcombine.high %v3060, %v3060
    %v3116 = vunpack.c.l.s4 1966171168
    %v3117 = vunpack.c.0.s8 %v3116
    %v3118 = vlaneseq
    %v3119 = vshrl.u32 %v3118, 7
    %v3120 = vsub.s32 %v3117, %v3119
    %v3121 = vrot.slane %v3060, %v3120
    %v3123 = vunpack.c.l.s4 1966171168
    %v3124 = vunpack.c.0.s8 %v3123
    %v3125 = vlaneseq
    %v3126 = vshrl.u32 %v3125, 7
    %v3127 = vsub.s32 %v3124, %v3126
    %v3128 = vrot.slane %v3114, %v3127
    %v3129 = vcombine.high %v3121, %v3121
    %v3130 = vcombine.high %v3128, %v3128
    %v3132 = vunpack.c.l.s4 1966171168
    %v3133 = vunpack.c.0.s8 %v3132
    %v3134 = vlaneseq
    %v3135 = vshrl.u32 %v3134, 7
    %v3136 = vsub.s32 %v3133, %v3135
    %v3137 = vrot.slane %v3121, %v3136
    %v3139 = vunpack.c.l.s4 1966171168
    %v3140 = vunpack.c.0.s8 %v3139
    %v3141 = vlaneseq
    %v3142 = vshrl.u32 %v3141, 7
    %v3143 = vsub.s32 %v3140, %v3142
    %v3144 = vrot.slane %v3128, %v3143
    %v3146 = vunpack.c.l.s4 1966171168
    %v3147 = vunpack.c.0.s8 %v3146
    %v3148 = vlaneseq
    %v3149 = vshrl.u32 %v3148, 7
    %v3150 = vsub.s32 %v3147, %v3149
    %v3151 = vrot.slane %v3129, %v3150
    %v3153 = vunpack.c.l.s4 1966171168
    %v3154 = vunpack.c.0.s8 %v3153
    %v3155 = vlaneseq
    %v3156 = vshrl.u32 %v3155, 7
    %v3157 = vsub.s32 %v3154, %v3156
    %v3158 = vrot.slane %v3130, %v3157
    %v3159 = vcombine.high %v3137, %v3137
    %v3160 = vcombine.high %v3144, %v3144
    %v3161 = vcombine.high %v3151, %v3151
    %v3162 = vcombine.high %v3158, %v3158
    %v3163 = vlaneseq
    %v3164 = vshrl.u32 %v3163, 7
    %v3165 = vsub.s32 0, %v3164
    %v3166 = vrot.slane %v3088, %v3165
    %v3167 = vlaneseq
    %v3168 = vshrl.u32 %v3167, 7
    %v3169 = vsub.s32 0, %v3168
    %v3170 = vrot.slane %v3102, %v3169
    %v3171 = vlaneseq
    %v3172 = vshrl.u32 %v3171, 7
    %v3173 = vsub.s32 0, %v3172
    %v3174 = vrot.slane %v3110, %v3173
    %v3175 = vlaneseq
    %v3176 = vshrl.u32 %v3175, 7
    %v3177 = vsub.s32 0, %v3176
    %v3178 = vrot.slane %v3112, %v3177
    %v3179 = vlaneseq
    %v3180 = vshrl.u32 %v3179, 7
    %v3181 = vsub.s32 0, %v3180
    %v3182 = vrot.slane %v3095, %v3181
    %v3183 = vlaneseq
    %v3184 = vshrl.u32 %v3183, 7
    %v3185 = vsub.s32 0, %v3184
    %v3186 = vrot.slane %v3109, %v3185
    %v3187 = vlaneseq
    %v3188 = vshrl.u32 %v3187, 7
    %v3189 = vsub.s32 0, %v3188
    %v3190 = vrot.slane %v3111, %v3189
    %v3191 = vlaneseq
    %v3192 = vshrl.u32 %v3191, 7
    %v3193 = vsub.s32 0, %v3192
    %v3194 = vrot.slane %v3113, %v3193
    %v3195 = vlaneseq
    %v3196 = vshrl.u32 %v3195, 7
    %v3197 = vsub.s32 0, %v3196
    %v3198 = vrot.slane %v3137, %v3197
    %v3199 = vlaneseq
    %v3200 = vshrl.u32 %v3199, 7
    %v3201 = vsub.s32 0, %v3200
    %v3202 = vrot.slane %v3151, %v3201
    %v3203 = vlaneseq
    %v3204 = vshrl.u32 %v3203, 7
    %v3205 = vsub.s32 0, %v3204
    %v3206 = vrot.slane %v3159, %v3205
    %v3207 = vlaneseq
    %v3208 = vshrl.u32 %v3207, 7
    %v3209 = vsub.s32 0, %v3208
    %v3210 = vrot.slane %v3161, %v3209
    %v3211 = vlaneseq
    %v3212 = vshrl.u32 %v3211, 7
    %v3213 = vsub.s32 0, %v3212
    %v3214 = vrot.slane %v3144, %v3213
    %v3215 = vlaneseq
    %v3216 = vshrl.u32 %v3215, 7
    %v3217 = vsub.s32 0, %v3216
    %v3218 = vrot.slane %v3158, %v3217
    %v3219 = vlaneseq
    %v3220 = vshrl.u32 %v3219, 7
    %v3221 = vsub.s32 0, %v3220
    %v3222 = vrot.slane %v3160, %v3221
    %v3223 = vlaneseq
    %v3224 = vshrl.u32 %v3223, 7
    %v3225 = vsub.s32 0, %v3224
    %v3226 = vrot.slane %v3162, %v3225
    %3243 = vrot.lane.b32.xlu0 %v3055, 96
    %v3244 = vpop.permute.xlu0 %3243
    %3245 = vrot.lane.b32.xlu0 %v3060, 96
    %v3246 = vpop.permute.xlu0 %3245
    %v3249 = vadd.f32 %v3166, %v3244
    %v3250 = vadd.f32 %v3166, %v3246
    %v3251 = vadd.f32 %v3170, %v3244
    %v3252 = vadd.f32 %v3170, %v3246
    %v3253 = vadd.f32 %v3174, %v3244
    %v3254 = vadd.f32 %v3174, %v3246
    %v3255 = vadd.f32 %v3178, %v3244
    %v3256 = vadd.f32 %v3178, %v3246
    %v3257 = vadd.f32 %v3182, %v3244
    %v3258 = vadd.f32 %v3182, %v3246
    %v3259 = vadd.f32 %v3186, %v3244
    %v3260 = vadd.f32 %v3186, %v3246
    %v3261 = vadd.f32 %v3190, %v3244
    %v3262 = vadd.f32 %v3190, %v3246
    %v3263 = vadd.f32 %v3194, %v3244
    %v3264 = vadd.f32 %v3194, %v3246
    %v3265 = vadd.f32 %v3198, %v3244
    %v3266 = vadd.f32 %v3198, %v3246
    %v3267 = vadd.f32 %v3202, %v3244
    %v3268 = vadd.f32 %v3202, %v3246
    %v3269 = vadd.f32 %v3206, %v3244
    %v3270 = vadd.f32 %v3206, %v3246
    %v3271 = vadd.f32 %v3210, %v3244
    %v3272 = vadd.f32 %v3210, %v3246
    %v3273 = vadd.f32 %v3214, %v3244
    %v3274 = vadd.f32 %v3214, %v3246
    %v3275 = vadd.f32 %v3218, %v3244
    %v3276 = vadd.f32 %v3218, %v3246
    %v3277 = vadd.f32 %v3222, %v3244
    %v3278 = vadd.f32 %v3222, %v3246
    %v3279 = vadd.f32 %v3226, %v3244
    %v3280 = vadd.f32 %v3226, %v3246
    %v3281 = vxor.u32 %v3249, 2147483648
    %v3282 = vxor.u32 %v3250, 2147483648
    %v3283 = vxor.u32 %v3251, 2147483648
    %v3284 = vxor.u32 %v3252, 2147483648
    %v3285 = vxor.u32 %v3253, 2147483648
    %v3286 = vxor.u32 %v3254, 2147483648
    %v3287 = vxor.u32 %v3255, 2147483648
    %v3288 = vxor.u32 %v3256, 2147483648
    %v3289 = vxor.u32 %v3257, 2147483648
    %v3290 = vxor.u32 %v3258, 2147483648
    %v3291 = vxor.u32 %v3259, 2147483648
    %v3292 = vxor.u32 %v3260, 2147483648
    %v3293 = vxor.u32 %v3261, 2147483648
    %v3294 = vxor.u32 %v3262, 2147483648
    %v3295 = vxor.u32 %v3263, 2147483648
    %v3296 = vxor.u32 %v3264, 2147483648
    %v3297 = vxor.u32 %v3265, 2147483648
    %v3298 = vxor.u32 %v3266, 2147483648
    %v3299 = vxor.u32 %v3267, 2147483648
    %v3300 = vxor.u32 %v3268, 2147483648
    %v3301 = vxor.u32 %v3269, 2147483648
    %v3302 = vxor.u32 %v3270, 2147483648
    %v3303 = vxor.u32 %v3271, 2147483648
    %v3304 = vxor.u32 %v3272, 2147483648
    %v3305 = vxor.u32 %v3273, 2147483648
    %v3306 = vxor.u32 %v3274, 2147483648
    %v3307 = vxor.u32 %v3275, 2147483648
    %v3308 = vxor.u32 %v3276, 2147483648
    %v3309 = vxor.u32 %v3277, 2147483648
    %v3310 = vxor.u32 %v3278, 2147483648
    %v3311 = vxor.u32 %v3279, 2147483648
    %v3312 = vxor.u32 %v3280, 2147483648
    %v3313 = vmul.f32 %v3281, 1.442695
    %v3314 = vpow.pop %v3313
    %v3315 = vmul.f32 %v3282, 1.442695
    %v3316 = vpow.pop %v3315
    %v3317 = vmul.f32 %v3283, 1.442695
    %v3318 = vpow.pop %v3317
    %v3319 = vmul.f32 %v3284, 1.442695
    %v3320 = vpow.pop %v3319
    %v3321 = vmul.f32 %v3285, 1.442695
    %v3322 = vpow.pop %v3321
    %v3323 = vmul.f32 %v3286, 1.442695
    %v3324 = vpow.pop %v3323
    %v3325 = vmul.f32 %v3287, 1.442695
    %v3326 = vpow.pop %v3325
    %v3327 = vmul.f32 %v3288, 1.442695
    %v3328 = vpow.pop %v3327
    %v3329 = vmul.f32 %v3289, 1.442695
    %v3330 = vpow.pop %v3329
    %v3331 = vmul.f32 %v3290, 1.442695
    %v3332 = vpow.pop %v3331
    %v3333 = vmul.f32 %v3291, 1.442695
    %v3334 = vpow.pop %v3333
    %v3335 = vmul.f32 %v3292, 1.442695
    %v3336 = vpow.pop %v3335
    %v3337 = vmul.f32 %v3293, 1.442695
    %v3338 = vpow.pop %v3337
    %v3339 = vmul.f32 %v3294, 1.442695
    %v3340 = vpow.pop %v3339
    %v3341 = vmul.f32 %v3295, 1.442695
    %v3342 = vpow.pop %v3341
    %v3343 = vmul.f32 %v3296, 1.442695
    %v3344 = vpow.pop %v3343
    %v3345 = vmul.f32 %v3297, 1.442695
    %v3346 = vpow.pop %v3345
    %v3347 = vmul.f32 %v3298, 1.442695
    %v3348 = vpow.pop %v3347
    %v3349 = vmul.f32 %v3299, 1.442695
    %v3350 = vpow.pop %v3349
    %v3351 = vmul.f32 %v3300, 1.442695
    %v3352 = vpow.pop %v3351
    %v3353 = vmul.f32 %v3301, 1.442695
    %v3354 = vpow.pop %v3353
    %v3355 = vmul.f32 %v3302, 1.442695
    %v3356 = vpow.pop %v3355
    %v3357 = vmul.f32 %v3303, 1.442695
    %v3358 = vpow.pop %v3357
    %v3359 = vmul.f32 %v3304, 1.442695
    %v3360 = vpow.pop %v3359
    %v3361 = vmul.f32 %v3305, 1.442695
    %v3362 = vpow.pop %v3361
    %v3363 = vmul.f32 %v3306, 1.442695
    %v3364 = vpow.pop %v3363
    %v3365 = vmul.f32 %v3307, 1.442695
    %v3366 = vpow.pop %v3365
    %v3367 = vmul.f32 %v3308, 1.442695
    %v3368 = vpow.pop %v3367
    %v3369 = vmul.f32 %v3309, 1.442695
    %v3370 = vpow.pop %v3369
    %v3371 = vmul.f32 %v3310, 1.442695
    %v3372 = vpow.pop %v3371
    %v3373 = vmul.f32 %v3311, 1.442695
    %v3374 = vpow.pop %v3373
    %v3375 = vmul.f32 %v3312, 1.442695
    %v3376 = vpow.pop %v3375
    %v3377 = vadd.f32 %v3314, 1.0
    %v3378 = vadd.f32 %v3316, 1.0
    %v3379 = vadd.f32 %v3318, 1.0
    %v3380 = vadd.f32 %v3320, 1.0
    %v3381 = vadd.f32 %v3322, 1.0
    %v3382 = vadd.f32 %v3324, 1.0
    %v3383 = vadd.f32 %v3326, 1.0
    %v3384 = vadd.f32 %v3328, 1.0
    %v3385 = vadd.f32 %v3330, 1.0
    %v3386 = vadd.f32 %v3332, 1.0
    %v3387 = vadd.f32 %v3334, 1.0
    %v3388 = vadd.f32 %v3336, 1.0
    %v3389 = vadd.f32 %v3338, 1.0
    %v3390 = vadd.f32 %v3340, 1.0
    %v3391 = vadd.f32 %v3342, 1.0
    %v3392 = vadd.f32 %v3344, 1.0
    %v3393 = vadd.f32 %v3346, 1.0
    %v3394 = vadd.f32 %v3348, 1.0
    %v3395 = vadd.f32 %v3350, 1.0
    %v3396 = vadd.f32 %v3352, 1.0
    %v3397 = vadd.f32 %v3354, 1.0
    %v3398 = vadd.f32 %v3356, 1.0
    %v3399 = vadd.f32 %v3358, 1.0
    %v3400 = vadd.f32 %v3360, 1.0
    %v3401 = vadd.f32 %v3362, 1.0
    %v3402 = vadd.f32 %v3364, 1.0
    %v3403 = vadd.f32 %v3366, 1.0
    %v3404 = vadd.f32 %v3368, 1.0
    %v3405 = vadd.f32 %v3370, 1.0
    %v3406 = vadd.f32 %v3372, 1.0
    %v3407 = vadd.f32 %v3374, 1.0
    %v3408 = vadd.f32 %v3376, 1.0
    %v3409 = vrcp.pop %v3377
    %v3410 = vmul.f32 1.0, %v3409
    %v3411 = vrcp.pop %v3378
    %v3412 = vmul.f32 1.0, %v3411
    %v3413 = vrcp.pop %v3379
    %v3414 = vmul.f32 1.0, %v3413
    %v3415 = vrcp.pop %v3380
    %v3416 = vmul.f32 1.0, %v3415
    %v3417 = vrcp.pop %v3381
    %v3418 = vmul.f32 1.0, %v3417
    %v3419 = vrcp.pop %v3382
    %v3420 = vmul.f32 1.0, %v3419
    %v3421 = vrcp.pop %v3383
    %v3422 = vmul.f32 1.0, %v3421
    %v3423 = vrcp.pop %v3384
    %v3424 = vmul.f32 1.0, %v3423
    %v3425 = vrcp.pop %v3385
    %v3426 = vmul.f32 1.0, %v3425
    %v3427 = vrcp.pop %v3386
    %v3428 = vmul.f32 1.0, %v3427
    %v3429 = vrcp.pop %v3387
    %v3430 = vmul.f32 1.0, %v3429
    %v3431 = vrcp.pop %v3388
    %v3432 = vmul.f32 1.0, %v3431
    %v3433 = vrcp.pop %v3389
    %v3434 = vmul.f32 1.0, %v3433
    %v3435 = vrcp.pop %v3390
    %v3436 = vmul.f32 1.0, %v3435
    %v3437 = vrcp.pop %v3391
    %v3438 = vmul.f32 1.0, %v3437
    %v3439 = vrcp.pop %v3392
    %v3440 = vmul.f32 1.0, %v3439
    %v3441 = vrcp.pop %v3393
    %v3442 = vmul.f32 1.0, %v3441
    %v3443 = vrcp.pop %v3394
    %v3444 = vmul.f32 1.0, %v3443
    %v3445 = vrcp.pop %v3395
    %v3446 = vmul.f32 1.0, %v3445
    %v3447 = vrcp.pop %v3396
    %v3448 = vmul.f32 1.0, %v3447
    %v3449 = vrcp.pop %v3397
    %v3450 = vmul.f32 1.0, %v3449
    %v3451 = vrcp.pop %v3398
    %v3452 = vmul.f32 1.0, %v3451
    %v3453 = vrcp.pop %v3399
    %v3454 = vmul.f32 1.0, %v3453
    %v3455 = vrcp.pop %v3400
    %v3456 = vmul.f32 1.0, %v3455
    %v3457 = vrcp.pop %v3401
    %v3458 = vmul.f32 1.0, %v3457
    %v3459 = vrcp.pop %v3402
    %v3460 = vmul.f32 1.0, %v3459
    %v3461 = vrcp.pop %v3403
    %v3462 = vmul.f32 1.0, %v3461
    %v3463 = vrcp.pop %v3404
    %v3464 = vmul.f32 1.0, %v3463
    %v3465 = vrcp.pop %v3405
    %v3466 = vmul.f32 1.0, %v3465
    %v3467 = vrcp.pop %v3406
    %v3468 = vmul.f32 1.0, %v3467
    %v3469 = vrcp.pop %v3407
    %v3470 = vmul.f32 1.0, %v3469
    %v3471 = vrcp.pop %v3408
    %v3472 = vmul.f32 1.0, %v3471
    %v3473 = vmul.f32 %v3410, %v1636
    %v3474 = vmul.f32 %v3412, %v1640
    %v3475 = vmul.f32 %v3414, %v1647
    %v3476 = vmul.f32 %v3416, %v1651
    %v3477 = vmul.f32 %v3418, %v1658
    %v3478 = vmul.f32 %v3420, %v1662
    %v3479 = vmul.f32 %v3422, %v1669
    %v3480 = vmul.f32 %v3424, %v1673
    %v3481 = vmul.f32 %v3426, %v1680
    %v3482 = vmul.f32 %v3428, %v1684
    %v3483 = vmul.f32 %v3430, %v1691
    %v3484 = vmul.f32 %v3432, %v1695
    %v3485 = vmul.f32 %v3434, %v1702
    %v3486 = vmul.f32 %v3436, %v1706
    %v3487 = vmul.f32 %v3438, %v1713
    %v3488 = vmul.f32 %v3440, %v1717
    %v3489 = vmul.f32 %v3442, %v1724
    %v3490 = vmul.f32 %v3444, %v1728
    %v3491 = vmul.f32 %v3446, %v1735
    %v3492 = vmul.f32 %v3448, %v1739
    %v3493 = vmul.f32 %v3450, %v1746
    %v3494 = vmul.f32 %v3452, %v1750
    %v3495 = vmul.f32 %v3454, %v1757
    %v3496 = vmul.f32 %v3456, %v1761
    %v3497 = vmul.f32 %v3458, %v1768
    %v3498 = vmul.f32 %v3460, %v1772
    %v3499 = vmul.f32 %v3462, %v1779
    %v3500 = vmul.f32 %v3464, %v1783
    %v3501 = vmul.f32 %v3466, %v1790
    %v3502 = vmul.f32 %v3468, %v1794
    %v3503 = vmul.f32 %v3470, %v1801
    %v3504 = vmul.f32 %v3472, %v1805
    %3505 = vrot.lane.b32.xlu0 %v3055, 64
    %v3506 = vpop.permute.xlu0 %3505
    %3507 = vrot.lane.b32.xlu0 %v3060, 64
    %v3508 = vpop.permute.xlu0 %3507
    %v3511 = vmul.f32 %v3473, %v3506
    %v3512 = vmul.f32 %v3474, %v3508
    %v3513 = vmul.f32 %v3475, %v3506
    %v3514 = vmul.f32 %v3476, %v3508
    %v3515 = vmul.f32 %v3477, %v3506
    %v3516 = vmul.f32 %v3478, %v3508
    %v3517 = vmul.f32 %v3479, %v3506
    %v3518 = vmul.f32 %v3480, %v3508
    %v3519 = vmul.f32 %v3481, %v3506
    %v3520 = vmul.f32 %v3482, %v3508
    %v3521 = vmul.f32 %v3483, %v3506
    %v3522 = vmul.f32 %v3484, %v3508
    %v3523 = vmul.f32 %v3485, %v3506
    %v3524 = vmul.f32 %v3486, %v3508
    %v3525 = vmul.f32 %v3487, %v3506
    %v3526 = vmul.f32 %v3488, %v3508
    %v3527 = vmul.f32 %v3489, %v3506
    %v3528 = vmul.f32 %v3490, %v3508
    %v3529 = vmul.f32 %v3491, %v3506
    %v3530 = vmul.f32 %v3492, %v3508
    %v3531 = vmul.f32 %v3493, %v3506
    %v3532 = vmul.f32 %v3494, %v3508
    %v3533 = vmul.f32 %v3495, %v3506
    %v3534 = vmul.f32 %v3496, %v3508
    %v3535 = vmul.f32 %v3497, %v3506
    %v3536 = vmul.f32 %v3498, %v3508
    %v3537 = vmul.f32 %v3499, %v3506
    %v3538 = vmul.f32 %v3500, %v3508
    %v3539 = vmul.f32 %v3501, %v3506
    %v3540 = vmul.f32 %v3502, %v3508
    %v3541 = vmul.f32 %v3503, %v3506
    %v3542 = vmul.f32 %v3504, %v3508
    %v3543 = vsel %vm156, %v3511, 0.0
    %v3544 = vsel %vm156, %v3512, 0.0
    %v3545 = vadd.f32 %v3543, %v3544
    %v3546 = vrot.slane %v3545, 4
    %v3547 = vadd.f32 %v3545, %v3546
    %v3548 = vrot.slane %v3547, 2
    %v3549 = vadd.f32 %v3547, %v3548
    %v3550 = vrot.slane %v3549, 1
    %v3551 = vadd.f32 %v3549, %v3550
    %v3552 = vsel %vm156, %v3513, 0.0
    %v3553 = vsel %vm156, %v3514, 0.0
    %v3554 = vadd.f32 %v3552, %v3553
    %v3555 = vrot.slane %v3554, 4
    %v3556 = vadd.f32 %v3554, %v3555
    %v3557 = vrot.slane %v3556, 2
    %v3558 = vadd.f32 %v3556, %v3557
    %v3559 = vrot.slane %v3558, 1
    %v3560 = vadd.f32 %v3558, %v3559
    %v3561 = vsel %vm156, %v3515, 0.0
    %v3562 = vsel %vm156, %v3516, 0.0
    %v3563 = vadd.f32 %v3561, %v3562
    %v3564 = vrot.slane %v3563, 4
    %v3565 = vadd.f32 %v3563, %v3564
    %v3566 = vrot.slane %v3565, 2
    %v3567 = vadd.f32 %v3565, %v3566
    %v3568 = vrot.slane %v3567, 1
    %v3569 = vadd.f32 %v3567, %v3568
    %v3570 = vsel %vm156, %v3517, 0.0
    %v3571 = vsel %vm156, %v3518, 0.0
    %v3572 = vadd.f32 %v3570, %v3571
    %v3573 = vrot.slane %v3572, 4
    %v3574 = vadd.f32 %v3572, %v3573
    %v3575 = vrot.slane %v3574, 2
    %v3576 = vadd.f32 %v3574, %v3575
    %v3577 = vrot.slane %v3576, 1
    %v3578 = vadd.f32 %v3576, %v3577
    %v3579 = vsel %vm156, %v3519, 0.0
    %v3580 = vsel %vm156, %v3520, 0.0
    %v3581 = vadd.f32 %v3579, %v3580
    %v3582 = vrot.slane %v3581, 4
    %v3583 = vadd.f32 %v3581, %v3582
    %v3584 = vrot.slane %v3583, 2
    %v3585 = vadd.f32 %v3583, %v3584
    %v3586 = vrot.slane %v3585, 1
    %v3587 = vadd.f32 %v3585, %v3586
    %v3588 = vsel %vm156, %v3521, 0.0
    %v3589 = vsel %vm156, %v3522, 0.0
    %v3590 = vadd.f32 %v3588, %v3589
    %v3591 = vrot.slane %v3590, 4
    %v3592 = vadd.f32 %v3590, %v3591
    %v3593 = vrot.slane %v3592, 2
    %v3594 = vadd.f32 %v3592, %v3593
    %v3595 = vrot.slane %v3594, 1
    %v3596 = vadd.f32 %v3594, %v3595
    %v3597 = vsel %vm156, %v3523, 0.0
    %v3598 = vsel %vm156, %v3524, 0.0
    %v3599 = vadd.f32 %v3597, %v3598
    %v3600 = vrot.slane %v3599, 4
    %v3601 = vadd.f32 %v3599, %v3600
    %v3602 = vrot.slane %v3601, 2
    %v3603 = vadd.f32 %v3601, %v3602
    %v3604 = vrot.slane %v3603, 1
    %v3605 = vadd.f32 %v3603, %v3604
    %v3606 = vsel %vm156, %v3525, 0.0
    %v3607 = vsel %vm156, %v3526, 0.0
    %v3608 = vadd.f32 %v3606, %v3607
    %v3609 = vrot.slane %v3608, 4
    %v3610 = vadd.f32 %v3608, %v3609
    %v3611 = vrot.slane %v3610, 2
    %v3612 = vadd.f32 %v3610, %v3611
    %v3613 = vrot.slane %v3612, 1
    %v3614 = vadd.f32 %v3612, %v3613
    %v3615 = vsel %vm156, %v3527, 0.0
    %v3616 = vsel %vm156, %v3528, 0.0
    %v3617 = vadd.f32 %v3615, %v3616
    %v3618 = vrot.slane %v3617, 4
    %v3619 = vadd.f32 %v3617, %v3618
    %v3620 = vrot.slane %v3619, 2
    %v3621 = vadd.f32 %v3619, %v3620
    %v3622 = vrot.slane %v3621, 1
    %v3623 = vadd.f32 %v3621, %v3622
    %v3624 = vsel %vm156, %v3529, 0.0
    %v3625 = vsel %vm156, %v3530, 0.0
    %v3626 = vadd.f32 %v3624, %v3625
    %v3627 = vrot.slane %v3626, 4
    %v3628 = vadd.f32 %v3626, %v3627
    %v3629 = vrot.slane %v3628, 2
    %v3630 = vadd.f32 %v3628, %v3629
    %v3631 = vrot.slane %v3630, 1
    %v3632 = vadd.f32 %v3630, %v3631
    %v3633 = vsel %vm156, %v3531, 0.0
    %v3634 = vsel %vm156, %v3532, 0.0
    %v3635 = vadd.f32 %v3633, %v3634
    %v3636 = vrot.slane %v3635, 4
    %v3637 = vadd.f32 %v3635, %v3636
    %v3638 = vrot.slane %v3637, 2
    %v3639 = vadd.f32 %v3637, %v3638
    %v3640 = vrot.slane %v3639, 1
    %v3641 = vadd.f32 %v3639, %v3640
    %v3642 = vsel %vm156, %v3533, 0.0
    %v3643 = vsel %vm156, %v3534, 0.0
    %v3644 = vadd.f32 %v3642, %v3643
    %v3645 = vrot.slane %v3644, 4
    %v3646 = vadd.f32 %v3644, %v3645
    %v3647 = vrot.slane %v3646, 2
    %v3648 = vadd.f32 %v3646, %v3647
    %v3649 = vrot.slane %v3648, 1
    %v3650 = vadd.f32 %v3648, %v3649
    %v3651 = vsel %vm156, %v3535, 0.0
    %v3652 = vsel %vm156, %v3536, 0.0
    %v3653 = vadd.f32 %v3651, %v3652
    %v3654 = vrot.slane %v3653, 4
    %v3655 = vadd.f32 %v3653, %v3654
    %v3656 = vrot.slane %v3655, 2
    %v3657 = vadd.f32 %v3655, %v3656
    %v3658 = vrot.slane %v3657, 1
    %v3659 = vadd.f32 %v3657, %v3658
    %v3660 = vsel %vm156, %v3537, 0.0
    %v3661 = vsel %vm156, %v3538, 0.0
    %v3662 = vadd.f32 %v3660, %v3661
    %v3663 = vrot.slane %v3662, 4
    %v3664 = vadd.f32 %v3662, %v3663
    %v3665 = vrot.slane %v3664, 2
    %v3666 = vadd.f32 %v3664, %v3665
    %v3667 = vrot.slane %v3666, 1
    %v3668 = vadd.f32 %v3666, %v3667
    %v3669 = vsel %vm156, %v3539, 0.0
    %v3670 = vsel %vm156, %v3540, 0.0
    %v3671 = vadd.f32 %v3669, %v3670
    %v3672 = vrot.slane %v3671, 4
    %v3673 = vadd.f32 %v3671, %v3672
    %v3674 = vrot.slane %v3673, 2
    %v3675 = vadd.f32 %v3673, %v3674
    %v3676 = vrot.slane %v3675, 1
    %v3677 = vadd.f32 %v3675, %v3676
    %v3678 = vsel %vm156, %v3541, 0.0
    %v3679 = vsel %vm156, %v3542, 0.0
    %v3680 = vadd.f32 %v3678, %v3679
    %v3681 = vrot.slane %v3680, 4
    %v3682 = vadd.f32 %v3680, %v3681
    %v3683 = vrot.slane %v3682, 2
    %v3684 = vadd.f32 %v3682, %v3683
    %v3685 = vrot.slane %v3684, 1
    %v3686 = vadd.f32 %v3684, %v3685
    %v3687 = vrot.slane %v3055, 1
    %v3688 = vrot.slane %v3055, 2
    %v3689 = vrot.slane %v3055, 3
    %v3690 = vrot.slane %v3055, 4
    %v3691 = vrot.slane %v3055, 5
    %v3692 = vrot.slane %v3055, 6
    %v3693 = vrot.slane %v3055, 7
    %v3694 = vrot.slane %v3060, 1
    %v3695 = vrot.slane %v3060, 2
    %v3696 = vrot.slane %v3060, 3
    %v3697 = vrot.slane %v3060, 4
    %v3698 = vrot.slane %v3060, 5
    %v3699 = vrot.slane %v3060, 6
    %v3700 = vrot.slane %v3060, 7
    %3701 = vrot.lane.b32.xlu0 %v3055, 32
    %v3702 = vpop.permute.xlu0 %3701
    %3703 = vrot.lane.b32.xlu0 %v3687, 32
    %v3704 = vpop.permute.xlu0 %3703
    %3705 = vrot.lane.b32.xlu0 %v3688, 32
    %v3706 = vpop.permute.xlu0 %3705
    %3707 = vrot.lane.b32.xlu0 %v3689, 32
    %v3708 = vpop.permute.xlu0 %3707
    %3709 = vrot.lane.b32.xlu0 %v3690, 32
    %v3710 = vpop.permute.xlu0 %3709
    %3711 = vrot.lane.b32.xlu0 %v3691, 32
    %v3712 = vpop.permute.xlu0 %3711
    %3713 = vrot.lane.b32.xlu0 %v3692, 32
    %v3714 = vpop.permute.xlu0 %3713
    %3715 = vrot.lane.b32.xlu0 %v3693, 32
    %v3716 = vpop.permute.xlu0 %3715
    %3717 = vrot.lane.b32.xlu0 %v3060, 32
    %v3718 = vpop.permute.xlu0 %3717
    %3719 = vrot.lane.b32.xlu0 %v3694, 32
    %v3720 = vpop.permute.xlu0 %3719
    %3721 = vrot.lane.b32.xlu0 %v3695, 32
    %v3722 = vpop.permute.xlu0 %3721
    %3723 = vrot.lane.b32.xlu0 %v3696, 32
    %v3724 = vpop.permute.xlu0 %3723
    %3725 = vrot.lane.b32.xlu0 %v3697, 32
    %v3726 = vpop.permute.xlu0 %3725
    %3727 = vrot.lane.b32.xlu0 %v3698, 32
    %v3728 = vpop.permute.xlu0 %3727
    %3729 = vrot.lane.b32.xlu0 %v3699, 32
    %v3730 = vpop.permute.xlu0 %3729
    %3731 = vrot.lane.b32.xlu0 %v3700, 32
    %v3732 = vpop.permute.xlu0 %3731
    %v3749 = vadd.f32 %v3551, %v3702
    %v3750 = vadd.f32 %v3560, %v3704
    %v3751 = vadd.f32 %v3569, %v3706
    %v3752 = vadd.f32 %v3578, %v3708
    %v3753 = vadd.f32 %v3587, %v3710
    %v3754 = vadd.f32 %v3596, %v3712
    %v3755 = vadd.f32 %v3605, %v3714
    %v3756 = vadd.f32 %v3614, %v3716
    %v3757 = vadd.f32 %v3623, %v3718
    %v3758 = vadd.f32 %v3632, %v3720
    %v3759 = vadd.f32 %v3641, %v3722
    %v3760 = vadd.f32 %v3650, %v3724
    %v3761 = vadd.f32 %v3659, %v3726
    %v3762 = vadd.f32 %v3668, %v3728
    %v3763 = vadd.f32 %v3677, %v3730
    %v3764 = vadd.f32 %v3686, %v3732
    %v3765 = vld [vmem:[#allocation2 + $0x110] sm:$0xff]
    %v3766 = vld [vmem:[#allocation2 + $0x120] sm:$0xff]
    %v3767 = vld [vmem:[#allocation2 + $0x130] sm:$0xff]
    %v3768 = vld [vmem:[#allocation2 + $0x140] sm:$0xff]
    %v3769 = vld [vmem:[#allocation2 + $0x118] sm:$0xff]
    %v3770 = vld [vmem:[#allocation2 + $0x128] sm:$0xff]
    %v3771 = vld [vmem:[#allocation2 + $0x138] sm:$0xff]
    %v3772 = vld [vmem:[#allocation2 + $0x148] sm:$0xff]
    %v3789 = vrot.slane %v3750, 7
    %v3790 = vsel %vm2120, %v3789, %v3749
    %v3791 = vrot.slane %v3751, 6
    %v3792 = vsel %vm2123, %v3791, %v3790
    %v3793 = vrot.slane %v3752, 5
    %v3794 = vsel %vm2126, %v3793, %v3792
    %v3795 = vrot.slane %v3753, 4
    %v3796 = vsel %vm2129, %v3795, %v3794
    %v3797 = vrot.slane %v3754, 3
    %v3798 = vsel %vm2132, %v3797, %v3796
    %v3799 = vrot.slane %v3755, 2
    %v3800 = vsel %vm2135, %v3799, %v3798
    %v3801 = vrot.slane %v3756, 1
    %v3802 = vsel %vm2138, %v3801, %v3800
    %v3803 = vrot.slane %v3758, 7
    %v3804 = vsel %vm2120, %v3803, %v3757
    %v3805 = vrot.slane %v3759, 6
    %v3806 = vsel %vm2123, %v3805, %v3804
    %v3807 = vrot.slane %v3760, 5
    %v3808 = vsel %vm2126, %v3807, %v3806
    %v3809 = vrot.slane %v3761, 4
    %v3810 = vsel %vm2129, %v3809, %v3808
    %v3811 = vrot.slane %v3762, 3
    %v3812 = vsel %vm2132, %v3811, %v3810
    %v3813 = vrot.slane %v3763, 2
    %v3814 = vsel %vm2135, %v3813, %v3812
    %v3815 = vrot.slane %v3764, 1
    %v3816 = vsel %vm2138, %v3815, %v3814
    %v3817 = vsel %vm156, %v3802, 0
    %v3819 = vsel %vm156, %v3816, 0
    %3821 = vmatprep.subr.mxu0 0.0
    %3822 = vmatpush1.msra.mxu0 0.0
    %3823 = vmatprep.subr.mxu0 0.0
    %3824 = vmatpush1.msra.mxu0 0.0
    %3825 = vmatprep.subr.mxu0 0.0
    %3826 = vmatpush1.msra.mxu0 0.0
    %3827 = vmatprep.subr.mxu0 0.0
    %3828 = vmatpush1.msra.mxu0 0.0
    %3829 = vmatprep.subr.mxu0 0.0
    %3830 = vmatpush1.msra.mxu0 0.0
    %3831 = vmatprep.subr.mxu0 0.0
    %3832 = vmatpush1.msra.mxu0 0.0
    %3833 = vmatprep.subr.mxu0 0.0
    %3834 = vmatpush1.msra.mxu0 0.0
    %3835 = vmatprep.subr.mxu0 0.0
    %3836 = vmatpush1.msra.mxu0 0.0
    %3837 = vmatprep.subr.mxu0 0.0
    %3838 = vmatpush1.msra.mxu0 0.0
    %3839 = vmatprep.subr.mxu0 0.0
    %3840 = vmatpush1.msra.mxu0 0.0
    %3841 = vmatprep.subr.mxu0 0.0
    %3842 = vmatpush1.msra.mxu0 0.0
    %3843 = vmatprep.subr.mxu0 0.0
    %3844 = vmatpush1.msra.mxu0 0.0
    %3845 = vmatprep.subr.mxu0 0.0
    %3846 = vmatpush1.msra.mxu0 %v3772
    %3847 = vmatprep.subr.mxu0 0.0
    %3848 = vmatpush1.msra.mxu0 %v3771
    %3849 = vmatprep.subr.mxu0 0.0
    %3850 = vmatpush1.msra.mxu0 %v3770
    %3851 = vmatprep.subr.mxu0 0.0
    %3852 = vmatpush1.msra.mxu0 %v3769
    %3853 = vmatprep.subr.mxu0 0.0
    %3854 = vmatpush2.msra.mxu0 0.0
    %3855 = vmatprep.subr.mxu0 0.0
    %3856 = vmatpush2.msra.mxu0 0.0
    %3857 = vmatprep.subr.mxu0 0.0
    %3858 = vmatpush2.msra.mxu0 0.0
    %3859 = vmatprep.subr.mxu0 0.0
    %3860 = vmatpush2.msra.mxu0 0.0
    %3861 = vmatprep.subr.mxu0 0.0
    %3862 = vmatpush2.msra.mxu0 0.0
    %3863 = vmatprep.subr.mxu0 0.0
    %3864 = vmatpush2.msra.mxu0 0.0
    %3865 = vmatprep.subr.mxu0 0.0
    %3866 = vmatpush2.msra.mxu0 0.0
    %3867 = vmatprep.subr.mxu0 0.0
    %3868 = vmatpush2.msra.mxu0 0.0
    %3869 = vmatprep.subr.mxu0 0.0
    %3870 = vmatpush2.msra.mxu0 0.0
    %3871 = vmatprep.subr.mxu0 0.0
    %3872 = vmatpush2.msra.mxu0 0.0
    %3873 = vmatprep.subr.mxu0 0.0
    %3874 = vmatpush2.msra.mxu0 0.0
    %3875 = vmatprep.subr.mxu0 0.0
    %3876 = vmatpush2.msra.mxu0 0.0
    %3877 = vmatprep.subr.mxu0 0.0
    %3878 = vmatpush2.msra.mxu0 0.0
    %3879 = vmatprep.subr.mxu0 0.0
    %3880 = vmatpush2.msra.mxu0 0.0
    %3881 = vmatprep.subr.mxu0 0.0
    %3882 = vmatpush2.msra.mxu0 0.0
    %3883 = vmatprep.subr.mxu0 0.0
    %3884 = vmatpush2.msra.mxu0 0.0
    %3885 = vmatprep.mubr.f32.mxu0 0.0
    %3886 = vmatmul.mubr.f32.gmra.mxu0 %v3817
    %v3887 = vpop.f32.mrf.mxu0
    %v3888 = vadd.f32 0.0, %v3887
    %v3889 = vpop.f32.mrf.mxu0
    %3890 = vmatprep.mubr.f32.mxu0 0.0
    %3891 = vmatmul.mubr.f32.gmra.mxu0 %v3819
    %v3892 = vpop.f32.mrf.mxu0
    %v3893 = vadd.f32 0.0, %v3892
    %v3894 = vpop.f32.mrf.mxu0
    %3895 = vdwg.mxu0
    %v3912 = vrot.slane %v2920, 7
    %v3913 = vsel %vm2120, %v3912, %v2919
    %v3914 = vrot.slane %v2921, 6
    %v3915 = vsel %vm2123, %v3914, %v3913
    %v3916 = vrot.slane %v2922, 5
    %v3917 = vsel %vm2126, %v3916, %v3915
    %v3918 = vrot.slane %v2923, 4
    %v3919 = vsel %vm2129, %v3918, %v3917
    %v3920 = vrot.slane %v2924, 3
    %v3921 = vsel %vm2132, %v3920, %v3919
    %v3922 = vrot.slane %v2925, 2
    %v3923 = vsel %vm2135, %v3922, %v3921
    %v3924 = vrot.slane %v2926, 1
    %v3925 = vsel %vm2138, %v3924, %v3923
    %v3926 = vrot.slane %v2928, 7
    %v3927 = vsel %vm2120, %v3926, %v2927
    %v3928 = vrot.slane %v2929, 6
    %v3929 = vsel %vm2123, %v3928, %v3927
    %v3930 = vrot.slane %v2930, 5
    %v3931 = vsel %vm2126, %v3930, %v3929
    %v3932 = vrot.slane %v2931, 4
    %v3933 = vsel %vm2129, %v3932, %v3931
    %v3934 = vrot.slane %v2932, 3
    %v3935 = vsel %vm2132, %v3934, %v3933
    %v3936 = vrot.slane %v2933, 2
    %v3937 = vsel %vm2135, %v3936, %v3935
    %v3938 = vrot.slane %v2934, 1
    %v3939 = vsel %vm2138, %v3938, %v3937
    %v3940 = vsel %vm156, %v3925, 0
    %v3942 = vsel %vm156, %v3939, 0
    %3944 = vmatprep.subr.mxu0 0.0
    %3945 = vmatpush1.msra.mxu0 0.0
    %3946 = vmatprep.subr.mxu0 0.0
    %3947 = vmatpush1.msra.mxu0 0.0
    %3948 = vmatprep.subr.mxu0 0.0
    %3949 = vmatpush1.msra.mxu0 0.0
    %3950 = vmatprep.subr.mxu0 0.0
    %3951 = vmatpush1.msra.mxu0 0.0
    %3952 = vmatprep.subr.mxu0 0.0
    %3953 = vmatpush1.msra.mxu0 0.0
    %3954 = vmatprep.subr.mxu0 0.0
    %3955 = vmatpush1.msra.mxu0 0.0
    %3956 = vmatprep.subr.mxu0 0.0
    %3957 = vmatpush1.msra.mxu0 0.0
    %3958 = vmatprep.subr.mxu0 0.0
    %3959 = vmatpush1.msra.mxu0 0.0
    %3960 = vmatprep.subr.mxu0 0.0
    %3961 = vmatpush1.msra.mxu0 0.0
    %3962 = vmatprep.subr.mxu0 0.0
    %3963 = vmatpush1.msra.mxu0 0.0
    %3964 = vmatprep.subr.mxu0 0.0
    %3965 = vmatpush1.msra.mxu0 0.0
    %3966 = vmatprep.subr.mxu0 0.0
    %3967 = vmatpush1.msra.mxu0 0.0
    %3968 = vmatprep.subr.mxu0 0.0
    %3969 = vmatpush1.msra.mxu0 %v3768
    %3970 = vmatprep.subr.mxu0 0.0
    %3971 = vmatpush1.msra.mxu0 %v3767
    %3972 = vmatprep.subr.mxu0 0.0
    %3973 = vmatpush1.msra.mxu0 %v3766
    %3974 = vmatprep.subr.mxu0 0.0
    %3975 = vmatpush1.msra.mxu0 %v3765
    %3976 = vmatprep.subr.mxu0 0.0
    %3977 = vmatpush2.msra.mxu0 0.0
    %3978 = vmatprep.subr.mxu0 0.0
    %3979 = vmatpush2.msra.mxu0 0.0
    %3980 = vmatprep.subr.mxu0 0.0
    %3981 = vmatpush2.msra.mxu0 0.0
    %3982 = vmatprep.subr.mxu0 0.0
    %3983 = vmatpush2.msra.mxu0 0.0
    %3984 = vmatprep.subr.mxu0 0.0
    %3985 = vmatpush2.msra.mxu0 0.0
    %3986 = vmatprep.subr.mxu0 0.0
    %3987 = vmatpush2.msra.mxu0 0.0
    %3988 = vmatprep.subr.mxu0 0.0
    %3989 = vmatpush2.msra.mxu0 0.0
    %3990 = vmatprep.subr.mxu0 0.0
    %3991 = vmatpush2.msra.mxu0 0.0
    %3992 = vmatprep.subr.mxu0 0.0
    %3993 = vmatpush2.msra.mxu0 0.0
    %3994 = vmatprep.subr.mxu0 0.0
    %3995 = vmatpush2.msra.mxu0 0.0
    %3996 = vmatprep.subr.mxu0 0.0
    %3997 = vmatpush2.msra.mxu0 0.0
    %3998 = vmatprep.subr.mxu0 0.0
    %3999 = vmatpush2.msra.mxu0 0.0
    %4000 = vmatprep.subr.mxu0 0.0
    %4001 = vmatpush2.msra.mxu0 0.0
    %4002 = vmatprep.subr.mxu0 0.0
    %4003 = vmatpush2.msra.mxu0 0.0
    %4004 = vmatprep.subr.mxu0 0.0
    %4005 = vmatpush2.msra.mxu0 0.0
    %4006 = vmatprep.subr.mxu0 0.0
    %4007 = vmatpush2.msra.mxu0 0.0
    %4008 = vmatprep.mubr.f32.mxu0 0.0
    %4009 = vmatmul.mubr.f32.gmra.mxu0 %v3940
    %v4010 = vpop.f32.mrf.mxu0
    %v4011 = vadd.f32 %v3888, %v4010
    %v4012 = vpop.f32.mrf.mxu0
    %4013 = vmatprep.mubr.f32.mxu0 0.0
    %4014 = vmatmul.mubr.f32.gmra.mxu0 %v3942
    %v4015 = vpop.f32.mrf.mxu0
    %v4016 = vadd.f32 %v3893, %v4015
    %v4017 = vpop.f32.mrf.mxu0
    %4018 = vdwg.mxu0
    %v4019 = vld [vmem:[#allocation2 + $0x155] ss:$0 sm:$0xff]
    %v4020 = vadd.f32 %v4011, %v4019
    %v4021 = vadd.f32 %v4016, %v4019
    %4022 = vst [vmem:[#allocation5] sm:$0xff] %v4020
    %4023 = vst [vmem:[#allocation5 + $0x8] sm:$0xff] %v4021
    // Predicated region
    $region18: #{tpu_custom_call.1} parent=1 // pred_check
      _
    $region19: #{tpu_custom_call.1} parent=1 // pred_check_branch
      %4025 = sbr.rel (0) target = $region21
    $region20: #{tpu_custom_call.1} parent=1 // pred_region
      %s4027 = ssub.s32 256, 256
      %4028 = vsyncadd [#allocation4], %s4027
      %s4029 = sshll.u32 [#allocation5], 4
      %s4030 = int_to_ptr.vmem [resolvable:$true] %s4029
      %4035 = dma.vmem_to_hbm [thread:$0]  %s4030, 256, %s3, [#allocation4], 128, 128, 8
    $region21: #{tpu_custom_call.1} parent=1 // pred_fallthru
      _
    // Predicated region
    $region22: #{tpu_custom_call.1} parent=1 // pred_check
      _
    $region23: #{tpu_custom_call.1} parent=1 // pred_check_branch
      %4037 = sbr.rel (0) target = $region25
    $region24: #{tpu_custom_call.1} parent=1 // pred_region
      %4038 = dma.done [#allocation4], 256
    $region25: #{tpu_custom_call.1} parent=1 // pred_fallthru
      _
    %4039 = vsyncpa [#allocation3], 1
    %4040 = vsyncpa [#allocation4], 1

</llo_original>
